<compile_context>
chip_gen: v5e
topology: v5e:2x2
jax: 0.10.0
libtpu: 0.0.40
codegen_flags: <defaults>
</compile_context>

<pallas_src>
import functools

import jax
import jax.numpy as jnp
import numpy as np
from jax import lax
from jax.experimental import pallas as pl
from jax.experimental.pallas import tpu as pltpu

_VMEM_LIMIT = 32 * 1024 * 1024   # explicit budget, safe on v5e/v6e/v7x
_HP = 128                        # padded per-gate hidden width (lane tile)
_DP = 128                        # padded decoder-input / embedding width
_VP = 128                        # padded vocab width (lane tile)
_BP = 8                          # padded batch (f32 sublane tile)


def _cparams(*sem):
    return pltpu.CompilerParams(dimension_semantics=sem,
                                vmem_limit_bytes=_VMEM_LIMIT)


def _round_up(x, m):
    return (x + m - 1) // m * m


# ----------------------------------------------------------------------------
# Conv GEMM kernel (im2col built in JAX glue at toy sizes)
# ----------------------------------------------------------------------------

def _gemm_nt_bias_relu_kernel(w_ref, x_ref, b_ref, o_ref):
    """o = ReLU(w @ x + b); output minor dim = pixel axis (lane-dense)."""
    acc = jnp.dot(w_ref[...], x_ref[...], preferred_element_type=jnp.float32)
    o_ref[...] = jnp.maximum(acc + b_ref[...], 0.0)


def conv_gemm_t(wt, xt, b):
    """ReLU(wt @ xt + b).  wt:(N,K)  xt:(K,M)  b:(N,1) -> (N,M), M % 128 == 0."""
    N, K = wt.shape
    K2, M = xt.shape
    assert K == K2 and b.shape == (N, 1) and M % 128 == 0
    # One big lane-dense block on 1-TC chips (v5e/v6e); two "parallel" blocks
    # (one per TensorCore) when M is large enough, for v7x.
    bm = M // 2 if (M >= 256 and (M // 2) % 128 == 0) else M
    return pl.pallas_call(
        _gemm_nt_bias_relu_kernel,
        out_shape=jax.ShapeDtypeStruct((N, M), jnp.float32),
        grid=(M // bm,),
        in_specs=[
            pl.BlockSpec((N, K), lambda i: (0, 0)),    # weights resident
            pl.BlockSpec((K, bm), lambda i: (0, i)),   # pixel blocks
            pl.BlockSpec((N, 1), lambda i: (0, 0)),
        ],
        out_specs=pl.BlockSpec((N, bm), lambda i: (0, i)),
        compiler_params=_cparams("parallel"),
    )(wt, xt, b)


# ----------------------------------------------------------------------------
# Fused encoder + decoder + embedding + vocab-projection kernel
# ----------------------------------------------------------------------------

def _sigmoid(x):
    # sigmoid(x) == 0.5*tanh(0.5*x) + 0.5 : transcendental on the EUP, no divide.
    return 0.5 * jnp.tanh(0.5 * x) + 0.5


def _lstm_step(gates, c, hp):
    """PyTorch gate order i, f, g, o; every gate owns a full 128-lane group."""
    i = _sigmoid(gates[:, 0 * hp:1 * hp])
    f = _sigmoid(gates[:, 1 * hp:2 * hp])
    g = jnp.tanh(gates[:, 2 * hp:3 * hp])
    o = _sigmoid(gates[:, 3 * hp:4 * hp])
    c_new = f * c + i * g
    h_new = o * jnp.tanh(c_new)
    return h_new, c_new


def _seq2seq_kernel(trg_ref,                       # SMEM (B, T) int32 (prefetch)
                    enc_seq_ref,                   # (Wf*Bp, D)
                    enc_wih_ref, enc_b_ref, enc_whh_ref,
                    emb_ref,                       # (vocab, DP)
                    dec_wih_ref, dec_b_ref, dec_whh_ref,
                    fcw_ref, fcb_ref,
                    logits_ref,                    # out (T*Bp, VP)
                    enc_xg_s, dec_x_s, dec_xg_s,   # VMEM scratch
                    *, B, Wf, T, hp, bp):
    f32 = jnp.float32

    # ---- hoisted input-to-hidden projections: one GEMM each, into VMEM ----
    enc_xg_s[...] = (jnp.dot(enc_seq_ref[...], enc_wih_ref[...],
                             preferred_element_type=f32) + enc_b_ref[...])

    # ---- in-kernel embedding gather (trg in SMEM, table resident in VMEM) ----
    dec_x_s[...] = jnp.zeros_like(dec_x_s)
    for t in range(T):
        for b in range(B):
            idx = trg_ref[b, t]
            dec_x_s[pl.ds(t * bp + b, 1), :] = emb_ref[pl.ds(idx, 1), :]
    dec_xg_s[...] = (jnp.dot(dec_x_s[...], dec_wih_ref[...],
                             preferred_element_type=f32) + dec_b_ref[...])

    # ---- encoder recurrence: fully unrolled, h/c carried in vregs ----
    h = jnp.zeros((bp, hp), f32)
    c = jnp.zeros((bp, hp), f32)
    for t in range(Wf):
        gates = (enc_xg_s[t * bp:(t + 1) * bp, :]
                 + jnp.dot(h, enc_whh_ref[...], preferred_element_type=f32))
        h, c = _lstm_step(gates, c, hp)

    # ---- decoder recurrence + fused per-step vocab projection ----
    for t in range(T):
        gates = (dec_xg_s[t * bp:(t + 1) * bp, :]
                 + jnp.dot(h, dec_whh_ref[...], preferred_element_type=f32))
        h, c = _lstm_step(gates, c, hp)
        logits_ref[t * bp:(t + 1) * bp, :] = (
            jnp.dot(h, fcw_ref[...], preferred_element_type=f32) + fcb_ref[...])


def seq2seq_fused(trg, enc_seq, kp, *, B, Wf, T, hp=_HP, vp=_VP, bp=_BP):
    """trg:(B,T) int32, enc_seq:(Wf*bp, D) -> logits (T*bp, vp) f32."""
    D = enc_seq.shape[1]
    vocab, dp = kp["emb"].shape
    G = 4 * hp
    kernel = functools.partial(_seq2seq_kernel, B=B, Wf=Wf, T=T, hp=hp, bp=bp)
    return pl.pallas_call(
        kernel,
        out_shape=jax.ShapeDtypeStruct((T * bp, vp), jnp.float32),
        grid_spec=pltpu.PrefetchScalarGridSpec(
            num_scalar_prefetch=1,
            grid=(1,),
            in_specs=[
                pl.BlockSpec((Wf * bp, D), lambda i, trg: (0, 0)),   # enc seq
                pl.BlockSpec((D, G), lambda i, trg: (0, 0)),         # enc Wih
                pl.BlockSpec((1, G), lambda i, trg: (0, 0)),         # enc b
                pl.BlockSpec((hp, G), lambda i, trg: (0, 0)),        # enc Whh
                pl.BlockSpec((vocab, dp), lambda i, trg: (0, 0)),    # emb table
                pl.BlockSpec((dp, G), lambda i, trg: (0, 0)),        # dec Wih
                pl.BlockSpec((1, G), lambda i, trg: (0, 0)),         # dec b
                pl.BlockSpec((hp, G), lambda i, trg: (0, 0)),        # dec Whh
                pl.BlockSpec((hp, vp), lambda i, trg: (0, 0)),       # fc_w
                pl.BlockSpec((1, vp), lambda i, trg: (0, 0)),        # fc_b
            ],
            out_specs=pl.BlockSpec((T * bp, vp), lambda i, trg: (0, 0)),
            scratch_shapes=[
                pltpu.VMEM((Wf * bp, G), jnp.float32),   # enc x@Wih+b
                pltpu.VMEM((T * bp, dp), jnp.float32),   # gathered decoder inputs
                pltpu.VMEM((T * bp, G), jnp.float32),    # dec x@Wih+b
            ],
        ),
        compiler_params=_cparams("arbitrary"),
    )(trg, enc_seq, kp["enc_wih"], kp["enc_b"], kp["enc_whh"], kp["emb"],
      kp["dec_wih"], kp["dec_b"], kp["dec_whh"], kp["fc_w"], kp["fc_b"])


# ----------------------------------------------------------------------------
# Glue (im2col / pooling) — plain JAX
# ----------------------------------------------------------------------------

def im2col_3x3_same(x_nhwc):
    """(B,H,W,C) -> (B,H,W,9*C) patches, 3x3 kernel, padding=1, stride=1."""
    B, H, W, C = x_nhwc.shape
    xp = jnp.pad(x_nhwc, ((0, 0), (1, 1), (1, 1), (0, 0)))
    patches = []
    for di in range(3):
        for dj in range(3):
            patches.append(xp[:, di:di + H, dj:dj + W, :])
    return jnp.concatenate(patches, axis=-1)


def maxpool_2x2(x_nhwc):
    B, H, W, C = x_nhwc.shape
    return x_nhwc.reshape(B, H // 2, 2, W // 2, 2, C).max(axis=(2, 4))


# ----------------------------------------------------------------------------
# Parameters (logical layout) + padded kernel layouts
# ----------------------------------------------------------------------------

def init_params(key, *, c1=8, c2=8, feat_h=4, enc_hidden=32, dec_hidden=32,
                vocab_size=16):
    ks = jax.random.split(key, 8)
    s = 0.1
    input_dim = c2 * feat_h
    return {
        # conv weights in im2col-GEMM layout (kh*kw*Cin, Cout)
        "conv1_w": s * jax.random.normal(ks[0], (9 * 1, c1), jnp.float32),
        "conv1_b": jnp.zeros((1, c1), jnp.float32),
        "conv2_w": s * jax.random.normal(ks[1], (9 * c1, c2), jnp.float32),
        "conv2_b": jnp.zeros((1, c2), jnp.float32),
        # encoder LSTM  (single fused bias == b_ih + b_hh of a torch checkpoint)
        "enc_wih": s * jax.random.normal(ks[2], (input_dim, 4 * enc_hidden), jnp.float32),
        "enc_whh": s * jax.random.normal(ks[3], (enc_hidden, 4 * enc_hidden), jnp.float32),
        "enc_b":   jnp.zeros((1, 4 * enc_hidden), jnp.float32),
        # decoder embedding + LSTM + output projection
        "emb":     s * jax.random.normal(ks[4], (vocab_size, dec_hidden), jnp.float32),
        "dec_wih": s * jax.random.normal(ks[5], (dec_hidden, 4 * dec_hidden), jnp.float32),
        "dec_whh": s * jax.random.normal(ks[6], (dec_hidden, 4 * dec_hidden), jnp.float32),
        "dec_b":   jnp.zeros((1, 4 * dec_hidden), jnp.float32),
        "fc_w":    s * jax.random.normal(ks[7], (dec_hidden, vocab_size), jnp.float32),
        "fc_b":    jnp.zeros((1, vocab_size), jnp.float32),
    }


def _pad_gate_cols(w, h, hp):
    """(..., 4h) -> (..., 4*hp): gate k columns land at [k*hp, k*hp + h)."""
    pad = [(0, 0)] * (w.ndim - 1) + [(0, hp - h)]
    return jnp.concatenate(
        [jnp.pad(w[..., k * h:(k + 1) * h], pad) for k in range(4)], axis=-1)


def pad_params(p, *, hidden, hp=_HP, dp=_DP, vp=_VP):
    """Zero-pad / transpose logical params into lane-aligned kernel layouts."""
    vocab = p["fc_w"].shape[1]
    kp = {}
    for name in ("conv1", "conv2"):
        w = p[name + "_w"]                                        # (K, Cout)
        k = w.shape[0]
        k8 = _round_up(k, 8)
        kp[name + "_wt"] = jnp.pad(w, ((0, k8 - k), (0, 0))).T    # (Cout, K8)
        kp[name + "_bt"] = p[name + "_b"].T                       # (Cout, 1)
    kp["enc_wih"] = _pad_gate_cols(p["enc_wih"], hidden, hp)      # (D, 4hp)
    kp["enc_b"] = _pad_gate_cols(p["enc_b"], hidden, hp)          # (1, 4hp)
    kp["enc_whh"] = jnp.pad(_pad_gate_cols(p["enc_whh"], hidden, hp),
                            ((0, hp - hidden), (0, 0)))           # (hp, 4hp)
    kp["emb"] = jnp.pad(p["emb"], ((0, 0), (0, dp - hidden)))     # (vocab, dp)
    kp["dec_wih"] = jnp.pad(_pad_gate_cols(p["dec_wih"], hidden, hp),
                            ((0, dp - hidden), (0, 0)))           # (dp, 4hp)
    kp["dec_b"] = _pad_gate_cols(p["dec_b"], hidden, hp)          # (1, 4hp)
    kp["dec_whh"] = jnp.pad(_pad_gate_cols(p["dec_whh"], hidden, hp),
                            ((0, hp - hidden), (0, 0)))           # (hp, 4hp)
    kp["fc_w"] = jnp.pad(p["fc_w"], ((0, hp - hidden), (0, vp - vocab)))  # (hp, vp)
    kp["fc_b"] = jnp.pad(p["fc_b"], ((0, 0), (0, vp - vocab)))            # (1, vp)
    return kp


# ----------------------------------------------------------------------------
# Model forward
# ----------------------------------------------------------------------------

def cnn_features(src_nchw, kp):
    """VGG-style feature extractor: 2 x [conv3x3(same) + ReLU + maxpool2x2]."""
    x = jnp.transpose(src_nchw, (0, 2, 3, 1))            # NCHW -> NHWC
    for name in ("conv1", "conv2"):
        B, H, W, _ = x.shape
        # TODO(synk): at production OCR image sizes, build the 3x3 patches and do
        #             the 2x2 maxpool inside a VMEM-tiled Pallas conv kernel
        #             instead of materializing the 9x im2col array in HBM; at the
        #             16x16 toy size this glue is negligible.
        patches = im2col_3x3_same(x)                     # (B,H,W,9*Cin)
        k = patches.shape[-1]
        wt = kp[name + "_wt"]                            # (Cout, K8)
        k8 = wt.shape[1]
        m = B * H * W
        mp = _round_up(m, 128)
        xt = patches.reshape(m, k).T                     # (K, M): pixels on lanes
        xt = jnp.pad(xt, ((0, k8 - k), (0, mp - m)))
        y = conv_gemm_t(wt, xt, kp[name + "_bt"])        # (Cout, Mp), ReLU fused
        cout = y.shape[0]
        x = jnp.transpose(y[:, :m].reshape(cout, B, H, W), (1, 2, 3, 0))
        x = maxpool_2x2(x)
    return x                                             # (B, H', W', C)


def lstm_model_forward(params, src, trg, *, enc_hidden=32, dec_hidden=32,
                       vocab_size=16):
    """src: (B, 1, H, W) float32;  trg: (B, T) int32  ->  (B, T, vocab) logits."""
    assert enc_hidden == dec_hidden
    hidden = enc_hidden
    kp = pad_params(params, hidden=hidden)

    feats = cnn_features(src, kp)                        # (B, Hf, Wf, C)
    B, Hf, Wf, C = feats.shape
    assert B <= _BP
    D = Hf * C                                           # sequence feature dim

    # Encoder sequence over width (time-major), batch padded to the sublane tile.
    seq = jnp.transpose(feats, (2, 0, 1, 3)).reshape(Wf, B, D)
    seq = jnp.pad(seq, ((0, 0), (0, _BP - B), (0, 0))).reshape(Wf * _BP, D)

    # One fused kernel: xg GEMMs + encoder + decoder + embedding + vocab proj.
    T = trg.shape[1]
    logits_p = seq2seq_fused(trg.astype(jnp.int32), seq, kp, B=B, Wf=Wf, T=T)
    logits = logits_p.reshape(T, _BP, _VP)
    logits = jnp.transpose(logits, (1, 0, 2))[:B, :, :vocab_size]
    return logits


# ----------------------------------------------------------------------------
# Pure-JAX reference (for numerical sanity check)
# ----------------------------------------------------------------------------

def forward_reference(params, src, trg, *, enc_hidden=32, dec_hidden=32):
    hi = lax.Precision.HIGHEST
    x = jnp.transpose(src, (0, 2, 3, 1))
    for name in ("conv1", "conv2"):
        B, H, W, _ = x.shape
        patches = im2col_3x3_same(x).reshape(B * H * W, -1)
        y = jnp.dot(patches, params[name + "_w"], precision=hi) + params[name + "_b"]
        x = maxpool_2x2(jnp.maximum(y, 0.0).reshape(B, H, W, -1))
    B, Hf, Wf, C = x.shape
    seq = jnp.transpose(x, (0, 2, 1, 3)).reshape(B, Wf, Hf * C)

    def cell(x_t, h, c, wih, whh, b, hd):
        gates = jnp.dot(x_t, wih, precision=hi) + jnp.dot(h, whh, precision=hi) + b
        i = jax.nn.sigmoid(gates[:, 0 * hd:1 * hd])
        f = jax.nn.sigmoid(gates[:, 1 * hd:2 * hd])
        g = jnp.tanh(gates[:, 2 * hd:3 * hd])
        o = jax.nn.sigmoid(gates[:, 3 * hd:4 * hd])
        c = f * c + i * g
        return o * jnp.tanh(c), c

    h = jnp.zeros((B, enc_hidden), jnp.float32)
    c = jnp.zeros((B, enc_hidden), jnp.float32)
    for t in range(Wf):
        h, c = cell(seq[:, t], h, c, params["enc_wih"], params["enc_whh"],
                    params["enc_b"], enc_hidden)
    emb = params["emb"][trg]
    outs = []
    for t in range(trg.shape[1]):
        h, c = cell(emb[:, t], h, c, params["dec_wih"], params["dec_whh"],
                    params["dec_b"], dec_hidden)
        outs.append(jnp.dot(h, params["fc_w"], precision=hi) + params["fc_b"])
    return jnp.stack(outs, axis=1)


# ----------------------------------------------------------------------------
# Main
# ----------------------------------------------------------------------------

if __name__ == "__main__":
    key = jax.random.PRNGKey(0)
    k_src, k_trg, k_par = jax.random.split(key, 3)

    batch, height, width = 2, 16, 16
    dec_seq_len, vocab_size = 8, 16
    enc_hidden = dec_hidden = 32

    src = jax.random.normal(k_src, (batch, 1, height, width), jnp.float32)
    trg = jax.random.randint(k_trg, (batch, dec_seq_len), 0, vocab_size, jnp.int32)

    params = init_params(k_par, enc_hidden=enc_hidden, dec_hidden=dec_hidden,
                         vocab_size=vocab_size)

    fwd = jax.jit(functools.partial(lstm_model_forward, enc_hidden=enc_hidden,
                                    dec_hidden=dec_hidden, vocab_size=vocab_size))
    out = jax.block_until_ready(fwd(params, src, trg))
    assert out.shape == (batch, dec_seq_len, vocab_size), out.shape
    assert out.dtype == jnp.float32

    ref = jax.block_until_ready(
        forward_reference(params, src, trg, enc_hidden=enc_hidden,
                          dec_hidden=dec_hidden))
    err = float(np.max(np.abs(np.asarray(out) - np.asarray(ref))))
    assert np.allclose(np.asarray(out), np.asarray(ref), atol=2e-3, rtol=2e-2), err

    print("KERNEL_OK")
</pallas_src>

<mosaic_0001>
module attributes {stable_mosaic.version = 11 : i64} {
  func.func @_gemm_nt_bias_relu_kernel(%arg0: i32, %arg1: memref<8x16xf32, #tpu.memory_space<vmem>>, %arg2: memref<16x256xf32, #tpu.memory_space<vmem>>, %arg3: memref<8x1xf32, #tpu.memory_space<vmem>>, %arg4: memref<8x256xf32, #tpu.memory_space<vmem>>) attributes {dimension_semantics = [#tpu.dimension_semantics<parallel>], iteration_bounds = array<i64: 2>, scalar_prefetch = 0 : i64, scratch_operands = 0 : i64, tpu.core_type = #tpu.core_type<tc>, window_params = [{pipeline_mode = #tpu.pipeline_mode<synchronous>, transform_indices = @transform_0, window_bounds = array<i64: 8, 16>}, {transform_indices = @transform_1, window_bounds = array<i64: 16, 256>}, {pipeline_mode = #tpu.pipeline_mode<synchronous>, transform_indices = @transform_2, window_bounds = array<i64: 8, 1>}, {transform_indices = @transform_3, window_bounds = array<i64: 8, 256>}]} {
    %c0 = arith.constant 0 : index
    %c0_0 = arith.constant 0 : index
    %0 = vector.load %arg1[%c0, %c0_0] : memref<8x16xf32, #tpu.memory_space<vmem>>, vector<8x16xf32>
    %c0_1 = arith.constant 0 : index
    %c0_2 = arith.constant 0 : index
    %1 = vector.load %arg2[%c0_1, %c0_2] : memref<16x256xf32, #tpu.memory_space<vmem>>, vector<16x256xf32>
    %cst = arith.constant dense<0.000000e+00> : vector<8x256xf32>
    %2 = tpu.matmul %0, %1, %cst {dimension_numbers = #tpu.dot_dimension_numbers<[1], [0], [0], [1], [0, 0, 1, 1], [], []>} : vector<8x16xf32>, vector<16x256xf32>, vector<8x256xf32> -> vector<8x256xf32>
    %c0_3 = arith.constant 0 : index
    %c0_4 = arith.constant 0 : index
    %3 = vector.load %arg3[%c0_3, %c0_4] : memref<8x1xf32, #tpu.memory_space<vmem>>, vector<8x1xf32>
    %4 = vector.broadcast %3 : vector<8x1xf32> to vector<8x256xf32>
    %5 = arith.addf %2, %4 : vector<8x256xf32>
    %cst_5 = arith.constant 0.000000e+00 : f32
    %6 = vector.broadcast %cst_5 : f32 to vector<8x256xf32>
    %7 = arith.maximumf %5, %6 : vector<8x256xf32>
    %c0_6 = arith.constant 0 : index
    %c0_7 = arith.constant 0 : index
    %8 = vector.load %arg4[%c0_6, %c0_7] : memref<8x256xf32, #tpu.memory_space<vmem>>, vector<8x256xf32>
    tpu.vector_store %arg4[%c0_6, %c0_7], %7 {strides = array<i32>} : memref<8x256xf32, #tpu.memory_space<vmem>>, vector<8x256xf32>,
    return
  }
  func.func @transform_0(%arg0: i32) -> (i32, i32) {
    %c0_i32 = arith.constant 0 : i32
    %c0_i32_0 = arith.constant 0 : i32
    %c0_i32_1 = arith.constant 0 : i32
    return %c0_i32, %c0_i32_0 : i32, i32
  }
  func.func @transform_1(%arg0: i32) -> (i32, i32) {
    %c0_i32 = arith.constant 0 : i32
    %c0_i32_0 = arith.constant 0 : i32
    return %c0_i32, %arg0 : i32, i32
  }
  func.func @transform_2(%arg0: i32) -> (i32, i32) {
    %c0_i32 = arith.constant 0 : i32
    %c0_i32_0 = arith.constant 0 : i32
    %c0_i32_1 = arith.constant 0 : i32
    return %c0_i32, %c0_i32_0 : i32, i32
  }
  func.func @transform_3(%arg0: i32) -> (i32, i32) {
    %c0_i32 = arith.constant 0 : i32
    %c0_i32_0 = arith.constant 0 : i32
    return %c0_i32, %arg0 : i32, i32
  }
}

module attributes {stable_mosaic.version = 11 : i64} {
  func.func @_gemm_nt_bias_relu_kernel(%arg0: i32, %arg1: memref<8x72xf32, #tpu.memory_space<vmem>>, %arg2: memref<72x128xf32, #tpu.memory_space<vmem>>, %arg3: memref<8x1xf32, #tpu.memory_space<vmem>>, %arg4: memref<8x128xf32, #tpu.memory_space<vmem>>) attributes {dimension_semantics = [#tpu.dimension_semantics<parallel>], iteration_bounds = array<i64: 1>, scalar_prefetch = 0 : i64, scratch_operands = 0 : i64, tpu.core_type = #tpu.core_type<tc>, window_params = [{pipeline_mode = #tpu.pipeline_mode<synchronous>, transform_indices = @transform_0, window_bounds = array<i64: 8, 72>}, {transform_indices = @transform_1, window_bounds = array<i64: 72, 128>}, {pipeline_mode = #tpu.pipeline_mode<synchronous>, transform_indices = @transform_2, window_bounds = array<i64: 8, 1>}, {transform_indices = @transform_3, window_bounds = array<i64: 8, 128>}]} {
    %c0 = arith.constant 0 : index
    %c0_0 = arith.constant 0 : index
    %0 = vector.load %arg1[%c0, %c0_0] : memref<8x72xf32, #tpu.memory_space<vmem>>, vector<8x72xf32>
    %c0_1 = arith.constant 0 : index
    %c0_2 = arith.constant 0 : index
    %1 = vector.load %arg2[%c0_1, %c0_2] : memref<72x128xf32, #tpu.memory_space<vmem>>, vector<72x128xf32>
    %cst = arith.constant dense<0.000000e+00> : vector<8x128xf32>
    %2 = tpu.matmul %0, %1, %cst {dimension_numbers = #tpu.dot_dimension_numbers<[1], [0], [0], [1], [0, 0, 1, 1], [], []>} : vector<8x72xf32>, vector<72x128xf32>, vector<8x128xf32> -> vector<8x128xf32>
    %c0_3 = arith.constant 0 : index
    %c0_4 = arith.constant 0 : index
    %3 = vector.load %arg3[%c0_3, %c0_4] : memref<8x1xf32, #tpu.memory_space<vmem>>, vector<8x1xf32>
    %4 = vector.broadcast %3 : vector<8x1xf32> to vector<8x128xf32>
    %5 = arith.addf %2, %4 : vector<8x128xf32>
    %cst_5 = arith.constant 0.000000e+00 : f32
    %6 = vector.broadcast %cst_5 : f32 to vector<8x128xf32>
    %7 = arith.maximumf %5, %6 : vector<8x128xf32>
    %c0_6 = arith.constant 0 : index
    %c0_7 = arith.constant 0 : index
    %8 = vector.load %arg4[%c0_6, %c0_7] : memref<8x128xf32, #tpu.memory_space<vmem>>, vector<8x128xf32>
    tpu.vector_store %arg4[%c0_6, %c0_7], %7 {strides = array<i32>} : memref<8x128xf32, #tpu.memory_space<vmem>>, vector<8x128xf32>,
    return
  }
  func.func @transform_0(%arg0: i32) -> (i32, i32) {
    %c0_i32 = arith.constant 0 : i32
    %c0_i32_0 = arith.constant 0 : i32
    %c0_i32_1 = arith.constant 0 : i32
    return %c0_i32, %c0_i32_0 : i32, i32
  }
  func.func @transform_1(%arg0: i32) -> (i32, i32) {
    %c0_i32 = arith.constant 0 : i32
    %c0_i32_0 = arith.constant 0 : i32
    return %c0_i32, %arg0 : i32, i32
  }
  func.func @transform_2(%arg0: i32) -> (i32, i32) {
    %c0_i32 = arith.constant 0 : i32
    %c0_i32_0 = arith.constant 0 : i32
    %c0_i32_1 = arith.constant 0 : i32
    return %c0_i32, %c0_i32_0 : i32, i32
  }
  func.func @transform_3(%arg0: i32) -> (i32, i32) {
    %c0_i32 = arith.constant 0 : i32
    %c0_i32_0 = arith.constant 0 : i32
    return %c0_i32, %arg0 : i32, i32
  }
}

module attributes {stable_mosaic.version = 11 : i64} {
  func.func @_seq2seq_kernel(%arg0: i32, %arg1: memref<2x8xi32, #tpu.memory_space<smem>>, %arg2: memref<32x32xf32, #tpu.memory_space<vmem>>, %arg3: memref<32x512xf32, #tpu.memory_space<vmem>>, %arg4: memref<1x512xf32, #tpu.memory_space<vmem>>, %arg5: memref<128x512xf32, #tpu.memory_space<vmem>>, %arg6: memref<16x128xf32, #tpu.memory_space<vmem>>, %arg7: memref<128x512xf32, #tpu.memory_space<vmem>>, %arg8: memref<1x512xf32, #tpu.memory_space<vmem>>, %arg9: memref<128x512xf32, #tpu.memory_space<vmem>>, %arg10: memref<128x128xf32, #tpu.memory_space<vmem>>, %arg11: memref<1x128xf32, #tpu.memory_space<vmem>>, %arg12: memref<64x128xf32, #tpu.memory_space<vmem>>, %arg13: memref<32x512xf32, #tpu.memory_space<vmem>>, %arg14: memref<64x128xf32, #tpu.memory_space<vmem>>, %arg15: memref<64x512xf32, #tpu.memory_space<vmem>>) attributes {dimension_semantics = [#tpu.dimension_semantics<arbitrary>], iteration_bounds = array<i64: 1>, scalar_prefetch = 1 : i64, scratch_operands = 3 : i64, tpu.core_type = #tpu.core_type<tc>, window_params = [{pipeline_mode = #tpu.pipeline_mode<synchronous>, transform_indices = @transform_0, window_bounds = array<i64: 32, 32>}, {pipeline_mode = #tpu.pipeline_mode<synchronous>, transform_indices = @transform_1, window_bounds = array<i64: 32, 512>}, {pipeline_mode = #tpu.pipeline_mode<synchronous>, transform_indices = @transform_2, window_bounds = array<i64: 1, 512>}, {pipeline_mode = #tpu.pipeline_mode<synchronous>, transform_indices = @transform_3, window_bounds = array<i64: 128, 512>}, {pipeline_mode = #tpu.pipeline_mode<synchronous>, transform_indices = @transform_4, window_bounds = array<i64: 16, 128>}, {pipeline_mode = #tpu.pipeline_mode<synchronous>, transform_indices = @transform_5, window_bounds = array<i64: 128, 512>}, {pipeline_mode = #tpu.pipeline_mode<synchronous>, transform_indices = @transform_6, window_bounds = array<i64: 1, 512>}, {pipeline_mode = #tpu.pipeline_mode<synchronous>, transform_indices = @transform_7, window_bounds = array<i64: 128, 512>}, {pipeline_mode = #tpu.pipeline_mode<synchronous>, transform_indices = @transform_8, window_bounds = array<i64: 128, 128>}, {pipeline_mode = #tpu.pipeline_mode<synchronous>, transform_indices = @transform_9, window_bounds = array<i64: 1, 128>}, {pipeline_mode = #tpu.pipeline_mode<synchronous>, transform_indices = @transform_10, window_bounds = array<i64: 64, 128>}]} {
    %c0 = arith.constant 0 : index
    %c0_0 = arith.constant 0 : index
    %0 = vector.load %arg2[%c0, %c0_0] : memref<32x32xf32, #tpu.memory_space<vmem>>, vector<32x32xf32>
    %c0_1 = arith.constant 0 : index
    %c0_2 = arith.constant 0 : index
    %1 = vector.load %arg3[%c0_1, %c0_2] : memref<32x512xf32, #tpu.memory_space<vmem>>, vector<32x512xf32>
    %cst = arith.constant dense<0.000000e+00> : vector<32x512xf32>
    %2 = tpu.matmul %0, %1, %cst {dimension_numbers = #tpu.dot_dimension_numbers<[1], [0], [0], [1], [0, 0, 1, 1], [], []>} : vector<32x32xf32>, vector<32x512xf32>, vector<32x512xf32> -> vector<32x512xf32>
    %c0_3 = arith.constant 0 : index
    %c0_4 = arith.constant 0 : index
    %3 = vector.load %arg4[%c0_3, %c0_4] : memref<1x512xf32, #tpu.memory_space<vmem>>, vector<1x512xf32>
    %4 = vector.broadcast %3 : vector<1x512xf32> to vector<32x512xf32>
    %5 = arith.addf %2, %4 : vector<32x512xf32>
    %c0_5 = arith.constant 0 : index
    %c0_6 = arith.constant 0 : index
    %6 = vector.load %arg13[%c0_5, %c0_6] : memref<32x512xf32, #tpu.memory_space<vmem>>, vector<32x512xf32>
    tpu.vector_store %arg13[%c0_5, %c0_6], %5 {strides = array<i32>} : memref<32x512xf32, #tpu.memory_space<vmem>>, vector<32x512xf32>,
    %cst_7 = arith.constant 0.000000e+00 : f32
    %7 = vector.broadcast %cst_7 : f32 to vector<64x128xf32>
    %c0_8 = arith.constant 0 : index
    %c0_9 = arith.constant 0 : index
    %8 = vector.load %arg14[%c0_8, %c0_9] : memref<64x128xf32, #tpu.memory_space<vmem>>, vector<64x128xf32>
    tpu.vector_store %arg14[%c0_8, %c0_9], %7 {strides = array<i32>} : memref<64x128xf32, #tpu.memory_space<vmem>>, vector<64x128xf32>,
    %c0_10 = arith.constant 0 : index
    %c0_11 = arith.constant 0 : index
    %9 = memref.load %arg1[%c0_10, %c0_11] : memref<2x8xi32, #tpu.memory_space<smem>>
    %10 = arith.index_cast %9 : i32 to index
    %c0_12 = arith.constant 0 : index
    %11 = vector.load %arg6[%10, %c0_12] : memref<16x128xf32, #tpu.memory_space<vmem>>, vector<1x128xf32>
    %c0_13 = arith.constant 0 : index
    %c0_14 = arith.constant 0 : index
    %12 = vector.load %arg14[%c0_13, %c0_14] : memref<64x128xf32, #tpu.memory_space<vmem>>, vector<1x128xf32>
    tpu.vector_store %arg14[%c0_13, %c0_14], %11 {strides = array<i32>} : memref<64x128xf32, #tpu.memory_space<vmem>>, vector<1x128xf32>,
    %c1 = arith.constant 1 : index
    %c0_15 = arith.constant 0 : index
    %13 = memref.load %arg1[%c1, %c0_15] : memref<2x8xi32, #tpu.memory_space<smem>>
    %14 = arith.index_cast %13 : i32 to index
    %c0_16 = arith.constant 0 : index
    %15 = vector.load %arg6[%14, %c0_16] : memref<16x128xf32, #tpu.memory_space<vmem>>, vector<1x128xf32>
    %c1_17 = arith.constant 1 : index
    %c0_18 = arith.constant 0 : index
    %16 = vector.load %arg14[%c1_17, %c0_18] : memref<64x128xf32, #tpu.memory_space<vmem>>, vector<1x128xf32>
    tpu.vector_store %arg14[%c1_17, %c0_18], %15 {strides = array<i32>} : memref<64x128xf32, #tpu.memory_space<vmem>>, vector<1x128xf32>,
    %c0_19 = arith.constant 0 : index
    %c1_20 = arith.constant 1 : index
    %17 = memref.load %arg1[%c0_19, %c1_20] : memref<2x8xi32, #tpu.memory_space<smem>>
    %18 = arith.index_cast %17 : i32 to index
    %c0_21 = arith.constant 0 : index
    %19 = vector.load %arg6[%18, %c0_21] : memref<16x128xf32, #tpu.memory_space<vmem>>, vector<1x128xf32>
    %c8 = arith.constant 8 : index
    %c0_22 = arith.constant 0 : index
    %20 = vector.load %arg14[%c8, %c0_22] : memref<64x128xf32, #tpu.memory_space<vmem>>, vector<1x128xf32>
    tpu.vector_store %arg14[%c8, %c0_22], %19 {strides = array<i32>} : memref<64x128xf32, #tpu.memory_space<vmem>>, vector<1x128xf32>,
    %c1_23 = arith.constant 1 : index
    %c1_24 = arith.constant 1 : index
    %21 = memref.load %arg1[%c1_23, %c1_24] : memref<2x8xi32, #tpu.memory_space<smem>>
    %22 = arith.index_cast %21 : i32 to index
    %c0_25 = arith.constant 0 : index
    %23 = vector.load %arg6[%22, %c0_25] : memref<16x128xf32, #tpu.memory_space<vmem>>, vector<1x128xf32>
    %c9 = arith.constant 9 : index
    %c0_26 = arith.constant 0 : index
    %24 = vector.load %arg14[%c9, %c0_26] : memref<64x128xf32, #tpu.memory_space<vmem>>, vector<1x128xf32>
    tpu.vector_store %arg14[%c9, %c0_26], %23 {strides = array<i32>} : memref<64x128xf32, #tpu.memory_space<vmem>>, vector<1x128xf32>,
    %c0_27 = arith.constant 0 : index
    %c2 = arith.constant 2 : index
    %25 = memref.load %arg1[%c0_27, %c2] : memref<2x8xi32, #tpu.memory_space<smem>>
    %26 = arith.index_cast %25 : i32 to index
    %c0_28 = arith.constant 0 : index
    %27 = vector.load %arg6[%26, %c0_28] : memref<16x128xf32, #tpu.memory_space<vmem>>, vector<1x128xf32>
    %c16 = arith.constant 16 : index
    %c0_29 = arith.constant 0 : index
    %28 = vector.load %arg14[%c16, %c0_29] : memref<64x128xf32, #tpu.memory_space<vmem>>, vector<1x128xf32>
    tpu.vector_store %arg14[%c16, %c0_29], %27 {strides = array<i32>} : memref<64x128xf32, #tpu.memory_space<vmem>>, vector<1x128xf32>,
    %c1_30 = arith.constant 1 : index
    %c2_31 = arith.constant 2 : index
    %29 = memref.load %arg1[%c1_30, %c2_31] : memref<2x8xi32, #tpu.memory_space<smem>>
    %30 = arith.index_cast %29 : i32 to index
    %c0_32 = arith.constant 0 : index
    %31 = vector.load %arg6[%30, %c0_32] : memref<16x128xf32, #tpu.memory_space<vmem>>, vector<1x128xf32>
    %c17 = arith.constant 17 : index
    %c0_33 = arith.constant 0 : index
    %32 = vector.load %arg14[%c17, %c0_33] : memref<64x128xf32, #tpu.memory_space<vmem>>, vector<1x128xf32>
    tpu.vector_store %arg14[%c17, %c0_33], %31 {strides = array<i32>} : memref<64x128xf32, #tpu.memory_space<vmem>>, vector<1x128xf32>,
    %c0_34 = arith.constant 0 : index
    %c3 = arith.constant 3 : index
    %33 = memref.load %arg1[%c0_34, %c3] : memref<2x8xi32, #tpu.memory_space<smem>>
    %34 = arith.index_cast %33 : i32 to index
    %c0_35 = arith.constant 0 : index
    %35 = vector.load %arg6[%34, %c0_35] : memref<16x128xf32, #tpu.memory_space<vmem>>, vector<1x128xf32>
    %c24 = arith.constant 24 : index
    %c0_36 = arith.constant 0 : index
    %36 = vector.load %arg14[%c24, %c0_36] : memref<64x128xf32, #tpu.memory_space<vmem>>, vector<1x128xf32>
    tpu.vector_store %arg14[%c24, %c0_36], %35 {strides = array<i32>} : memref<64x128xf32, #tpu.memory_space<vmem>>, vector<1x128xf32>,
    %c1_37 = arith.constant 1 : index
    %c3_38 = arith.constant 3 : index
    %37 = memref.load %arg1[%c1_37, %c3_38] : memref<2x8xi32, #tpu.memory_space<smem>>
    %38 = arith.index_cast %37 : i32 to index
    %c0_39 = arith.constant 0 : index
    %39 = vector.load %arg6[%38, %c0_39] : memref<16x128xf32, #tpu.memory_space<vmem>>, vector<1x128xf32>
    %c25 = arith.constant 25 : index
    %c0_40 = arith.constant 0 : index
    %40 = vector.load %arg14[%c25, %c0_40] : memref<64x128xf32, #tpu.memory_space<vmem>>, vector<1x128xf32>
    tpu.vector_store %arg14[%c25, %c0_40], %39 {strides = array<i32>} : memref<64x128xf32, #tpu.memory_space<vmem>>, vector<1x128xf32>,
    %c0_41 = arith.constant 0 : index
    %c4 = arith.constant 4 : index
    %41 = memref.load %arg1[%c0_41, %c4] : memref<2x8xi32, #tpu.memory_space<smem>>
    %42 = arith.index_cast %41 : i32 to index
    %c0_42 = arith.constant 0 : index
    %43 = vector.load %arg6[%42, %c0_42] : memref<16x128xf32, #tpu.memory_space<vmem>>, vector<1x128xf32>
    %c32 = arith.constant 32 : index
    %c0_43 = arith.constant 0 : index
    %44 = vector.load %arg14[%c32, %c0_43] : memref<64x128xf32, #tpu.memory_space<vmem>>, vector<1x128xf32>
    tpu.vector_store %arg14[%c32, %c0_43], %43 {strides = array<i32>} : memref<64x128xf32, #tpu.memory_space<vmem>>, vector<1x128xf32>,
    %c1_44 = arith.constant 1 : index
    %c4_45 = arith.constant 4 : index
    %45 = memref.load %arg1[%c1_44, %c4_45] : memref<2x8xi32, #tpu.memory_space<smem>>
    %46 = arith.index_cast %45 : i32 to index
    %c0_46 = arith.constant 0 : index
    %47 = vector.load %arg6[%46, %c0_46] : memref<16x128xf32, #tpu.memory_space<vmem>>, vector<1x128xf32>
    %c33 = arith.constant 33 : index
    %c0_47 = arith.constant 0 : index
    %48 = vector.load %arg14[%c33, %c0_47] : memref<64x128xf32, #tpu.memory_space<vmem>>, vector<1x128xf32>
    tpu.vector_store %arg14[%c33, %c0_47], %47 {strides = array<i32>} : memref<64x128xf32, #tpu.memory_space<vmem>>, vector<1x128xf32>,
    %c0_48 = arith.constant 0 : index
    %c5 = arith.constant 5 : index
    %49 = memref.load %arg1[%c0_48, %c5] : memref<2x8xi32, #tpu.memory_space<smem>>
    %50 = arith.index_cast %49 : i32 to index
    %c0_49 = arith.constant 0 : index
    %51 = vector.load %arg6[%50, %c0_49] : memref<16x128xf32, #tpu.memory_space<vmem>>, vector<1x128xf32>
    %c40 = arith.constant 40 : index
    %c0_50 = arith.constant 0 : index
    %52 = vector.load %arg14[%c40, %c0_50] : memref<64x128xf32, #tpu.memory_space<vmem>>, vector<1x128xf32>
    tpu.vector_store %arg14[%c40, %c0_50], %51 {strides = array<i32>} : memref<64x128xf32, #tpu.memory_space<vmem>>, vector<1x128xf32>,
    %c1_51 = arith.constant 1 : index
    %c5_52 = arith.constant 5 : index
    %53 = memref.load %arg1[%c1_51, %c5_52] : memref<2x8xi32, #tpu.memory_space<smem>>
    %54 = arith.index_cast %53 : i32 to index
    %c0_53 = arith.constant 0 : index
    %55 = vector.load %arg6[%54, %c0_53] : memref<16x128xf32, #tpu.memory_space<vmem>>, vector<1x128xf32>
    %c41 = arith.constant 41 : index
    %c0_54 = arith.constant 0 : index
    %56 = vector.load %arg14[%c41, %c0_54] : memref<64x128xf32, #tpu.memory_space<vmem>>, vector<1x128xf32>
    tpu.vector_store %arg14[%c41, %c0_54], %55 {strides = array<i32>} : memref<64x128xf32, #tpu.memory_space<vmem>>, vector<1x128xf32>,
    %c0_55 = arith.constant 0 : index
    %c6 = arith.constant 6 : index
    %57 = memref.load %arg1[%c0_55, %c6] : memref<2x8xi32, #tpu.memory_space<smem>>
    %58 = arith.index_cast %57 : i32 to index
    %c0_56 = arith.constant 0 : index
    %59 = vector.load %arg6[%58, %c0_56] : memref<16x128xf32, #tpu.memory_space<vmem>>, vector<1x128xf32>
    %c48 = arith.constant 48 : index
    %c0_57 = arith.constant 0 : index
    %60 = vector.load %arg14[%c48, %c0_57] : memref<64x128xf32, #tpu.memory_space<vmem>>, vector<1x128xf32>
    tpu.vector_store %arg14[%c48, %c0_57], %59 {strides = array<i32>} : memref<64x128xf32, #tpu.memory_space<vmem>>, vector<1x128xf32>,
    %c1_58 = arith.constant 1 : index
    %c6_59 = arith.constant 6 : index
    %61 = memref.load %arg1[%c1_58, %c6_59] : memref<2x8xi32, #tpu.memory_space<smem>>
    %62 = arith.index_cast %61 : i32 to index
    %c0_60 = arith.constant 0 : index
    %63 = vector.load %arg6[%62, %c0_60] : memref<16x128xf32, #tpu.memory_space<vmem>>, vector<1x128xf32>
    %c49 = arith.constant 49 : index
    %c0_61 = arith.constant 0 : index
    %64 = vector.load %arg14[%c49, %c0_61] : memref<64x128xf32, #tpu.memory_space<vmem>>, vector<1x128xf32>
    tpu.vector_store %arg14[%c49, %c0_61], %63 {strides = array<i32>} : memref<64x128xf32, #tpu.memory_space<vmem>>, vector<1x128xf32>,
    %c0_62 = arith.constant 0 : index
    %c7 = arith.constant 7 : index
    %65 = memref.load %arg1[%c0_62, %c7] : memref<2x8xi32, #tpu.memory_space<smem>>
    %66 = arith.index_cast %65 : i32 to index
    %c0_63 = arith.constant 0 : index
    %67 = vector.load %arg6[%66, %c0_63] : memref<16x128xf32, #tpu.memory_space<vmem>>, vector<1x128xf32>
    %c56 = arith.constant 56 : index
    %c0_64 = arith.constant 0 : index
    %68 = vector.load %arg14[%c56, %c0_64] : memref<64x128xf32, #tpu.memory_space<vmem>>, vector<1x128xf32>
    tpu.vector_store %arg14[%c56, %c0_64], %67 {strides = array<i32>} : memref<64x128xf32, #tpu.memory_space<vmem>>, vector<1x128xf32>,
    %c1_65 = arith.constant 1 : index
    %c7_66 = arith.constant 7 : index
    %69 = memref.load %arg1[%c1_65, %c7_66] : memref<2x8xi32, #tpu.memory_space<smem>>
    %70 = arith.index_cast %69 : i32 to index
    %c0_67 = arith.constant 0 : index
    %71 = vector.load %arg6[%70, %c0_67] : memref<16x128xf32, #tpu.memory_space<vmem>>, vector<1x128xf32>
    %c57 = arith.constant 57 : index
    %c0_68 = arith.constant 0 : index
    %72 = vector.load %arg14[%c57, %c0_68] : memref<64x128xf32, #tpu.memory_space<vmem>>, vector<1x128xf32>
    tpu.vector_store %arg14[%c57, %c0_68], %71 {strides = array<i32>} : memref<64x128xf32, #tpu.memory_space<vmem>>, vector<1x128xf32>,
    %c0_69 = arith.constant 0 : index
    %c0_70 = arith.constant 0 : index
    %73 = vector.load %arg14[%c0_69, %c0_70] : memref<64x128xf32, #tpu.memory_space<vmem>>, vector<64x128xf32>
    %c0_71 = arith.constant 0 : index
    %c0_72 = arith.constant 0 : index
    %74 = vector.load %arg7[%c0_71, %c0_72] : memref<128x512xf32, #tpu.memory_space<vmem>>, vector<128x512xf32>
    %cst_73 = arith.constant dense<0.000000e+00> : vector<64x512xf32>
    %75 = tpu.matmul %73, %74, %cst_73 {dimension_numbers = #tpu.dot_dimension_numbers<[1], [0], [0], [1], [0, 0, 1, 1], [], []>} : vector<64x128xf32>, vector<128x512xf32>, vector<64x512xf32> -> vector<64x512xf32>
    %c0_74 = arith.constant 0 : index
    %c0_75 = arith.constant 0 : index
    %76 = vector.load %arg8[%c0_74, %c0_75] : memref<1x512xf32, #tpu.memory_space<vmem>>, vector<1x512xf32>
    %77 = vector.broadcast %76 : vector<1x512xf32> to vector<64x512xf32>
    %78 = arith.addf %75, %77 : vector<64x512xf32>
    %c0_76 = arith.constant 0 : index
    %c0_77 = arith.constant 0 : index
    %79 = vector.load %arg15[%c0_76, %c0_77] : memref<64x512xf32, #tpu.memory_space<vmem>>, vector<64x512xf32>
    tpu.vector_store %arg15[%c0_76, %c0_77], %78 {strides = array<i32>} : memref<64x512xf32, #tpu.memory_space<vmem>>, vector<64x512xf32>,
    %cst_78 = arith.constant 0.000000e+00 : f32
    %80 = vector.broadcast %cst_78 : f32 to vector<8x128xf32>
    %cst_79 = arith.constant 0.000000e+00 : f32
    %81 = vector.broadcast %cst_79 : f32 to vector<8x128xf32>
    %c0_80 = arith.constant 0 : index
    %c0_81 = arith.constant 0 : index
    %82 = vector.load %arg13[%c0_80, %c0_81] : memref<32x512xf32, #tpu.memory_space<vmem>>, vector<8x512xf32>
    %c0_82 = arith.constant 0 : index
    %c0_83 = arith.constant 0 : index
    %83 = vector.load %arg5[%c0_82, %c0_83] : memref<128x512xf32, #tpu.memory_space<vmem>>, vector<128x512xf32>
    %cst_84 = arith.constant dense<0.000000e+00> : vector<8x512xf32>
    %84 = tpu.matmul %80, %83, %cst_84 {dimension_numbers = #tpu.dot_dimension_numbers<[1], [0], [0], [1], [0, 0, 1, 1], [], []>} : vector<8x128xf32>, vector<128x512xf32>, vector<8x512xf32> -> vector<8x512xf32>
    %85 = arith.addf %82, %84 : vector<8x512xf32>
    %86 = vector.extract_strided_slice %85 {offsets = [0, 0], sizes = [8, 128], strides = [1, 1]} : vector<8x512xf32> to vector<8x128xf32>
    %cst_85 = arith.constant 5.000000e-01 : f32
    %87 = vector.broadcast %cst_85 : f32 to vector<8x128xf32>
    %88 = arith.mulf %87, %86 : vector<8x128xf32>
    %89 = math.tanh %88 : vector<8x128xf32>
    %cst_86 = arith.constant 5.000000e-01 : f32
    %90 = vector.broadcast %cst_86 : f32 to vector<8x128xf32>
    %91 = arith.mulf %90, %89 : vector<8x128xf32>
    %cst_87 = arith.constant 5.000000e-01 : f32
    %92 = vector.broadcast %cst_87 : f32 to vector<8x128xf32>
    %93 = arith.addf %91, %92 : vector<8x128xf32>
    %94 = vector.extract_strided_slice %85 {offsets = [0, 128], sizes = [8, 128], strides = [1, 1]} : vector<8x512xf32> to vector<8x128xf32>
    %cst_88 = arith.constant 5.000000e-01 : f32
    %95 = vector.broadcast %cst_88 : f32 to vector<8x128xf32>
    %96 = arith.mulf %95, %94 : vector<8x128xf32>
    %97 = math.tanh %96 : vector<8x128xf32>
    %cst_89 = arith.constant 5.000000e-01 : f32
    %98 = vector.broadcast %cst_89 : f32 to vector<8x128xf32>
    %99 = arith.mulf %98, %97 : vector<8x128xf32>
    %cst_90 = arith.constant 5.000000e-01 : f32
    %100 = vector.broadcast %cst_90 : f32 to vector<8x128xf32>
    %101 = arith.addf %99, %100 : vector<8x128xf32>
    %102 = vector.extract_strided_slice %85 {offsets = [0, 256], sizes = [8, 128], strides = [1, 1]} : vector<8x512xf32> to vector<8x128xf32>
    %103 = math.tanh %102 : vector<8x128xf32>
    %104 = vector.extract_strided_slice %85 {offsets = [0, 384], sizes = [8, 128], strides = [1, 1]} : vector<8x512xf32> to vector<8x128xf32>
    %cst_91 = arith.constant 5.000000e-01 : f32
    %105 = vector.broadcast %cst_91 : f32 to vector<8x128xf32>
    %106 = arith.mulf %105, %104 : vector<8x128xf32>
    %107 = math.tanh %106 : vector<8x128xf32>
    %cst_92 = arith.constant 5.000000e-01 : f32
    %108 = vector.broadcast %cst_92 : f32 to vector<8x128xf32>
    %109 = arith.mulf %108, %107 : vector<8x128xf32>
    %cst_93 = arith.constant 5.000000e-01 : f32
    %110 = vector.broadcast %cst_93 : f32 to vector<8x128xf32>
    %111 = arith.addf %109, %110 : vector<8x128xf32>
    %112 = arith.mulf %101, %81 : vector<8x128xf32>
    %113 = arith.mulf %93, %103 : vector<8x128xf32>
    %114 = arith.addf %112, %113 : vector<8x128xf32>
    %115 = math.tanh %114 : vector<8x128xf32>
    %116 = arith.mulf %111, %115 : vector<8x128xf32>
    %c8_94 = arith.constant 8 : index
    %c0_95 = arith.constant 0 : index
    %117 = vector.load %arg13[%c8_94, %c0_95] : memref<32x512xf32, #tpu.memory_space<vmem>>, vector<8x512xf32>
    %c0_96 = arith.constant 0 : index
    %c0_97 = arith.constant 0 : index
    %118 = vector.load %arg5[%c0_96, %c0_97] : memref<128x512xf32, #tpu.memory_space<vmem>>, vector<128x512xf32>
    %cst_98 = arith.constant dense<0.000000e+00> : vector<8x512xf32>
    %119 = tpu.matmul %116, %118, %cst_98 {dimension_numbers = #tpu.dot_dimension_numbers<[1], [0], [0], [1], [0, 0, 1, 1], [], []>} : vector<8x128xf32>, vector<128x512xf32>, vector<8x512xf32> -> vector<8x512xf32>
    %120 = arith.addf %117, %119 : vector<8x512xf32>
    %121 = vector.extract_strided_slice %120 {offsets = [0, 0], sizes = [8, 128], strides = [1, 1]} : vector<8x512xf32> to vector<8x128xf32>
    %cst_99 = arith.constant 5.000000e-01 : f32
    %122 = vector.broadcast %cst_99 : f32 to vector<8x128xf32>
    %123 = arith.mulf %122, %121 : vector<8x128xf32>
    %124 = math.tanh %123 : vector<8x128xf32>
    %cst_100 = arith.constant 5.000000e-01 : f32
    %125 = vector.broadcast %cst_100 : f32 to vector<8x128xf32>
    %126 = arith.mulf %125, %124 : vector<8x128xf32>
    %cst_101 = arith.constant 5.000000e-01 : f32
    %127 = vector.broadcast %cst_101 : f32 to vector<8x128xf32>
    %128 = arith.addf %126, %127 : vector<8x128xf32>
    %129 = vector.extract_strided_slice %120 {offsets = [0, 128], sizes = [8, 128], strides = [1, 1]} : vector<8x512xf32> to vector<8x128xf32>
    %cst_102 = arith.constant 5.000000e-01 : f32
    %130 = vector.broadcast %cst_102 : f32 to vector<8x128xf32>
    %131 = arith.mulf %130, %129 : vector<8x128xf32>
    %132 = math.tanh %131 : vector<8x128xf32>
    %cst_103 = arith.constant 5.000000e-01 : f32
    %133 = vector.broadcast %cst_103 : f32 to vector<8x128xf32>
    %134 = arith.mulf %133, %132 : vector<8x128xf32>
    %cst_104 = arith.constant 5.000000e-01 : f32
    %135 = vector.broadcast %cst_104 : f32 to vector<8x128xf32>
    %136 = arith.addf %134, %135 : vector<8x128xf32>
    %137 = vector.extract_strided_slice %120 {offsets = [0, 256], sizes = [8, 128], strides = [1, 1]} : vector<8x512xf32> to vector<8x128xf32>
    %138 = math.tanh %137 : vector<8x128xf32>
    %139 = vector.extract_strided_slice %120 {offsets = [0, 384], sizes = [8, 128], strides = [1, 1]} : vector<8x512xf32> to vector<8x128xf32>
    %cst_105 = arith.constant 5.000000e-01 : f32
    %140 = vector.broadcast %cst_105 : f32 to vector<8x128xf32>
    %141 = arith.mulf %140, %139 : vector<8x128xf32>
    %142 = math.tanh %141 : vector<8x128xf32>
    %cst_106 = arith.constant 5.000000e-01 : f32
    %143 = vector.broadcast %cst_106 : f32 to vector<8x128xf32>
    %144 = arith.mulf %143, %142 : vector<8x128xf32>
    %cst_107 = arith.constant 5.000000e-01 : f32
    %145 = vector.broadcast %cst_107 : f32 to vector<8x128xf32>
    %146 = arith.addf %144, %145 : vector<8x128xf32>
    %147 = arith.mulf %136, %114 : vector<8x128xf32>
    %148 = arith.mulf %128, %138 : vector<8x128xf32>
    %149 = arith.addf %147, %148 : vector<8x128xf32>
    %150 = math.tanh %149 : vector<8x128xf32>
    %151 = arith.mulf %146, %150 : vector<8x128xf32>
    %c16_108 = arith.constant 16 : index
    %c0_109 = arith.constant 0 : index
    %152 = vector.load %arg13[%c16_108, %c0_109] : memref<32x512xf32, #tpu.memory_space<vmem>>, vector<8x512xf32>
    %c0_110 = arith.constant 0 : index
    %c0_111 = arith.constant 0 : index
    %153 = vector.load %arg5[%c0_110, %c0_111] : memref<128x512xf32, #tpu.memory_space<vmem>>, vector<128x512xf32>
    %cst_112 = arith.constant dense<0.000000e+00> : vector<8x512xf32>
    %154 = tpu.matmul %151, %153, %cst_112 {dimension_numbers = #tpu.dot_dimension_numbers<[1], [0], [0], [1], [0, 0, 1, 1], [], []>} : vector<8x128xf32>, vector<128x512xf32>, vector<8x512xf32> -> vector<8x512xf32>
    %155 = arith.addf %152, %154 : vector<8x512xf32>
    %156 = vector.extract_strided_slice %155 {offsets = [0, 0], sizes = [8, 128], strides = [1, 1]} : vector<8x512xf32> to vector<8x128xf32>
    %cst_113 = arith.constant 5.000000e-01 : f32
    %157 = vector.broadcast %cst_113 : f32 to vector<8x128xf32>
    %158 = arith.mulf %157, %156 : vector<8x128xf32>
    %159 = math.tanh %158 : vector<8x128xf32>
    %cst_114 = arith.constant 5.000000e-01 : f32
    %160 = vector.broadcast %cst_114 : f32 to vector<8x128xf32>
    %161 = arith.mulf %160, %159 : vector<8x128xf32>
    %cst_115 = arith.constant 5.000000e-01 : f32
    %162 = vector.broadcast %cst_115 : f32 to vector<8x128xf32>
    %163 = arith.addf %161, %162 : vector<8x128xf32>
    %164 = vector.extract_strided_slice %155 {offsets = [0, 128], sizes = [8, 128], strides = [1, 1]} : vector<8x512xf32> to vector<8x128xf32>
    %cst_116 = arith.constant 5.000000e-01 : f32
    %165 = vector.broadcast %cst_116 : f32 to vector<8x128xf32>
    %166 = arith.mulf %165, %164 : vector<8x128xf32>
    %167 = math.tanh %166 : vector<8x128xf32>
    %cst_117 = arith.constant 5.000000e-01 : f32
    %168 = vector.broadcast %cst_117 : f32 to vector<8x128xf32>
    %169 = arith.mulf %168, %167 : vector<8x128xf32>
    %cst_118 = arith.constant 5.000000e-01 : f32
    %170 = vector.broadcast %cst_118 : f32 to vector<8x128xf32>
    %171 = arith.addf %169, %170 : vector<8x128xf32>
    %172 = vector.extract_strided_slice %155 {offsets = [0, 256], sizes = [8, 128], strides = [1, 1]} : vector<8x512xf32> to vector<8x128xf32>
    %173 = math.tanh %172 : vector<8x128xf32>
    %174 = vector.extract_strided_slice %155 {offsets = [0, 384], sizes = [8, 128], strides = [1, 1]} : vector<8x512xf32> to vector<8x128xf32>
    %cst_119 = arith.constant 5.000000e-01 : f32
    %175 = vector.broadcast %cst_119 : f32 to vector<8x128xf32>
    %176 = arith.mulf %175, %174 : vector<8x128xf32>
    %177 = math.tanh %176 : vector<8x128xf32>
    %cst_120 = arith.constant 5.000000e-01 : f32
    %178 = vector.broadcast %cst_120 : f32 to vector<8x128xf32>
    %179 = arith.mulf %178, %177 : vector<8x128xf32>
    %cst_121 = arith.constant 5.000000e-01 : f32
    %180 = vector.broadcast %cst_121 : f32 to vector<8x128xf32>
    %181 = arith.addf %179, %180 : vector<8x128xf32>
    %182 = arith.mulf %171, %149 : vector<8x128xf32>
    %183 = arith.mulf %163, %173 : vector<8x128xf32>
    %184 = arith.addf %182, %183 : vector<8x128xf32>
    %185 = math.tanh %184 : vector<8x128xf32>
    %186 = arith.mulf %181, %185 : vector<8x128xf32>
    %c24_122 = arith.constant 24 : index
    %c0_123 = arith.constant 0 : index
    %187 = vector.load %arg13[%c24_122, %c0_123] : memref<32x512xf32, #tpu.memory_space<vmem>>, vector<8x512xf32>
    %c0_124 = arith.constant 0 : index
    %c0_125 = arith.constant 0 : index
    %188 = vector.load %arg5[%c0_124, %c0_125] : memref<128x512xf32, #tpu.memory_space<vmem>>, vector<128x512xf32>
    %cst_126 = arith.constant dense<0.000000e+00> : vector<8x512xf32>
    %189 = tpu.matmul %186, %188, %cst_126 {dimension_numbers = #tpu.dot_dimension_numbers<[1], [0], [0], [1], [0, 0, 1, 1], [], []>} : vector<8x128xf32>, vector<128x512xf32>, vector<8x512xf32> -> vector<8x512xf32>
    %190 = arith.addf %187, %189 : vector<8x512xf32>
    %191 = vector.extract_strided_slice %190 {offsets = [0, 0], sizes = [8, 128], strides = [1, 1]} : vector<8x512xf32> to vector<8x128xf32>
    %cst_127 = arith.constant 5.000000e-01 : f32
    %192 = vector.broadcast %cst_127 : f32 to vector<8x128xf32>
    %193 = arith.mulf %192, %191 : vector<8x128xf32>
    %194 = math.tanh %193 : vector<8x128xf32>
    %cst_128 = arith.constant 5.000000e-01 : f32
    %195 = vector.broadcast %cst_128 : f32 to vector<8x128xf32>
    %196 = arith.mulf %195, %194 : vector<8x128xf32>
    %cst_129 = arith.constant 5.000000e-01 : f32
    %197 = vector.broadcast %cst_129 : f32 to vector<8x128xf32>
    %198 = arith.addf %196, %197 : vector<8x128xf32>
    %199 = vector.extract_strided_slice %190 {offsets = [0, 128], sizes = [8, 128], strides = [1, 1]} : vector<8x512xf32> to vector<8x128xf32>
    %cst_130 = arith.constant 5.000000e-01 : f32
    %200 = vector.broadcast %cst_130 : f32 to vector<8x128xf32>
    %201 = arith.mulf %200, %199 : vector<8x128xf32>
    %202 = math.tanh %201 : vector<8x128xf32>
    %cst_131 = arith.constant 5.000000e-01 : f32
    %203 = vector.broadcast %cst_131 : f32 to vector<8x128xf32>
    %204 = arith.mulf %203, %202 : vector<8x128xf32>
    %cst_132 = arith.constant 5.000000e-01 : f32
    %205 = vector.broadcast %cst_132 : f32 to vector<8x128xf32>
    %206 = arith.addf %204, %205 : vector<8x128xf32>
    %207 = vector.extract_strided_slice %190 {offsets = [0, 256], sizes = [8, 128], strides = [1, 1]} : vector<8x512xf32> to vector<8x128xf32>
    %208 = math.tanh %207 : vector<8x128xf32>
    %209 = vector.extract_strided_slice %190 {offsets = [0, 384], sizes = [8, 128], strides = [1, 1]} : vector<8x512xf32> to vector<8x128xf32>
    %cst_133 = arith.constant 5.000000e-01 : f32
    %210 = vector.broadcast %cst_133 : f32 to vector<8x128xf32>
    %211 = arith.mulf %210, %209 : vector<8x128xf32>
    %212 = math.tanh %211 : vector<8x128xf32>
    %cst_134 = arith.constant 5.000000e-01 : f32
    %213 = vector.broadcast %cst_134 : f32 to vector<8x128xf32>
    %214 = arith.mulf %213, %212 : vector<8x128xf32>
    %cst_135 = arith.constant 5.000000e-01 : f32
    %215 = vector.broadcast %cst_135 : f32 to vector<8x128xf32>
    %216 = arith.addf %214, %215 : vector<8x128xf32>
    %217 = arith.mulf %206, %184 : vector<8x128xf32>
    %218 = arith.mulf %198, %208 : vector<8x128xf32>
    %219 = arith.addf %217, %218 : vector<8x128xf32>
    %220 = math.tanh %219 : vector<8x128xf32>
    %221 = arith.mulf %216, %220 : vector<8x128xf32>
    %c0_136 = arith.constant 0 : index
    %c0_137 = arith.constant 0 : index
    %222 = vector.load %arg15[%c0_136, %c0_137] : memref<64x512xf32, #tpu.memory_space<vmem>>, vector<8x512xf32>
    %c0_138 = arith.constant 0 : index
    %c0_139 = arith.constant 0 : index
    %223 = vector.load %arg9[%c0_138, %c0_139] : memref<128x512xf32, #tpu.memory_space<vmem>>, vector<128x512xf32>
    %cst_140 = arith.constant dense<0.000000e+00> : vector<8x512xf32>
    %224 = tpu.matmul %221, %223, %cst_140 {dimension_numbers = #tpu.dot_dimension_numbers<[1], [0], [0], [1], [0, 0, 1, 1], [], []>} : vector<8x128xf32>, vector<128x512xf32>, vector<8x512xf32> -> vector<8x512xf32>
    %225 = arith.addf %222, %224 : vector<8x512xf32>
    %226 = vector.extract_strided_slice %225 {offsets = [0, 0], sizes = [8, 128], strides = [1, 1]} : vector<8x512xf32> to vector<8x128xf32>
    %cst_141 = arith.constant 5.000000e-01 : f32
    %227 = vector.broadcast %cst_141 : f32 to vector<8x128xf32>
    %228 = arith.mulf %227, %226 : vector<8x128xf32>
    %229 = math.tanh %228 : vector<8x128xf32>
    %cst_142 = arith.constant 5.000000e-01 : f32
    %230 = vector.broadcast %cst_142 : f32 to vector<8x128xf32>
    %231 = arith.mulf %230, %229 : vector<8x128xf32>
    %cst_143 = arith.constant 5.000000e-01 : f32
    %232 = vector.broadcast %cst_143 : f32 to vector<8x128xf32>
    %233 = arith.addf %231, %232 : vector<8x128xf32>
    %234 = vector.extract_strided_slice %225 {offsets = [0, 128], sizes = [8, 128], strides = [1, 1]} : vector<8x512xf32> to vector<8x128xf32>
    %cst_144 = arith.constant 5.000000e-01 : f32
    %235 = vector.broadcast %cst_144 : f32 to vector<8x128xf32>
    %236 = arith.mulf %235, %234 : vector<8x128xf32>
    %237 = math.tanh %236 : vector<8x128xf32>
    %cst_145 = arith.constant 5.000000e-01 : f32
    %238 = vector.broadcast %cst_145 : f32 to vector<8x128xf32>
    %239 = arith.mulf %238, %237 : vector<8x128xf32>
    %cst_146 = arith.constant 5.000000e-01 : f32
    %240 = vector.broadcast %cst_146 : f32 to vector<8x128xf32>
    %241 = arith.addf %239, %240 : vector<8x128xf32>
    %242 = vector.extract_strided_slice %225 {offsets = [0, 256], sizes = [8, 128], strides = [1, 1]} : vector<8x512xf32> to vector<8x128xf32>
    %243 = math.tanh %242 : vector<8x128xf32>
    %244 = vector.extract_strided_slice %225 {offsets = [0, 384], sizes = [8, 128], strides = [1, 1]} : vector<8x512xf32> to vector<8x128xf32>
    %cst_147 = arith.constant 5.000000e-01 : f32
    %245 = vector.broadcast %cst_147 : f32 to vector<8x128xf32>
    %246 = arith.mulf %245, %244 : vector<8x128xf32>
    %247 = math.tanh %246 : vector<8x128xf32>
    %cst_148 = arith.constant 5.000000e-01 : f32
    %248 = vector.broadcast %cst_148 : f32 to vector<8x128xf32>
    %249 = arith.mulf %248, %247 : vector<8x128xf32>
    %cst_149 = arith.constant 5.000000e-01 : f32
    %250 = vector.broadcast %cst_149 : f32 to vector<8x128xf32>
    %251 = arith.addf %249, %250 : vector<8x128xf32>
    %252 = arith.mulf %241, %219 : vector<8x128xf32>
    %253 = arith.mulf %233, %243 : vector<8x128xf32>
    %254 = arith.addf %252, %253 : vector<8x128xf32>
    %255 = math.tanh %254 : vector<8x128xf32>
    %256 = arith.mulf %251, %255 : vector<8x128xf32>
    %c0_150 = arith.constant 0 : index
    %c0_151 = arith.constant 0 : index
    %257 = vector.load %arg10[%c0_150, %c0_151] : memref<128x128xf32, #tpu.memory_space<vmem>>, vector<128x128xf32>
    %cst_152 = arith.constant dense<0.000000e+00> : vector<8x128xf32>
    %258 = tpu.matmul %256, %257, %cst_152 {dimension_numbers = #tpu.dot_dimension_numbers<[1], [0], [0], [1], [0, 0, 1, 1], [], []>} : vector<8x128xf32>, vector<128x128xf32>, vector<8x128xf32> -> vector<8x128xf32>
    %c0_153 = arith.constant 0 : index
    %c0_154 = arith.constant 0 : index
    %259 = vector.load %arg11[%c0_153, %c0_154] : memref<1x128xf32, #tpu.memory_space<vmem>>, vector<1x128xf32>
    %260 = vector.broadcast %259 : vector<1x128xf32> to vector<8x128xf32>
    %261 = arith.addf %258, %260 : vector<8x128xf32>
    %c0_155 = arith.constant 0 : index
    %c0_156 = arith.constant 0 : index
    %262 = vector.load %arg12[%c0_155, %c0_156] : memref<64x128xf32, #tpu.memory_space<vmem>>, vector<8x128xf32>
    tpu.vector_store %arg12[%c0_155, %c0_156], %261 {strides = array<i32>} : memref<64x128xf32, #tpu.memory_space<vmem>>, vector<8x128xf32>,
    %c8_157 = arith.constant 8 : index
    %c0_158 = arith.constant 0 : index
    %263 = vector.load %arg15[%c8_157, %c0_158] : memref<64x512xf32, #tpu.memory_space<vmem>>, vector<8x512xf32>
    %c0_159 = arith.constant 0 : index
    %c0_160 = arith.constant 0 : index
    %264 = vector.load %arg9[%c0_159, %c0_160] : memref<128x512xf32, #tpu.memory_space<vmem>>, vector<128x512xf32>
    %cst_161 = arith.constant dense<0.000000e+00> : vector<8x512xf32>
    %265 = tpu.matmul %256, %264, %cst_161 {dimension_numbers = #tpu.dot_dimension_numbers<[1], [0], [0], [1], [0, 0, 1, 1], [], []>} : vector<8x128xf32>, vector<128x512xf32>, vector<8x512xf32> -> vector<8x512xf32>
    %266 = arith.addf %263, %265 : vector<8x512xf32>
    %267 = vector.extract_strided_slice %266 {offsets = [0, 0], sizes = [8, 128], strides = [1, 1]} : vector<8x512xf32> to vector<8x128xf32>
    %cst_162 = arith.constant 5.000000e-01 : f32
    %268 = vector.broadcast %cst_162 : f32 to vector<8x128xf32>
    %269 = arith.mulf %268, %267 : vector<8x128xf32>
    %270 = math.tanh %269 : vector<8x128xf32>
    %cst_163 = arith.constant 5.000000e-01 : f32
    %271 = vector.broadcast %cst_163 : f32 to vector<8x128xf32>
    %272 = arith.mulf %271, %270 : vector<8x128xf32>
    %cst_164 = arith.constant 5.000000e-01 : f32
    %273 = vector.broadcast %cst_164 : f32 to vector<8x128xf32>
    %274 = arith.addf %272, %273 : vector<8x128xf32>
    %275 = vector.extract_strided_slice %266 {offsets = [0, 128], sizes = [8, 128], strides = [1, 1]} : vector<8x512xf32> to vector<8x128xf32>
    %cst_165 = arith.constant 5.000000e-01 : f32
    %276 = vector.broadcast %cst_165 : f32 to vector<8x128xf32>
    %277 = arith.mulf %276, %275 : vector<8x128xf32>
    %278 = math.tanh %277 : vector<8x128xf32>
    %cst_166 = arith.constant 5.000000e-01 : f32
    %279 = vector.broadcast %cst_166 : f32 to vector<8x128xf32>
    %280 = arith.mulf %279, %278 : vector<8x128xf32>
    %cst_167 = arith.constant 5.000000e-01 : f32
    %281 = vector.broadcast %cst_167 : f32 to vector<8x128xf32>
    %282 = arith.addf %280, %281 : vector<8x128xf32>
    %283 = vector.extract_strided_slice %266 {offsets = [0, 256], sizes = [8, 128], strides = [1, 1]} : vector<8x512xf32> to vector<8x128xf32>
    %284 = math.tanh %283 : vector<8x128xf32>
    %285 = vector.extract_strided_slice %266 {offsets = [0, 384], sizes = [8, 128], strides = [1, 1]} : vector<8x512xf32> to vector<8x128xf32>
    %cst_168 = arith.constant 5.000000e-01 : f32
    %286 = vector.broadcast %cst_168 : f32 to vector<8x128xf32>
    %287 = arith.mulf %286, %285 : vector<8x128xf32>
    %288 = math.tanh %287 : vector<8x128xf32>
    %cst_169 = arith.constant 5.000000e-01 : f32
    %289 = vector.broadcast %cst_169 : f32 to vector<8x128xf32>
    %290 = arith.mulf %289, %288 : vector<8x128xf32>
    %cst_170 = arith.constant 5.000000e-01 : f32
    %291 = vector.broadcast %cst_170 : f32 to vector<8x128xf32>
    %292 = arith.addf %290, %291 : vector<8x128xf32>
    %293 = arith.mulf %282, %254 : vector<8x128xf32>
    %294 = arith.mulf %274, %284 : vector<8x128xf32>
    %295 = arith.addf %293, %294 : vector<8x128xf32>
    %296 = math.tanh %295 : vector<8x128xf32>
    %297 = arith.mulf %292, %296 : vector<8x128xf32>
    %c0_171 = arith.constant 0 : index
    %c0_172 = arith.constant 0 : index
    %298 = vector.load %arg10[%c0_171, %c0_172] : memref<128x128xf32, #tpu.memory_space<vmem>>, vector<128x128xf32>
    %cst_173 = arith.constant dense<0.000000e+00> : vector<8x128xf32>
    %299 = tpu.matmul %297, %298, %cst_173 {dimension_numbers = #tpu.dot_dimension_numbers<[1], [0], [0], [1], [0, 0, 1, 1], [], []>} : vector<8x128xf32>, vector<128x128xf32>, vector<8x128xf32> -> vector<8x128xf32>
    %c0_174 = arith.constant 0 : index
    %c0_175 = arith.constant 0 : index
    %300 = vector.load %arg11[%c0_174, %c0_175] : memref<1x128xf32, #tpu.memory_space<vmem>>, vector<1x128xf32>
    %301 = vector.broadcast %300 : vector<1x128xf32> to vector<8x128xf32>
    %302 = arith.addf %299, %301 : vector<8x128xf32>
    %c8_176 = arith.constant 8 : index
    %c0_177 = arith.constant 0 : index
    %303 = vector.load %arg12[%c8_176, %c0_177] : memref<64x128xf32, #tpu.memory_space<vmem>>, vector<8x128xf32>
    tpu.vector_store %arg12[%c8_176, %c0_177], %302 {strides = array<i32>} : memref<64x128xf32, #tpu.memory_space<vmem>>, vector<8x128xf32>,
    %c16_178 = arith.constant 16 : index
    %c0_179 = arith.constant 0 : index
    %304 = vector.load %arg15[%c16_178, %c0_179] : memref<64x512xf32, #tpu.memory_space<vmem>>, vector<8x512xf32>
    %c0_180 = arith.constant 0 : index
    %c0_181 = arith.constant 0 : index
    %305 = vector.load %arg9[%c0_180, %c0_181] : memref<128x512xf32, #tpu.memory_space<vmem>>, vector<128x512xf32>
    %cst_182 = arith.constant dense<0.000000e+00> : vector<8x512xf32>
    %306 = tpu.matmul %297, %305, %cst_182 {dimension_numbers = #tpu.dot_dimension_numbers<[1], [0], [0], [1], [0, 0, 1, 1], [], []>} : vector<8x128xf32>, vector<128x512xf32>, vector<8x512xf32> -> vector<8x512xf32>
    %307 = arith.addf %304, %306 : vector<8x512xf32>
    %308 = vector.extract_strided_slice %307 {offsets = [0, 0], sizes = [8, 128], strides = [1, 1]} : vector<8x512xf32> to vector<8x128xf32>
    %cst_183 = arith.constant 5.000000e-01 : f32
    %309 = vector.broadcast %cst_183 : f32 to vector<8x128xf32>
    %310 = arith.mulf %309, %308 : vector<8x128xf32>
    %311 = math.tanh %310 : vector<8x128xf32>
    %cst_184 = arith.constant 5.000000e-01 : f32
    %312 = vector.broadcast %cst_184 : f32 to vector<8x128xf32>
    %313 = arith.mulf %312, %311 : vector<8x128xf32>
    %cst_185 = arith.constant 5.000000e-01 : f32
    %314 = vector.broadcast %cst_185 : f32 to vector<8x128xf32>
    %315 = arith.addf %313, %314 : vector<8x128xf32>
    %316 = vector.extract_strided_slice %307 {offsets = [0, 128], sizes = [8, 128], strides = [1, 1]} : vector<8x512xf32> to vector<8x128xf32>
    %cst_186 = arith.constant 5.000000e-01 : f32
    %317 = vector.broadcast %cst_186 : f32 to vector<8x128xf32>
    %318 = arith.mulf %317, %316 : vector<8x128xf32>
    %319 = math.tanh %318 : vector<8x128xf32>
    %cst_187 = arith.constant 5.000000e-01 : f32
    %320 = vector.broadcast %cst_187 : f32 to vector<8x128xf32>
    %321 = arith.mulf %320, %319 : vector<8x128xf32>
    %cst_188 = arith.constant 5.000000e-01 : f32
    %322 = vector.broadcast %cst_188 : f32 to vector<8x128xf32>
    %323 = arith.addf %321, %322 : vector<8x128xf32>
    %324 = vector.extract_strided_slice %307 {offsets = [0, 256], sizes = [8, 128], strides = [1, 1]} : vector<8x512xf32> to vector<8x128xf32>
    %325 = math.tanh %324 : vector<8x128xf32>
    %326 = vector.extract_strided_slice %307 {offsets = [0, 384], sizes = [8, 128], strides = [1, 1]} : vector<8x512xf32> to vector<8x128xf32>
    %cst_189 = arith.constant 5.000000e-01 : f32
    %327 = vector.broadcast %cst_189 : f32 to vector<8x128xf32>
    %328 = arith.mulf %327, %326 : vector<8x128xf32>
    %329 = math.tanh %328 : vector<8x128xf32>
    %cst_190 = arith.constant 5.000000e-01 : f32
    %330 = vector.broadcast %cst_190 : f32 to vector<8x128xf32>
    %331 = arith.mulf %330, %329 : vector<8x128xf32>
    %cst_191 = arith.constant 5.000000e-01 : f32
    %332 = vector.broadcast %cst_191 : f32 to vector<8x128xf32>
    %333 = arith.addf %331, %332 : vector<8x128xf32>
    %334 = arith.mulf %323, %295 : vector<8x128xf32>
    %335 = arith.mulf %315, %325 : vector<8x128xf32>
    %336 = arith.addf %334, %335 : vector<8x128xf32>
    %337 = math.tanh %336 : vector<8x128xf32>
    %338 = arith.mulf %333, %337 : vector<8x128xf32>
    %c0_192 = arith.constant 0 : index
    %c0_193 = arith.constant 0 : index
    %339 = vector.load %arg10[%c0_192, %c0_193] : memref<128x128xf32, #tpu.memory_space<vmem>>, vector<128x128xf32>
    %cst_194 = arith.constant dense<0.000000e+00> : vector<8x128xf32>
    %340 = tpu.matmul %338, %339, %cst_194 {dimension_numbers = #tpu.dot_dimension_numbers<[1], [0], [0], [1], [0, 0, 1, 1], [], []>} : vector<8x128xf32>, vector<128x128xf32>, vector<8x128xf32> -> vector<8x128xf32>
    %c0_195 = arith.constant 0 : index
    %c0_196 = arith.constant 0 : index
    %341 = vector.load %arg11[%c0_195, %c0_196] : memref<1x128xf32, #tpu.memory_space<vmem>>, vector<1x128xf32>
    %342 = vector.broadcast %341 : vector<1x128xf32> to vector<8x128xf32>
    %343 = arith.addf %340, %342 : vector<8x128xf32>
    %c16_197 = arith.constant 16 : index
    %c0_198 = arith.constant 0 : index
    %344 = vector.load %arg12[%c16_197, %c0_198] : memref<64x128xf32, #tpu.memory_space<vmem>>, vector<8x128xf32>
    tpu.vector_store %arg12[%c16_197, %c0_198], %343 {strides = array<i32>} : memref<64x128xf32, #tpu.memory_space<vmem>>, vector<8x128xf32>,
    %c24_199 = arith.constant 24 : index
    %c0_200 = arith.constant 0 : index
    %345 = vector.load %arg15[%c24_199, %c0_200] : memref<64x512xf32, #tpu.memory_space<vmem>>, vector<8x512xf32>
    %c0_201 = arith.constant 0 : index
    %c0_202 = arith.constant 0 : index
    %346 = vector.load %arg9[%c0_201, %c0_202] : memref<128x512xf32, #tpu.memory_space<vmem>>, vector<128x512xf32>
    %cst_203 = arith.constant dense<0.000000e+00> : vector<8x512xf32>
    %347 = tpu.matmul %338, %346, %cst_203 {dimension_numbers = #tpu.dot_dimension_numbers<[1], [0], [0], [1], [0, 0, 1, 1], [], []>} : vector<8x128xf32>, vector<128x512xf32>, vector<8x512xf32> -> vector<8x512xf32>
    %348 = arith.addf %345, %347 : vector<8x512xf32>
    %349 = vector.extract_strided_slice %348 {offsets = [0, 0], sizes = [8, 128], strides = [1, 1]} : vector<8x512xf32> to vector<8x128xf32>
    %cst_204 = arith.constant 5.000000e-01 : f32
    %350 = vector.broadcast %cst_204 : f32 to vector<8x128xf32>
    %351 = arith.mulf %350, %349 : vector<8x128xf32>
    %352 = math.tanh %351 : vector<8x128xf32>
    %cst_205 = arith.constant 5.000000e-01 : f32
    %353 = vector.broadcast %cst_205 : f32 to vector<8x128xf32>
    %354 = arith.mulf %353, %352 : vector<8x128xf32>
    %cst_206 = arith.constant 5.000000e-01 : f32
    %355 = vector.broadcast %cst_206 : f32 to vector<8x128xf32>
    %356 = arith.addf %354, %355 : vector<8x128xf32>
    %357 = vector.extract_strided_slice %348 {offsets = [0, 128], sizes = [8, 128], strides = [1, 1]} : vector<8x512xf32> to vector<8x128xf32>
    %cst_207 = arith.constant 5.000000e-01 : f32
    %358 = vector.broadcast %cst_207 : f32 to vector<8x128xf32>
    %359 = arith.mulf %358, %357 : vector<8x128xf32>
    %360 = math.tanh %359 : vector<8x128xf32>
    %cst_208 = arith.constant 5.000000e-01 : f32
    %361 = vector.broadcast %cst_208 : f32 to vector<8x128xf32>
    %362 = arith.mulf %361, %360 : vector<8x128xf32>
    %cst_209 = arith.constant 5.000000e-01 : f32
    %363 = vector.broadcast %cst_209 : f32 to vector<8x128xf32>
    %364 = arith.addf %362, %363 : vector<8x128xf32>
    %365 = vector.extract_strided_slice %348 {offsets = [0, 256], sizes = [8, 128], strides = [1, 1]} : vector<8x512xf32> to vector<8x128xf32>
    %366 = math.tanh %365 : vector<8x128xf32>
    %367 = vector.extract_strided_slice %348 {offsets = [0, 384], sizes = [8, 128], strides = [1, 1]} : vector<8x512xf32> to vector<8x128xf32>
    %cst_210 = arith.constant 5.000000e-01 : f32
    %368 = vector.broadcast %cst_210 : f32 to vector<8x128xf32>
    %369 = arith.mulf %368, %367 : vector<8x128xf32>
    %370 = math.tanh %369 : vector<8x128xf32>
    %cst_211 = arith.constant 5.000000e-01 : f32
    %371 = vector.broadcast %cst_211 : f32 to vector<8x128xf32>
    %372 = arith.mulf %371, %370 : vector<8x128xf32>
    %cst_212 = arith.constant 5.000000e-01 : f32
    %373 = vector.broadcast %cst_212 : f32 to vector<8x128xf32>
    %374 = arith.addf %372, %373 : vector<8x128xf32>
    %375 = arith.mulf %364, %336 : vector<8x128xf32>
    %376 = arith.mulf %356, %366 : vector<8x128xf32>
    %377 = arith.addf %375, %376 : vector<8x128xf32>
    %378 = math.tanh %377 : vector<8x128xf32>
    %379 = arith.mulf %374, %378 : vector<8x128xf32>
    %c0_213 = arith.constant 0 : index
    %c0_214 = arith.constant 0 : index
    %380 = vector.load %arg10[%c0_213, %c0_214] : memref<128x128xf32, #tpu.memory_space<vmem>>, vector<128x128xf32>
    %cst_215 = arith.constant dense<0.000000e+00> : vector<8x128xf32>
    %381 = tpu.matmul %379, %380, %cst_215 {dimension_numbers = #tpu.dot_dimension_numbers<[1], [0], [0], [1], [0, 0, 1, 1], [], []>} : vector<8x128xf32>, vector<128x128xf32>, vector<8x128xf32> -> vector<8x128xf32>
    %c0_216 = arith.constant 0 : index
    %c0_217 = arith.constant 0 : index
    %382 = vector.load %arg11[%c0_216, %c0_217] : memref<1x128xf32, #tpu.memory_space<vmem>>, vector<1x128xf32>
    %383 = vector.broadcast %382 : vector<1x128xf32> to vector<8x128xf32>
    %384 = arith.addf %381, %383 : vector<8x128xf32>
    %c24_218 = arith.constant 24 : index
    %c0_219 = arith.constant 0 : index
    %385 = vector.load %arg12[%c24_218, %c0_219] : memref<64x128xf32, #tpu.memory_space<vmem>>, vector<8x128xf32>
    tpu.vector_store %arg12[%c24_218, %c0_219], %384 {strides = array<i32>} : memref<64x128xf32, #tpu.memory_space<vmem>>, vector<8x128xf32>,
    %c32_220 = arith.constant 32 : index
    %c0_221 = arith.constant 0 : index
    %386 = vector.load %arg15[%c32_220, %c0_221] : memref<64x512xf32, #tpu.memory_space<vmem>>, vector<8x512xf32>
    %c0_222 = arith.constant 0 : index
    %c0_223 = arith.constant 0 : index
    %387 = vector.load %arg9[%c0_222, %c0_223] : memref<128x512xf32, #tpu.memory_space<vmem>>, vector<128x512xf32>
    %cst_224 = arith.constant dense<0.000000e+00> : vector<8x512xf32>
    %388 = tpu.matmul %379, %387, %cst_224 {dimension_numbers = #tpu.dot_dimension_numbers<[1], [0], [0], [1], [0, 0, 1, 1], [], []>} : vector<8x128xf32>, vector<128x512xf32>, vector<8x512xf32> -> vector<8x512xf32>
    %389 = arith.addf %386, %388 : vector<8x512xf32>
    %390 = vector.extract_strided_slice %389 {offsets = [0, 0], sizes = [8, 128], strides = [1, 1]} : vector<8x512xf32> to vector<8x128xf32>
    %cst_225 = arith.constant 5.000000e-01 : f32
    %391 = vector.broadcast %cst_225 : f32 to vector<8x128xf32>
    %392 = arith.mulf %391, %390 : vector<8x128xf32>
    %393 = math.tanh %392 : vector<8x128xf32>
    %cst_226 = arith.constant 5.000000e-01 : f32
    %394 = vector.broadcast %cst_226 : f32 to vector<8x128xf32>
    %395 = arith.mulf %394, %393 : vector<8x128xf32>
    %cst_227 = arith.constant 5.000000e-01 : f32
    %396 = vector.broadcast %cst_227 : f32 to vector<8x128xf32>
    %397 = arith.addf %395, %396 : vector<8x128xf32>
    %398 = vector.extract_strided_slice %389 {offsets = [0, 128], sizes = [8, 128], strides = [1, 1]} : vector<8x512xf32> to vector<8x128xf32>
    %cst_228 = arith.constant 5.000000e-01 : f32
    %399 = vector.broadcast %cst_228 : f32 to vector<8x128xf32>
    %400 = arith.mulf %399, %398 : vector<8x128xf32>
    %401 = math.tanh %400 : vector<8x128xf32>
    %cst_229 = arith.constant 5.000000e-01 : f32
    %402 = vector.broadcast %cst_229 : f32 to vector<8x128xf32>
    %403 = arith.mulf %402, %401 : vector<8x128xf32>
    %cst_230 = arith.constant 5.000000e-01 : f32
    %404 = vector.broadcast %cst_230 : f32 to vector<8x128xf32>
    %405 = arith.addf %403, %404 : vector<8x128xf32>
    %406 = vector.extract_strided_slice %389 {offsets = [0, 256], sizes = [8, 128], strides = [1, 1]} : vector<8x512xf32> to vector<8x128xf32>
    %407 = math.tanh %406 : vector<8x128xf32>
    %408 = vector.extract_strided_slice %389 {offsets = [0, 384], sizes = [8, 128], strides = [1, 1]} : vector<8x512xf32> to vector<8x128xf32>
    %cst_231 = arith.constant 5.000000e-01 : f32
    %409 = vector.broadcast %cst_231 : f32 to vector<8x128xf32>
    %410 = arith.mulf %409, %408 : vector<8x128xf32>
    %411 = math.tanh %410 : vector<8x128xf32>
    %cst_232 = arith.constant 5.000000e-01 : f32
    %412 = vector.broadcast %cst_232 : f32 to vector<8x128xf32>
    %413 = arith.mulf %412, %411 : vector<8x128xf32>
    %cst_233 = arith.constant 5.000000e-01 : f32
    %414 = vector.broadcast %cst_233 : f32 to vector<8x128xf32>
    %415 = arith.addf %413, %414 : vector<8x128xf32>
    %416 = arith.mulf %405, %377 : vector<8x128xf32>
    %417 = arith.mulf %397, %407 : vector<8x128xf32>
    %418 = arith.addf %416, %417 : vector<8x128xf32>
    %419 = math.tanh %418 : vector<8x128xf32>
    %420 = arith.mulf %415, %419 : vector<8x128xf32>
    %c0_234 = arith.constant 0 : index
    %c0_235 = arith.constant 0 : index
    %421 = vector.load %arg10[%c0_234, %c0_235] : memref<128x128xf32, #tpu.memory_space<vmem>>, vector<128x128xf32>
    %cst_236 = arith.constant dense<0.000000e+00> : vector<8x128xf32>
    %422 = tpu.matmul %420, %421, %cst_236 {dimension_numbers = #tpu.dot_dimension_numbers<[1], [0], [0], [1], [0, 0, 1, 1], [], []>} : vector<8x128xf32>, vector<128x128xf32>, vector<8x128xf32> -> vector<8x128xf32>
    %c0_237 = arith.constant 0 : index
    %c0_238 = arith.constant 0 : index
    %423 = vector.load %arg11[%c0_237, %c0_238] : memref<1x128xf32, #tpu.memory_space<vmem>>, vector<1x128xf32>
    %424 = vector.broadcast %423 : vector<1x128xf32> to vector<8x128xf32>
    %425 = arith.addf %422, %424 : vector<8x128xf32>
    %c32_239 = arith.constant 32 : index
    %c0_240 = arith.constant 0 : index
    %426 = vector.load %arg12[%c32_239, %c0_240] : memref<64x128xf32, #tpu.memory_space<vmem>>, vector<8x128xf32>
    tpu.vector_store %arg12[%c32_239, %c0_240], %425 {strides = array<i32>} : memref<64x128xf32, #tpu.memory_space<vmem>>, vector<8x128xf32>,
    %c40_241 = arith.constant 40 : index
    %c0_242 = arith.constant 0 : index
    %427 = vector.load %arg15[%c40_241, %c0_242] : memref<64x512xf32, #tpu.memory_space<vmem>>, vector<8x512xf32>
    %c0_243 = arith.constant 0 : index
    %c0_244 = arith.constant 0 : index
    %428 = vector.load %arg9[%c0_243, %c0_244] : memref<128x512xf32, #tpu.memory_space<vmem>>, vector<128x512xf32>
    %cst_245 = arith.constant dense<0.000000e+00> : vector<8x512xf32>
    %429 = tpu.matmul %420, %428, %cst_245 {dimension_numbers = #tpu.dot_dimension_numbers<[1], [0], [0], [1], [0, 0, 1, 1], [], []>} : vector<8x128xf32>, vector<128x512xf32>, vector<8x512xf32> -> vector<8x512xf32>
    %430 = arith.addf %427, %429 : vector<8x512xf32>
    %431 = vector.extract_strided_slice %430 {offsets = [0, 0], sizes = [8, 128], strides = [1, 1]} : vector<8x512xf32> to vector<8x128xf32>
    %cst_246 = arith.constant 5.000000e-01 : f32
    %432 = vector.broadcast %cst_246 : f32 to vector<8x128xf32>
    %433 = arith.mulf %432, %431 : vector<8x128xf32>
    %434 = math.tanh %433 : vector<8x128xf32>
    %cst_247 = arith.constant 5.000000e-01 : f32
    %435 = vector.broadcast %cst_247 : f32 to vector<8x128xf32>
    %436 = arith.mulf %435, %434 : vector<8x128xf32>
    %cst_248 = arith.constant 5.000000e-01 : f32
    %437 = vector.broadcast %cst_248 : f32 to vector<8x128xf32>
    %438 = arith.addf %436, %437 : vector<8x128xf32>
    %439 = vector.extract_strided_slice %430 {offsets = [0, 128], sizes = [8, 128], strides = [1, 1]} : vector<8x512xf32> to vector<8x128xf32>
    %cst_249 = arith.constant 5.000000e-01 : f32
    %440 = vector.broadcast %cst_249 : f32 to vector<8x128xf32>
    %441 = arith.mulf %440, %439 : vector<8x128xf32>
    %442 = math.tanh %441 : vector<8x128xf32>
    %cst_250 = arith.constant 5.000000e-01 : f32
    %443 = vector.broadcast %cst_250 : f32 to vector<8x128xf32>
    %444 = arith.mulf %443, %442 : vector<8x128xf32>
    %cst_251 = arith.constant 5.000000e-01 : f32
    %445 = vector.broadcast %cst_251 : f32 to vector<8x128xf32>
    %446 = arith.addf %444, %445 : vector<8x128xf32>
    %447 = vector.extract_strided_slice %430 {offsets = [0, 256], sizes = [8, 128], strides = [1, 1]} : vector<8x512xf32> to vector<8x128xf32>
    %448 = math.tanh %447 : vector<8x128xf32>
    %449 = vector.extract_strided_slice %430 {offsets = [0, 384], sizes = [8, 128], strides = [1, 1]} : vector<8x512xf32> to vector<8x128xf32>
    %cst_252 = arith.constant 5.000000e-01 : f32
    %450 = vector.broadcast %cst_252 : f32 to vector<8x128xf32>
    %451 = arith.mulf %450, %449 : vector<8x128xf32>
    %452 = math.tanh %451 : vector<8x128xf32>
    %cst_253 = arith.constant 5.000000e-01 : f32
    %453 = vector.broadcast %cst_253 : f32 to vector<8x128xf32>
    %454 = arith.mulf %453, %452 : vector<8x128xf32>
    %cst_254 = arith.constant 5.000000e-01 : f32
    %455 = vector.broadcast %cst_254 : f32 to vector<8x128xf32>
    %456 = arith.addf %454, %455 : vector<8x128xf32>
    %457 = arith.mulf %446, %418 : vector<8x128xf32>
    %458 = arith.mulf %438, %448 : vector<8x128xf32>
    %459 = arith.addf %457, %458 : vector<8x128xf32>
    %460 = math.tanh %459 : vector<8x128xf32>
    %461 = arith.mulf %456, %460 : vector<8x128xf32>
    %c0_255 = arith.constant 0 : index
    %c0_256 = arith.constant 0 : index
    %462 = vector.load %arg10[%c0_255, %c0_256] : memref<128x128xf32, #tpu.memory_space<vmem>>, vector<128x128xf32>
    %cst_257 = arith.constant dense<0.000000e+00> : vector<8x128xf32>
    %463 = tpu.matmul %461, %462, %cst_257 {dimension_numbers = #tpu.dot_dimension_numbers<[1], [0], [0], [1], [0, 0, 1, 1], [], []>} : vector<8x128xf32>, vector<128x128xf32>, vector<8x128xf32> -> vector<8x128xf32>
    %c0_258 = arith.constant 0 : index
    %c0_259 = arith.constant 0 : index
    %464 = vector.load %arg11[%c0_258, %c0_259] : memref<1x128xf32, #tpu.memory_space<vmem>>, vector<1x128xf32>
    %465 = vector.broadcast %464 : vector<1x128xf32> to vector<8x128xf32>
    %466 = arith.addf %463, %465 : vector<8x128xf32>
    %c40_260 = arith.constant 40 : index
    %c0_261 = arith.constant 0 : index
    %467 = vector.load %arg12[%c40_260, %c0_261] : memref<64x128xf32, #tpu.memory_space<vmem>>, vector<8x128xf32>
    tpu.vector_store %arg12[%c40_260, %c0_261], %466 {strides = array<i32>} : memref<64x128xf32, #tpu.memory_space<vmem>>, vector<8x128xf32>,
    %c48_262 = arith.constant 48 : index
    %c0_263 = arith.constant 0 : index
    %468 = vector.load %arg15[%c48_262, %c0_263] : memref<64x512xf32, #tpu.memory_space<vmem>>, vector<8x512xf32>
    %c0_264 = arith.constant 0 : index
    %c0_265 = arith.constant 0 : index
    %469 = vector.load %arg9[%c0_264, %c0_265] : memref<128x512xf32, #tpu.memory_space<vmem>>, vector<128x512xf32>
    %cst_266 = arith.constant dense<0.000000e+00> : vector<8x512xf32>
    %470 = tpu.matmul %461, %469, %cst_266 {dimension_numbers = #tpu.dot_dimension_numbers<[1], [0], [0], [1], [0, 0, 1, 1], [], []>} : vector<8x128xf32>, vector<128x512xf32>, vector<8x512xf32> -> vector<8x512xf32>
    %471 = arith.addf %468, %470 : vector<8x512xf32>
    %472 = vector.extract_strided_slice %471 {offsets = [0, 0], sizes = [8, 128], strides = [1, 1]} : vector<8x512xf32> to vector<8x128xf32>
    %cst_267 = arith.constant 5.000000e-01 : f32
    %473 = vector.broadcast %cst_267 : f32 to vector<8x128xf32>
    %474 = arith.mulf %473, %472 : vector<8x128xf32>
    %475 = math.tanh %474 : vector<8x128xf32>
    %cst_268 = arith.constant 5.000000e-01 : f32
    %476 = vector.broadcast %cst_268 : f32 to vector<8x128xf32>
    %477 = arith.mulf %476, %475 : vector<8x128xf32>
    %cst_269 = arith.constant 5.000000e-01 : f32
    %478 = vector.broadcast %cst_269 : f32 to vector<8x128xf32>
    %479 = arith.addf %477, %478 : vector<8x128xf32>
    %480 = vector.extract_strided_slice %471 {offsets = [0, 128], sizes = [8, 128], strides = [1, 1]} : vector<8x512xf32> to vector<8x128xf32>
    %cst_270 = arith.constant 5.000000e-01 : f32
    %481 = vector.broadcast %cst_270 : f32 to vector<8x128xf32>
    %482 = arith.mulf %481, %480 : vector<8x128xf32>
    %483 = math.tanh %482 : vector<8x128xf32>
    %cst_271 = arith.constant 5.000000e-01 : f32
    %484 = vector.broadcast %cst_271 : f32 to vector<8x128xf32>
    %485 = arith.mulf %484, %483 : vector<8x128xf32>
    %cst_272 = arith.constant 5.000000e-01 : f32
    %486 = vector.broadcast %cst_272 : f32 to vector<8x128xf32>
    %487 = arith.addf %485, %486 : vector<8x128xf32>
    %488 = vector.extract_strided_slice %471 {offsets = [0, 256], sizes = [8, 128], strides = [1, 1]} : vector<8x512xf32> to vector<8x128xf32>
    %489 = math.tanh %488 : vector<8x128xf32>
    %490 = vector.extract_strided_slice %471 {offsets = [0, 384], sizes = [8, 128], strides = [1, 1]} : vector<8x512xf32> to vector<8x128xf32>
    %cst_273 = arith.constant 5.000000e-01 : f32
    %491 = vector.broadcast %cst_273 : f32 to vector<8x128xf32>
    %492 = arith.mulf %491, %490 : vector<8x128xf32>
    %493 = math.tanh %492 : vector<8x128xf32>
    %cst_274 = arith.constant 5.000000e-01 : f32
    %494 = vector.broadcast %cst_274 : f32 to vector<8x128xf32>
    %495 = arith.mulf %494, %493 : vector<8x128xf32>
    %cst_275 = arith.constant 5.000000e-01 : f32
    %496 = vector.broadcast %cst_275 : f32 to vector<8x128xf32>
    %497 = arith.addf %495, %496 : vector<8x128xf32>
    %498 = arith.mulf %487, %459 : vector<8x128xf32>
    %499 = arith.mulf %479, %489 : vector<8x128xf32>
    %500 = arith.addf %498, %499 : vector<8x128xf32>
    %501 = math.tanh %500 : vector<8x128xf32>
    %502 = arith.mulf %497, %501 : vector<8x128xf32>
    %c0_276 = arith.constant 0 : index
    %c0_277 = arith.constant 0 : index
    %503 = vector.load %arg10[%c0_276, %c0_277] : memref<128x128xf32, #tpu.memory_space<vmem>>, vector<128x128xf32>
    %cst_278 = arith.constant dense<0.000000e+00> : vector<8x128xf32>
    %504 = tpu.matmul %502, %503, %cst_278 {dimension_numbers = #tpu.dot_dimension_numbers<[1], [0], [0], [1], [0, 0, 1, 1], [], []>} : vector<8x128xf32>, vector<128x128xf32>, vector<8x128xf32> -> vector<8x128xf32>
    %c0_279 = arith.constant 0 : index
    %c0_280 = arith.constant 0 : index
    %505 = vector.load %arg11[%c0_279, %c0_280] : memref<1x128xf32, #tpu.memory_space<vmem>>, vector<1x128xf32>
    %506 = vector.broadcast %505 : vector<1x128xf32> to vector<8x128xf32>
    %507 = arith.addf %504, %506 : vector<8x128xf32>
    %c48_281 = arith.constant 48 : index
    %c0_282 = arith.constant 0 : index
    %508 = vector.load %arg12[%c48_281, %c0_282] : memref<64x128xf32, #tpu.memory_space<vmem>>, vector<8x128xf32>
    tpu.vector_store %arg12[%c48_281, %c0_282], %507 {strides = array<i32>} : memref<64x128xf32, #tpu.memory_space<vmem>>, vector<8x128xf32>,
    %c56_283 = arith.constant 56 : index
    %c0_284 = arith.constant 0 : index
    %509 = vector.load %arg15[%c56_283, %c0_284] : memref<64x512xf32, #tpu.memory_space<vmem>>, vector<8x512xf32>
    %c0_285 = arith.constant 0 : index
    %c0_286 = arith.constant 0 : index
    %510 = vector.load %arg9[%c0_285, %c0_286] : memref<128x512xf32, #tpu.memory_space<vmem>>, vector<128x512xf32>
    %cst_287 = arith.constant dense<0.000000e+00> : vector<8x512xf32>
    %511 = tpu.matmul %502, %510, %cst_287 {dimension_numbers = #tpu.dot_dimension_numbers<[1], [0], [0], [1], [0, 0, 1, 1], [], []>} : vector<8x128xf32>, vector<128x512xf32>, vector<8x512xf32> -> vector<8x512xf32>
    %512 = arith.addf %509, %511 : vector<8x512xf32>
    %513 = vector.extract_strided_slice %512 {offsets = [0, 0], sizes = [8, 128], strides = [1, 1]} : vector<8x512xf32> to vector<8x128xf32>
    %cst_288 = arith.constant 5.000000e-01 : f32
    %514 = vector.broadcast %cst_288 : f32 to vector<8x128xf32>
    %515 = arith.mulf %514, %513 : vector<8x128xf32>
    %516 = math.tanh %515 : vector<8x128xf32>
    %cst_289 = arith.constant 5.000000e-01 : f32
    %517 = vector.broadcast %cst_289 : f32 to vector<8x128xf32>
    %518 = arith.mulf %517, %516 : vector<8x128xf32>
    %cst_290 = arith.constant 5.000000e-01 : f32
    %519 = vector.broadcast %cst_290 : f32 to vector<8x128xf32>
    %520 = arith.addf %518, %519 : vector<8x128xf32>
    %521 = vector.extract_strided_slice %512 {offsets = [0, 128], sizes = [8, 128], strides = [1, 1]} : vector<8x512xf32> to vector<8x128xf32>
    %cst_291 = arith.constant 5.000000e-01 : f32
    %522 = vector.broadcast %cst_291 : f32 to vector<8x128xf32>
    %523 = arith.mulf %522, %521 : vector<8x128xf32>
    %524 = math.tanh %523 : vector<8x128xf32>
    %cst_292 = arith.constant 5.000000e-01 : f32
    %525 = vector.broadcast %cst_292 : f32 to vector<8x128xf32>
    %526 = arith.mulf %525, %524 : vector<8x128xf32>
    %cst_293 = arith.constant 5.000000e-01 : f32
    %527 = vector.broadcast %cst_293 : f32 to vector<8x128xf32>
    %528 = arith.addf %526, %527 : vector<8x128xf32>
    %529 = vector.extract_strided_slice %512 {offsets = [0, 256], sizes = [8, 128], strides = [1, 1]} : vector<8x512xf32> to vector<8x128xf32>
    %530 = math.tanh %529 : vector<8x128xf32>
    %531 = vector.extract_strided_slice %512 {offsets = [0, 384], sizes = [8, 128], strides = [1, 1]} : vector<8x512xf32> to vector<8x128xf32>
    %cst_294 = arith.constant 5.000000e-01 : f32
    %532 = vector.broadcast %cst_294 : f32 to vector<8x128xf32>
    %533 = arith.mulf %532, %531 : vector<8x128xf32>
    %534 = math.tanh %533 : vector<8x128xf32>
    %cst_295 = arith.constant 5.000000e-01 : f32
    %535 = vector.broadcast %cst_295 : f32 to vector<8x128xf32>
    %536 = arith.mulf %535, %534 : vector<8x128xf32>
    %cst_296 = arith.constant 5.000000e-01 : f32
    %537 = vector.broadcast %cst_296 : f32 to vector<8x128xf32>
    %538 = arith.addf %536, %537 : vector<8x128xf32>
    %539 = arith.mulf %528, %500 : vector<8x128xf32>
    %540 = arith.mulf %520, %530 : vector<8x128xf32>
    %541 = arith.addf %539, %540 : vector<8x128xf32>
    %542 = math.tanh %541 : vector<8x128xf32>
    %543 = arith.mulf %538, %542 : vector<8x128xf32>
    %c0_297 = arith.constant 0 : index
    %c0_298 = arith.constant 0 : index
    %544 = vector.load %arg10[%c0_297, %c0_298] : memref<128x128xf32, #tpu.memory_space<vmem>>, vector<128x128xf32>
    %cst_299 = arith.constant dense<0.000000e+00> : vector<8x128xf32>
    %545 = tpu.matmul %543, %544, %cst_299 {dimension_numbers = #tpu.dot_dimension_numbers<[1], [0], [0], [1], [0, 0, 1, 1], [], []>} : vector<8x128xf32>, vector<128x128xf32>, vector<8x128xf32> -> vector<8x128xf32>
    %c0_300 = arith.constant 0 : index
    %c0_301 = arith.constant 0 : index
    %546 = vector.load %arg11[%c0_300, %c0_301] : memref<1x128xf32, #tpu.memory_space<vmem>>, vector<1x128xf32>
    %547 = vector.broadcast %546 : vector<1x128xf32> to vector<8x128xf32>
    %548 = arith.addf %545, %547 : vector<8x128xf32>
    %c56_302 = arith.constant 56 : index
    %c0_303 = arith.constant 0 : index
    %549 = vector.load %arg12[%c56_302, %c0_303] : memref<64x128xf32, #tpu.memory_space<vmem>>, vector<8x128xf32>
    tpu.vector_store %arg12[%c56_302, %c0_303], %548 {strides = array<i32>} : memref<64x128xf32, #tpu.memory_space<vmem>>, vector<8x128xf32>,
    return
  }
  func.func @transform_0(%arg0: i32, %arg1: memref<2x8xi32, #tpu.memory_space<smem>>) -> (i32, i32) {
    %c0_i32 = arith.constant 0 : i32
    %c0_i32_0 = arith.constant 0 : i32
    %c0_i32_1 = arith.constant 0 : i32
    return %c0_i32, %c0_i32_0 : i32, i32
  }
  func.func @transform_1(%arg0: i32, %arg1: memref<2x8xi32, #tpu.memory_space<smem>>) -> (i32, i32) {
    %c0_i32 = arith.constant 0 : i32
    %c0_i32_0 = arith.constant 0 : i32
    %c0_i32_1 = arith.constant 0 : i32
    return %c0_i32, %c0_i32_0 : i32, i32
  }
  func.func @transform_2(%arg0: i32, %arg1: memref<2x8xi32, #tpu.memory_space<smem>>) -> (i32, i32) {
    %c0_i32 = arith.constant 0 : i32
    %c0_i32_0 = arith.constant 0 : i32
    %c0_i32_1 = arith.constant 0 : i32
    return %c0_i32, %c0_i32_0 : i32, i32
  }
  func.func @transform_3(%arg0: i32, %arg1: memref<2x8xi32, #tpu.memory_space<smem>>) -> (i32, i32) {
    %c0_i32 = arith.constant 0 : i32
    %c0_i32_0 = arith.constant 0 : i32
    %c0_i32_1 = arith.constant 0 : i32
    return %c0_i32, %c0_i32_0 : i32, i32
  }
  func.func @transform_4(%arg0: i32, %arg1: memref<2x8xi32, #tpu.memory_space<smem>>) -> (i32, i32) {
    %c0_i32 = arith.constant 0 : i32
    %c0_i32_0 = arith.constant 0 : i32
    %c0_i32_1 = arith.constant 0 : i32
    return %c0_i32, %c0_i32_0 : i32, i32
  }
  func.func @transform_5(%arg0: i32, %arg1: memref<2x8xi32, #tpu.memory_space<smem>>) -> (i32, i32) {
    %c0_i32 = arith.constant 0 : i32
    %c0_i32_0 = arith.constant 0 : i32
    %c0_i32_1 = arith.constant 0 : i32
    return %c0_i32, %c0_i32_0 : i32, i32
  }
  func.func @transform_6(%arg0: i32, %arg1: memref<2x8xi32, #tpu.memory_space<smem>>) -> (i32, i32) {
    %c0_i32 = arith.constant 0 : i32
    %c0_i32_0 = arith.constant 0 : i32
    %c0_i32_1 = arith.constant 0 : i32
    return %c0_i32, %c0_i32_0 : i32, i32
  }
  func.func @transform_7(%arg0: i32, %arg1: memref<2x8xi32, #tpu.memory_space<smem>>) -> (i32, i32) {
    %c0_i32 = arith.constant 0 : i32
    %c0_i32_0 = arith.constant 0 : i32
    %c0_i32_1 = arith.constant 0 : i32
    return %c0_i32, %c0_i32_0 : i32, i32
  }
  func.func @transform_8(%arg0: i32, %arg1: memref<2x8xi32, #tpu.memory_space<smem>>) -> (i32, i32) {
    %c0_i32 = arith.constant 0 : i32
    %c0_i32_0 = arith.constant 0 : i32
    %c0_i32_1 = arith.constant 0 : i32
    return %c0_i32, %c0_i32_0 : i32, i32
  }
  func.func @transform_9(%arg0: i32, %arg1: memref<2x8xi32, #tpu.memory_space<smem>>) -> (i32, i32) {
    %c0_i32 = arith.constant 0 : i32
    %c0_i32_0 = arith.constant 0 : i32
    %c0_i32_1 = arith.constant 0 : i32
    return %c0_i32, %c0_i32_0 : i32, i32
  }
  func.func @transform_10(%arg0: i32, %arg1: memref<2x8xi32, #tpu.memory_space<smem>>) -> (i32, i32) {
    %c0_i32 = arith.constant 0 : i32
    %c0_i32_0 = arith.constant 0 : i32
    %c0_i32_1 = arith.constant 0 : i32
    return %c0_i32, %c0_i32_0 : i32, i32
  }
}

</mosaic_0001>

<llo_original>
// kernel: lstm_model_forward.3
$region0: #{lstm_model_forward.3}
  #allocation0 [shape = 'u32[]', space=smem, size = 0x4, offset = 0x4, fixed_abs, tag = 'smem constant byte address 0x4 - core index']
  #allocation1 [shape = 'u32[72,128]{1,0:T(1,128)}', space=vmem, size = 0x9000, scoped, tag = 'internal scratch']
  %s0 = inlined_call_operand.vmem [shape: f32[8,16], index: 0, kind: input, shape index: {}]
  %s1 = inlined_call_operand.vmem [shape: f32[16,512], index: 1, kind: input, shape index: {}]
  %s2 = inlined_call_operand.vmem [shape: f32[8,1], index: 2, kind: input, shape index: {}]
  %s3 = inlined_call_operand.vmem [shape: f32[8,512], index: 3, kind: output, shape index: {}]
  %s4 = sld [smem:[#allocation0]]
  $region68: #{lstm_model_forward.3} parent=0
    _
  %s6 = ssub.s32 1, %s4
  %s7 = scalar_select 0, %s6, %s4
  $region1: #{lstm_model_forward.3} parent=0
    #allocation2 [shape = 'u8[32768]{0}', space=vmem, size = 0x8000, scoped, tag = 'input window, operand 1']
    loop: start=0, step=1, limit=4
    $region2: #{lstm_model_forward.3} parent=1 // loop_pre_header
      _
    $region3: #{lstm_model_forward.3} parent=1 // loop_header
      %s9 = sphi 0, %s13
      %p10 = scmp.ge.s32.totalorder %s9, 4
      %s17 = sphi 0, %s17
      %s19 = sphi 0, %s17
      %s20 = sphi 0, %s19
      %s34 = sphi 0, %s20
      %s40 = sphi 0, %s42
      %s43 = sphi 0, %s40
      %s44 = sphi 0, %s43
      %s60 = sphi 0, %s44
      %s64 = sphi 0, %s64
      %s66 = sphi 0, %s64
      %s67 = sphi 0, %s66
      %s81 = sphi 0, %s67
      %s87 = sphi 0, %s89
      %s90 = sphi 0, %s87
      %s91 = sphi 0, %s90
      %s107 = sphi 0, %s91
    $region4: #{lstm_model_forward.3} parent=1 // loop_header_branch
      %12 = sbr.rel (%p10) target = $region8
    $region5: #{lstm_model_forward.3} parent=1 // loop_body
      %s14 = ssub.s32 %s9, 1
      %s15 = ssub.s32 %s9, 2
      %s16 = sadd.s32 %s9, 1
      %s18 = sadd.s32 %s17, 1
      %p21 = scmp.eq.s32.totalorder %s9, 1
      %p22 = scmp.ne.s32.totalorder %s17, %s19
      %p23 = scmp.eq.s32.totalorder %s9, 0
      %p24 = por %p22, %p23
      %p25 = scmp.ne.s32.totalorder %s17, %s19
      %p26 = scmp.eq.s32.totalorder %s14, 1
      %p27 = por %p25, %p26
      %p28 = scmp.ne.s32.totalorder %s19, %s20
      %p29 = scmp.eq.s32.totalorder %s14, 0
      %p30 = por %p28, %p29
      %p31 = scmp.ne.s32.totalorder %s19, %s20
      %p32 = scmp.eq.s32.totalorder %s15, 1
      %p33 = por %p31, %p32
      %p35 = scmp.ne.s32.totalorder %s20, %s34
      %p36 = scmp.eq.s32.totalorder %s15, 0
      %p37 = por %p35, %p36
      %s38 = ssub.s32 %s9, %s16
      %p39 = scmp.eq.s32.totalorder %s38, 0
      %s41 = sadd.s32 %s40, 1
      %s42 = scalar_select %p39, %s40, %s41
      %p45 = pneg %p39
      %p46 = scmp.eq.s32.totalorder %s9, 1
      %p47 = por %p45, %p46
      %p48 = scmp.ne.s32.totalorder %s40, %s43
      %p49 = scmp.eq.s32.totalorder %s9, 0
      %p50 = por %p48, %p49
      %p51 = scmp.ne.s32.totalorder %s40, %s43
      %p52 = scmp.eq.s32.totalorder %s14, 1
      %p53 = por %p51, %p52
      %p54 = scmp.ne.s32.totalorder %s43, %s44
      %p55 = scmp.eq.s32.totalorder %s14, 0
      %p56 = por %p54, %p55
      %p57 = scmp.ne.s32.totalorder %s43, %s44
      %p58 = scmp.eq.s32.totalorder %s15, 1
      %p59 = por %p57, %p58
      %p61 = scmp.ne.s32.totalorder %s44, %s60
      %p62 = scmp.eq.s32.totalorder %s15, 0
      %p63 = por %p61, %p62
      %s65 = sadd.s32 %s64, 1
      %p68 = scmp.eq.s32.totalorder %s9, 1
      %p69 = scmp.ne.s32.totalorder %s64, %s66
      %p70 = scmp.eq.s32.totalorder %s9, 0
      %p71 = por %p69, %p70
      %p72 = scmp.ne.s32.totalorder %s64, %s66
      %p73 = scmp.eq.s32.totalorder %s14, 1
      %p74 = por %p72, %p73
      %p75 = scmp.ne.s32.totalorder %s66, %s67
      %p76 = scmp.eq.s32.totalorder %s14, 0
      %p77 = por %p75, %p76
      %p78 = scmp.ne.s32.totalorder %s66, %s67
      %p79 = scmp.eq.s32.totalorder %s15, 1
      %p80 = por %p78, %p79
      %p82 = scmp.ne.s32.totalorder %s67, %s81
      %p83 = scmp.eq.s32.totalorder %s15, 0
      %p84 = por %p82, %p83
      %s85 = ssub.s32 %s9, %s16
      %p86 = scmp.eq.s32.totalorder %s85, 0
      %s88 = sadd.s32 %s87, 1
      %s89 = scalar_select %p86, %s87, %s88
      %p92 = pneg %p86
      %p93 = scmp.eq.s32.totalorder %s9, 1
      %p94 = por %p92, %p93
      %p95 = scmp.ne.s32.totalorder %s87, %s90
      %p96 = scmp.eq.s32.totalorder %s9, 0
      %p97 = por %p95, %p96
      %p98 = scmp.ne.s32.totalorder %s87, %s90
      %p99 = scmp.eq.s32.totalorder %s14, 1
      %p100 = por %p98, %p99
      %p101 = scmp.ne.s32.totalorder %s90, %s91
      %p102 = scmp.eq.s32.totalorder %s14, 0
      %p103 = por %p101, %p102
      %p104 = scmp.ne.s32.totalorder %s90, %s91
      %p105 = scmp.eq.s32.totalorder %s15, 1
      %p106 = por %p104, %p105
      %p108 = scmp.ne.s32.totalorder %s91, %s107
      %p109 = scmp.eq.s32.totalorder %s15, 0
      %p110 = por %p108, %p109
      %p111 = scmp.le.s32.totalorder 1, %s9
      %p112 = scmp.lt.s32.totalorder %s9, 3
      %p113 = pnand %p111, %p112
      %p114 = pneg %p113
      // Predicated region
      $region9: #{lstm_model_forward.3} parent=5 // pred_check
        _
      $region10: #{lstm_model_forward.3} parent=5 // pred_check_branch
        %116 = sbr.rel (%p113) target = $region12
      $region11: #{lstm_model_forward.3} parent=5 // pred_region
        %s117 = ssub.s32 %s9, 1
        // Predicated region
        $region13: #{lstm_model_forward.3} parent=11 // pred_check
          %p118 = pneg %p30
        $region14: #{lstm_model_forward.3} parent=11 // pred_check_branch
          %120 = sbr.rel (%p118) target = $region16
        $region15: #{lstm_model_forward.3} parent=11 // pred_region
          _
        $region16: #{lstm_model_forward.3} parent=11 // pred_fallthru
          _
        // Predicated region
        $region17: #{lstm_model_forward.3} parent=11 // pred_check
          %p121 = pneg %p77
        $region18: #{lstm_model_forward.3} parent=11 // pred_check_branch
          %123 = sbr.rel (%p121) target = $region20
        $region19: #{lstm_model_forward.3} parent=11 // pred_region
          _
        $region20: #{lstm_model_forward.3} parent=11 // pred_fallthru
          _
      $region12: #{lstm_model_forward.3} parent=5 // pred_fallthru
        _
      %p124 = scmp.lt.s32.totalorder %s9, 2
      // Predicated region
      $region21: #{lstm_model_forward.3} parent=5 // pred_check
        %p125 = pneg %p124
      $region22: #{lstm_model_forward.3} parent=5 // pred_check_branch
        %127 = sbr.rel (%p125) target = $region24
      $region23: #{lstm_model_forward.3} parent=5 // pred_region
        // Predicated region
        $region25: #{lstm_model_forward.3} parent=23 // pred_check
          %p128 = pneg %p50
        $region26: #{lstm_model_forward.3} parent=23 // pred_check_branch
          %130 = sbr.rel (%p128) target = $region28
        $region27: #{lstm_model_forward.3} parent=23 // pred_region
          %s131 = sand.u32 %s40, 1
          %s132 = sand.u32 %s40, 1
          %s133 = smul.addr %s132, 32
          %s134 = scalar_lea.vmem [#allocation2], %s133
          %s135 = smul.u32 2, %s9
          %s136 = smul.addr %s135, 8
          %s137 = scalar_lea.vmem %s1, %s136
          // Predicated region
          $region29: #{lstm_model_forward.3} parent=27 // pred_check
            _
          $region30: #{lstm_model_forward.3} parent=27 // pred_check_branch
            %139 = sbr.rel (0) target = $region32
          $region31: #{lstm_model_forward.3} parent=27 // pred_region
            // Predicated region
            $region33: #{lstm_model_forward.3} parent=31 // pred_check
              _
            $region34: #{lstm_model_forward.3} parent=31 // pred_check_branch
              %141 = sbr.rel (0) target = $region36
            $region35: #{lstm_model_forward.3} parent=31 // pred_region
              loop: start=0, step=1, limit=1
              $region37: #{lstm_model_forward.3} parent=35 // loop_pre_header
                _
              $region38: #{lstm_model_forward.3} parent=35 // loop_header
                %s143 = sphi 0, %s147
                %p144 = scmp.ge.s32.totalorder %s143, 1
                %s148 = sphi %s137, %s137
                %s149 = sphi %s134, %s134
              $region39: #{lstm_model_forward.3} parent=35 // loop_header_branch
                %146 = sbr.rel (%p144) target = $region43
              $region40: #{lstm_model_forward.3} parent=35 // loop_body
                %v150 = vld [vmem:[%s148] sm:$0xff]
                %151 = vst [vmem:[%s149] sm:$0xff] %v150
                %v152 = vld [vmem:[%s148 + $0x8] sm:$0xff]
                %153 = vst [vmem:[%s149 + $0x8] sm:$0xff] %v152
                %v154 = vld [vmem:[%s148 + $0x20] sm:$0xff]
                %155 = vst [vmem:[%s149 + $0x10] sm:$0xff] %v154
                %v156 = vld [vmem:[%s148 + $0x28] sm:$0xff]
                %157 = vst [vmem:[%s149 + $0x18] sm:$0xff] %v156
              $region41: #{lstm_model_forward.3} parent=35 // loop_footer
                %s147 = sadd.s32 1, %s143
              $region42: #{lstm_model_forward.3} parent=35 // loop_footer_branch
                %142 = sbr.rel target = $region38
              $region43: #{lstm_model_forward.3} parent=35 // loop_exit
                _
            $region36: #{lstm_model_forward.3} parent=31 // pred_fallthru
              _
            // Predicated region
            $region44: #{lstm_model_forward.3} parent=31 // pred_check
              _
            $region45: #{lstm_model_forward.3} parent=31 // pred_check_branch
              %159 = sbr.rel target = $region47
            $region46: #{lstm_model_forward.3} parent=31 // pred_region
              _
            $region47: #{lstm_model_forward.3} parent=31 // pred_fallthru
              _
          $region32: #{lstm_model_forward.3} parent=27 // pred_fallthru
            _
          %160 = vnop
        $region28: #{lstm_model_forward.3} parent=23 // pred_fallthru
          _
      $region24: #{lstm_model_forward.3} parent=5 // pred_fallthru
        _
      %p161 = scmp.le.s32.totalorder 1, %s9
      %p162 = scmp.lt.s32.totalorder %s9, 3
      %p163 = pnand %p161, %p162
      %p164 = pneg %p163
      // Predicated region
      $region48: #{lstm_model_forward.3} parent=5 // pred_check
        _
      $region49: #{lstm_model_forward.3} parent=5 // pred_check_branch
        %166 = sbr.rel (%p163) target = $region51
      $region50: #{lstm_model_forward.3} parent=5 // pred_region
        %s167 = ssub.s32 %s9, 1
        %s168 = sand.u32 %s43, 1
        %s169 = sand.u32 %s43, 1
        %s170 = smul.addr %s169, 32
        %s171 = scalar_lea.vmem [#allocation2], %s170
        // Predicated region
        $region52: #{lstm_model_forward.3} parent=50 // pred_check
          %p172 = pneg %p56
        $region53: #{lstm_model_forward.3} parent=50 // pred_check_branch
          %174 = sbr.rel (%p172) target = $region55
        $region54: #{lstm_model_forward.3} parent=50 // pred_region
          _
        $region55: #{lstm_model_forward.3} parent=50 // pred_fallthru
          _
        %p175 = pneg %p30
        %p176 = pneg %p27
        %s177 = sand.u32 %s43, 1
        %s178 = sand.u32 %s43, 1
        %s179 = smul.addr %s178, 32
        %s180 = scalar_lea.vmem [#allocation2], %s179
        %p181 = pneg %p56
        %p182 = pneg %p53
        %p183 = pneg %p77
        %p184 = pneg %p74
        %p185 = pneg %p103
        %p186 = pneg %p100
        %s187 = smul.u32 2, %s14
        %p188 = scmp.lt.s32.totalorder %s187, 3
        %s189 = scalar_select %p188, %s187, 3
        %s190 = smul.addr %s189, 8
        %s191 = scalar_lea.vmem %s3, %s190
        %s192 = smul.u32 2, %s14
        %s193 = smul.u32 2, %s14
        %p194 = scmp.lt.s32.totalorder %s193, 3
        %s195 = scalar_select %p194, %s193, 3
        %s196 = smul.addr %s195, 8
        %s197 = scalar_lea.vmem %s3, %s196
        %s198 = smul.u32 2, %s14
        %v199 = vld [vmem:[%s0] sm:$0xff]
        %v200 = vld [vmem:[%s171] sm:$0xff]
        %v201 = vld [vmem:[%s171 + $0x8] sm:$0xff]
        %v202 = vld [vmem:[%s171 + $0x10] sm:$0xff]
        %v203 = vld [vmem:[%s171 + $0x18] sm:$0xff]
        %v204 = vld [vmem:[%s2] sm:$0xff]
        %206 = vset.pattern.permute.xlu0 0
        %207 = vperm.xlu0 %206, %v204
        %v208 = vpop.permute.xlu0 %207
        %vm210 = vcmask 130048
        %v212 = vsel %vm210, %v199, 0
        %214 = vmatpush.msra.mxu0 0.0
        %215 = vmatpush.msra.mxu0 0.0
        %216 = vmatpush.msra.mxu0 0.0
        %217 = vmatpush.msra.mxu0 0.0
        %218 = vmatpush.msra.mxu0 0.0
        %219 = vmatpush.msra.mxu0 0.0
        %220 = vmatpush.msra.mxu0 0.0
        %221 = vmatpush.msra.mxu0 0.0
        %222 = vmatpush.msra.mxu0 0.0
        %223 = vmatpush.msra.mxu0 0.0
        %224 = vmatpush.msra.mxu0 0.0
        %225 = vmatpush.msra.mxu0 0.0
        %226 = vmatpush.msra.mxu0 0.0
        %227 = vmatpush.msra.mxu0 0.0
        %228 = vmatpush.msra.mxu0 %v202
        %229 = vmatpush.msra.mxu0 %v200
        %230 = vmatmul.f32.gmra.mxu0 %v212
        %v231 = vpop.f32.mrf.mxu0
        %v232 = vadd.f32 %v208, %v231
        %233 = vdwg.mxu0
        %234 = vmatpush.msra.mxu0 0.0
        %235 = vmatpush.msra.mxu0 0.0
        %236 = vmatpush.msra.mxu0 0.0
        %237 = vmatpush.msra.mxu0 0.0
        %238 = vmatpush.msra.mxu0 0.0
        %239 = vmatpush.msra.mxu0 0.0
        %240 = vmatpush.msra.mxu0 0.0
        %241 = vmatpush.msra.mxu0 0.0
        %242 = vmatpush.msra.mxu0 0.0
        %243 = vmatpush.msra.mxu0 0.0
        %244 = vmatpush.msra.mxu0 0.0
        %245 = vmatpush.msra.mxu0 0.0
        %246 = vmatpush.msra.mxu0 0.0
        %247 = vmatpush.msra.mxu0 0.0
        %248 = vmatpush.msra.mxu0 %v203
        %249 = vmatpush.msra.mxu0 %v201
        %250 = vmatmul.f32.gmra.mxu0 %v212
        %v251 = vpop.f32.mrf.mxu0
        %v252 = vadd.f32 %v208, %v251
        %253 = vdwg.mxu0
        %v254 = vmax.f32 %v232, 0.0
        %v255 = vmax.f32 %v252, 0.0
        %256 = vst [vmem:[%s197] sm:$0xff] %v254
        %257 = vst [vmem:[%s197 + $0x8] sm:$0xff] %v255
        %s258 = smul.u32 2, %s14
        %p259 = scmp.lt.s32.totalorder %s258, 3
        %s260 = scalar_select %p259, %s258, 3
        %s261 = smul.addr %s260, 8
        %s262 = scalar_lea.vmem %s3, %s261
        // Predicated region
        $region56: #{lstm_model_forward.3} parent=50 // pred_check
          %p263 = pneg %p100
        $region57: #{lstm_model_forward.3} parent=50 // pred_check_branch
          %265 = sbr.rel (%p263) target = $region59
        $region58: #{lstm_model_forward.3} parent=50 // pred_region
          %s266 = smul.u32 2, %s14
        $region59: #{lstm_model_forward.3} parent=50 // pred_fallthru
          _
      $region51: #{lstm_model_forward.3} parent=5 // pred_fallthru
        _
      %p267 = scmp.le.s32.totalorder 2, %s9
      // Predicated region
      $region60: #{lstm_model_forward.3} parent=5 // pred_check
        %p268 = pneg %p267
      $region61: #{lstm_model_forward.3} parent=5 // pred_check_branch
        %270 = sbr.rel (%p268) target = $region63
      $region62: #{lstm_model_forward.3} parent=5 // pred_region
        %s271 = ssub.s32 %s9, 2
        // Predicated region
        $region64: #{lstm_model_forward.3} parent=62 // pred_check
          %p272 = pneg %p106
        $region65: #{lstm_model_forward.3} parent=62 // pred_check_branch
          %274 = sbr.rel (%p272) target = $region67
        $region66: #{lstm_model_forward.3} parent=62 // pred_region
          %s275 = smul.u32 2, %s15
          %p276 = scmp.lt.s32.totalorder %s275, 3
          %s277 = scalar_select %p276, %s275, 3
          %s278 = smul.addr %s277, 8
          %s279 = scalar_lea.vmem %s3, %s278
        $region67: #{lstm_model_forward.3} parent=62 // pred_fallthru
          _
      $region63: #{lstm_model_forward.3} parent=5 // pred_fallthru
        _
    $region6: #{lstm_model_forward.3} parent=1 // loop_footer
      %s13 = sadd.s32 1, %s9
    $region7: #{lstm_model_forward.3} parent=1 // loop_footer_branch
      %8 = sbr.rel target = $region3
    $region8: #{lstm_model_forward.3} parent=1 // loop_exit
      _

// kernel: lstm_model_forward.4
$region0: #{lstm_model_forward.4}
  #allocation0 [shape = 'u32[]', space=smem, size = 0x4, offset = 0x4, fixed_abs, tag = 'smem constant byte address 0x4 - core index']
  #allocation1 [shape = 'u32[72,128]{1,0:T(1,128)}', space=vmem, size = 0x9000, scoped, tag = 'internal scratch']
  %s0 = inlined_call_operand.vmem [shape: f32[8,72], index: 0, kind: input, shape index: {}]
  %s1 = inlined_call_operand.vmem [shape: f32[72,128], index: 1, kind: input, shape index: {}]
  %s2 = inlined_call_operand.vmem [shape: f32[8,1], index: 2, kind: input, shape index: {}]
  %s3 = inlined_call_operand.vmem [shape: f32[8,128], index: 3, kind: output, shape index: {}]
  %s4 = sld [smem:[#allocation0]]
  $region22: #{lstm_model_forward.4} parent=0
    _
  %s6 = ssub.s32 1, %s4
  %s7 = scalar_select 0, %s6, %s4
  // Predicated region
  $region2: #{lstm_model_forward.4} parent=0 // pred_check
    _
  $region3: #{lstm_model_forward.4} parent=0 // pred_check_branch
    %9 = sbr.rel (0) target = $region5
  $region4: #{lstm_model_forward.4} parent=0 // pred_region
    _
  $region5: #{lstm_model_forward.4} parent=0 // pred_fallthru
    _
  // Predicated region
  $region6: #{lstm_model_forward.4} parent=0 // pred_check
    _
  $region7: #{lstm_model_forward.4} parent=0 // pred_check_branch
    %11 = sbr.rel (0) target = $region9
  $region8: #{lstm_model_forward.4} parent=0 // pred_region
    _
  $region9: #{lstm_model_forward.4} parent=0 // pred_fallthru
    _
  // Predicated region
  $region10: #{lstm_model_forward.4} parent=0 // pred_check
    _
  $region11: #{lstm_model_forward.4} parent=0 // pred_check_branch
    %13 = sbr.rel (0) target = $region13
  $region12: #{lstm_model_forward.4} parent=0 // pred_region
    _
  $region13: #{lstm_model_forward.4} parent=0 // pred_fallthru
    _
  %v14 = vld [vmem:[%s0] sm:$0xff]
  %v15 = vld [vmem:[%s1] sm:$0xff]
  %v16 = vld [vmem:[%s1 + $0x8] sm:$0xff]
  %v17 = vld [vmem:[%s1 + $0x10] sm:$0xff]
  %v18 = vld [vmem:[%s1 + $0x18] sm:$0xff]
  %v19 = vld [vmem:[%s1 + $0x20] sm:$0xff]
  %v20 = vld [vmem:[%s1 + $0x28] sm:$0xff]
  %v21 = vld [vmem:[%s1 + $0x30] sm:$0xff]
  %v22 = vld [vmem:[%s1 + $0x38] sm:$0xff]
  %v23 = vld [vmem:[%s1 + $0x40] sm:$0xff]
  %v24 = vld [vmem:[%s2] sm:$0xff]
  %26 = vset.pattern.permute.xlu0 0
  %27 = vperm.xlu0 %26, %v24
  %v28 = vpop.permute.xlu0 %27
  %vm30 = vcmask 588800
  %v32 = vsel %vm30, %v14, 0
  %34 = vmatpush.msra.mxu0 0.0
  %35 = vmatpush.msra.mxu0 0.0
  %36 = vmatpush.msra.mxu0 0.0
  %37 = vmatpush.msra.mxu0 0.0
  %38 = vmatpush.msra.mxu0 0.0
  %39 = vmatpush.msra.mxu0 0.0
  %40 = vmatpush.msra.mxu0 0.0
  %41 = vmatpush.msra.mxu0 %v23
  %42 = vmatpush.msra.mxu0 %v22
  %43 = vmatpush.msra.mxu0 %v21
  %44 = vmatpush.msra.mxu0 %v20
  %45 = vmatpush.msra.mxu0 %v19
  %46 = vmatpush.msra.mxu0 %v18
  %47 = vmatpush.msra.mxu0 %v17
  %48 = vmatpush.msra.mxu0 %v16
  %49 = vmatpush.msra.mxu0 %v15
  %50 = vmatmul.f32.gmra.mxu0 %v32
  %v51 = vpop.f32.mrf.mxu0
  %v52 = vadd.f32 %v28, %v51
  %53 = vdwg.mxu0
  %v54 = vmax.f32 %v52, 0.0
  %55 = vst [vmem:[%s3] sm:$0xff] %v54
  // Predicated region
  $region14: #{lstm_model_forward.4} parent=0 // pred_check
    _
  $region15: #{lstm_model_forward.4} parent=0 // pred_check_branch
    %57 = sbr.rel (0) target = $region17
  $region16: #{lstm_model_forward.4} parent=0 // pred_region
    _
  $region17: #{lstm_model_forward.4} parent=0 // pred_fallthru
    _
  // Predicated region
  $region18: #{lstm_model_forward.4} parent=0 // pred_check
    _
  $region19: #{lstm_model_forward.4} parent=0 // pred_check_branch
    %59 = sbr.rel (0) target = $region21
  $region20: #{lstm_model_forward.4} parent=0 // pred_region
    _
  $region21: #{lstm_model_forward.4} parent=0 // pred_fallthru
    _

// kernel: lstm_model_forward.5
$region0: #{lstm_model_forward.5}
  #allocation0 [shape = 'u32[]', space=smem, size = 0x4, offset = 0x4, fixed_abs, tag = 'smem constant byte address 0x4 - core index']
  #allocation1 [shape = 'u32[72,128]{1,0:T(1,128)}', space=vmem, size = 0x9000, scoped, tag = 'internal scratch']
  #allocation2 [shape = 'f32[32,512]{1,0:T(8,128)}', space=vmem, size = 0x10000, scoped, tag = 'scratch operand']
  #allocation3 [shape = 'f32[64,128]{1,0:T(8,128)}', space=vmem, size = 0x8000, scoped, tag = 'scratch operand']
  #allocation4 [shape = 'f32[64,512]{1,0:T(8,128)}', space=vmem, size = 0x20000, scoped, tag = 'scratch operand']
  #allocation5 [shape = 's32[1]{0}', space=sflag, size = 0x4, scoped, tag = 'scoped memory for lstm_model_forward.5']
  #allocation6 [shape = 'u8[1024]{0}', space=smem, size = 0x400, scoped, tag = 'prefetched SMEM operand 0']
  %s0 = inlined_call_operand.vmem [shape: s32[2,8], index: 0, kind: input, shape index: {}]
  %s1 = inlined_call_operand.vmem [shape: f32[32,32], index: 1, kind: input, shape index: {}]
  %s2 = inlined_call_operand.vmem [shape: f32[32,512], index: 2, kind: input, shape index: {}]
  %s3 = inlined_call_operand.vmem [shape: f32[1,512], index: 3, kind: input, shape index: {}]
  %s4 = inlined_call_operand.vmem [shape: f32[128,512], index: 4, kind: input, shape index: {}]
  %s5 = inlined_call_operand.vmem [shape: f32[16,128], index: 5, kind: input, shape index: {}]
  %s6 = inlined_call_operand.vmem [shape: f32[128,512], index: 6, kind: input, shape index: {}]
  %s7 = inlined_call_operand.vmem [shape: f32[1,512], index: 7, kind: input, shape index: {}]
  %s8 = inlined_call_operand.vmem [shape: f32[128,512], index: 8, kind: input, shape index: {}]
  %s9 = inlined_call_operand.vmem [shape: f32[128,128], index: 9, kind: input, shape index: {}]
  %s10 = inlined_call_operand.vmem [shape: f32[1,128], index: 10, kind: input, shape index: {}]
  %s11 = inlined_call_operand.vmem [shape: f32[64,128], index: 11, kind: output, shape index: {}]
  %s12 = sld [smem:[#allocation0]]
  $region50: #{lstm_model_forward.5} parent=0
    _
  %s14 = ssub.s32 1, %s12
  %s15 = scalar_select 0, %s14, %s12
  %s17 = sshll.u32 %s0, 4
  %s18 = int_to_ptr.vmem [resolvable:$true] %s17
  %20 = dma.vmem_to_smem %s18, 32, [#allocation6], [#allocation5]
  %22 = dma.done [#allocation5], 32
  %23 = sfence
  // Predicated region
  $region2: #{lstm_model_forward.5} parent=0 // pred_check
    _
  $region3: #{lstm_model_forward.5} parent=0 // pred_check_branch
    %25 = sbr.rel (0) target = $region5
  $region4: #{lstm_model_forward.5} parent=0 // pred_region
    _
  $region5: #{lstm_model_forward.5} parent=0 // pred_fallthru
    _
  // Predicated region
  $region6: #{lstm_model_forward.5} parent=0 // pred_check
    _
  $region7: #{lstm_model_forward.5} parent=0 // pred_check_branch
    %27 = sbr.rel (0) target = $region9
  $region8: #{lstm_model_forward.5} parent=0 // pred_region
    _
  $region9: #{lstm_model_forward.5} parent=0 // pred_fallthru
    _
  // Predicated region
  $region10: #{lstm_model_forward.5} parent=0 // pred_check
    _
  $region11: #{lstm_model_forward.5} parent=0 // pred_check_branch
    %29 = sbr.rel (0) target = $region13
  $region12: #{lstm_model_forward.5} parent=0 // pred_region
    _
  $region13: #{lstm_model_forward.5} parent=0 // pred_fallthru
    _
  // Predicated region
  $region14: #{lstm_model_forward.5} parent=0 // pred_check
    _
  $region15: #{lstm_model_forward.5} parent=0 // pred_check_branch
    %31 = sbr.rel (0) target = $region17
  $region16: #{lstm_model_forward.5} parent=0 // pred_region
    _
  $region17: #{lstm_model_forward.5} parent=0 // pred_fallthru
    _
  // Predicated region
  $region18: #{lstm_model_forward.5} parent=0 // pred_check
    _
  $region19: #{lstm_model_forward.5} parent=0 // pred_check_branch
    %33 = sbr.rel (0) target = $region21
  $region20: #{lstm_model_forward.5} parent=0 // pred_region
    _
  $region21: #{lstm_model_forward.5} parent=0 // pred_fallthru
    _
  // Predicated region
  $region22: #{lstm_model_forward.5} parent=0 // pred_check
    _
  $region23: #{lstm_model_forward.5} parent=0 // pred_check_branch
    %35 = sbr.rel (0) target = $region25
  $region24: #{lstm_model_forward.5} parent=0 // pred_region
    _
  $region25: #{lstm_model_forward.5} parent=0 // pred_fallthru
    _
  // Predicated region
  $region26: #{lstm_model_forward.5} parent=0 // pred_check
    _
  $region27: #{lstm_model_forward.5} parent=0 // pred_check_branch
    %37 = sbr.rel (0) target = $region29
  $region28: #{lstm_model_forward.5} parent=0 // pred_region
    _
  $region29: #{lstm_model_forward.5} parent=0 // pred_fallthru
    _
  // Predicated region
  $region30: #{lstm_model_forward.5} parent=0 // pred_check
    _
  $region31: #{lstm_model_forward.5} parent=0 // pred_check_branch
    %39 = sbr.rel (0) target = $region33
  $region32: #{lstm_model_forward.5} parent=0 // pred_region
    _
  $region33: #{lstm_model_forward.5} parent=0 // pred_fallthru
    _
  // Predicated region
  $region34: #{lstm_model_forward.5} parent=0 // pred_check
    _
  $region35: #{lstm_model_forward.5} parent=0 // pred_check_branch
    %41 = sbr.rel (0) target = $region37
  $region36: #{lstm_model_forward.5} parent=0 // pred_region
    _
  $region37: #{lstm_model_forward.5} parent=0 // pred_fallthru
    _
  // Predicated region
  $region38: #{lstm_model_forward.5} parent=0 // pred_check
    _
  $region39: #{lstm_model_forward.5} parent=0 // pred_check_branch
    %43 = sbr.rel (0) target = $region41
  $region40: #{lstm_model_forward.5} parent=0 // pred_region
    _
  $region41: #{lstm_model_forward.5} parent=0 // pred_fallthru
    _
  %v44 = vld [vmem:[%s1] sm:$0xff]
  %v45 = vld [vmem:[%s1 + $0x8] sm:$0xff]
  %v46 = vld [vmem:[%s1 + $0x10] sm:$0xff]
  %v47 = vld [vmem:[%s1 + $0x18] sm:$0xff]
  %v48 = vld [vmem:[%s2] sm:$0xff]
  %v49 = vld [vmem:[%s2 + $0x8] sm:$0xff]
  %v50 = vld [vmem:[%s2 + $0x10] sm:$0xff]
  %v51 = vld [vmem:[%s2 + $0x18] sm:$0xff]
  %v52 = vld [vmem:[%s2 + $0x20] sm:$0xff]
  %v53 = vld [vmem:[%s2 + $0x28] sm:$0xff]
  %v54 = vld [vmem:[%s2 + $0x30] sm:$0xff]
  %v55 = vld [vmem:[%s2 + $0x38] sm:$0xff]
  %v56 = vld [vmem:[%s2 + $0x40] sm:$0xff]
  %v57 = vld [vmem:[%s2 + $0x48] sm:$0xff]
  %v58 = vld [vmem:[%s2 + $0x50] sm:$0xff]
  %v59 = vld [vmem:[%s2 + $0x58] sm:$0xff]
  %v60 = vld [vmem:[%s2 + $0x60] sm:$0xff]
  %v61 = vld [vmem:[%s2 + $0x68] sm:$0xff]
  %v62 = vld [vmem:[%s2 + $0x70] sm:$0xff]
  %v63 = vld [vmem:[%s2 + $0x78] sm:$0xff]
  %v64 = vld [vmem:[%s3] sm:$0xf]
  %v66 = vperm.slane %v64, 0
  %v67 = vperm.slane %v64, 1
  %v68 = vperm.slane %v64, 2
  %v69 = vperm.slane %v64, 3
  %vm74 = vcmask 261120
  %v76 = vsel %vm74, %v44, 0
  %v79 = vsel %vm74, %v45, 0
  %v82 = vsel %vm74, %v46, 0
  %v85 = vsel %vm74, %v47, 0
  %87 = vmatpush.msra.mxu0 0.0
  %88 = vmatpush.msra.mxu0 0.0
  %89 = vmatpush.msra.mxu0 0.0
  %90 = vmatpush.msra.mxu0 0.0
  %91 = vmatpush.msra.mxu0 0.0
  %92 = vmatpush.msra.mxu0 0.0
  %93 = vmatpush.msra.mxu0 0.0
  %94 = vmatpush.msra.mxu0 0.0
  %95 = vmatpush.msra.mxu0 0.0
  %96 = vmatpush.msra.mxu0 0.0
  %97 = vmatpush.msra.mxu0 0.0
  %98 = vmatpush.msra.mxu0 0.0
  %99 = vmatpush.msra.mxu0 %v60
  %100 = vmatpush.msra.mxu0 %v56
  %101 = vmatpush.msra.mxu0 %v52
  %102 = vmatpush.msra.mxu0 %v48
  %103 = vmatmul.f32.gmra.mxu0 %v76
  %v104 = vpop.f32.mrf.mxu0
  %v105 = vadd.f32 %v66, %v104
  %106 = vmatmul.f32.gmra.mxu0 %v79
  %v107 = vpop.f32.mrf.mxu0
  %v108 = vadd.f32 %v66, %v107
  %109 = vmatmul.f32.gmra.mxu0 %v82
  %v110 = vpop.f32.mrf.mxu0
  %v111 = vadd.f32 %v66, %v110
  %112 = vmatmul.f32.gmra.mxu0 %v85
  %v113 = vpop.f32.mrf.mxu0
  %v114 = vadd.f32 %v66, %v113
  %115 = vdwg.mxu0
  %116 = vmatpush.msra.mxu0 0.0
  %117 = vmatpush.msra.mxu0 0.0
  %118 = vmatpush.msra.mxu0 0.0
  %119 = vmatpush.msra.mxu0 0.0
  %120 = vmatpush.msra.mxu0 0.0
  %121 = vmatpush.msra.mxu0 0.0
  %122 = vmatpush.msra.mxu0 0.0
  %123 = vmatpush.msra.mxu0 0.0
  %124 = vmatpush.msra.mxu0 0.0
  %125 = vmatpush.msra.mxu0 0.0
  %126 = vmatpush.msra.mxu0 0.0
  %127 = vmatpush.msra.mxu0 0.0
  %128 = vmatpush.msra.mxu0 %v61
  %129 = vmatpush.msra.mxu0 %v57
  %130 = vmatpush.msra.mxu0 %v53
  %131 = vmatpush.msra.mxu0 %v49
  %132 = vmatmul.f32.gmra.mxu0 %v76
  %v133 = vpop.f32.mrf.mxu0
  %v134 = vadd.f32 %v67, %v133
  %135 = vmatmul.f32.gmra.mxu0 %v79
  %v136 = vpop.f32.mrf.mxu0
  %v137 = vadd.f32 %v67, %v136
  %138 = vmatmul.f32.gmra.mxu0 %v82
  %v139 = vpop.f32.mrf.mxu0
  %v140 = vadd.f32 %v67, %v139
  %141 = vmatmul.f32.gmra.mxu0 %v85
  %v142 = vpop.f32.mrf.mxu0
  %v143 = vadd.f32 %v67, %v142
  %144 = vdwg.mxu0
  %145 = vmatpush.msra.mxu0 0.0
  %146 = vmatpush.msra.mxu0 0.0
  %147 = vmatpush.msra.mxu0 0.0
  %148 = vmatpush.msra.mxu0 0.0
  %149 = vmatpush.msra.mxu0 0.0
  %150 = vmatpush.msra.mxu0 0.0
  %151 = vmatpush.msra.mxu0 0.0
  %152 = vmatpush.msra.mxu0 0.0
  %153 = vmatpush.msra.mxu0 0.0
  %154 = vmatpush.msra.mxu0 0.0
  %155 = vmatpush.msra.mxu0 0.0
  %156 = vmatpush.msra.mxu0 0.0
  %157 = vmatpush.msra.mxu0 %v62
  %158 = vmatpush.msra.mxu0 %v58
  %159 = vmatpush.msra.mxu0 %v54
  %160 = vmatpush.msra.mxu0 %v50
  %161 = vmatmul.f32.gmra.mxu0 %v76
  %v162 = vpop.f32.mrf.mxu0
  %v163 = vadd.f32 %v68, %v162
  %164 = vmatmul.f32.gmra.mxu0 %v79
  %v165 = vpop.f32.mrf.mxu0
  %v166 = vadd.f32 %v68, %v165
  %167 = vmatmul.f32.gmra.mxu0 %v82
  %v168 = vpop.f32.mrf.mxu0
  %v169 = vadd.f32 %v68, %v168
  %170 = vmatmul.f32.gmra.mxu0 %v85
  %v171 = vpop.f32.mrf.mxu0
  %v172 = vadd.f32 %v68, %v171
  %173 = vdwg.mxu0
  %174 = vmatpush.msra.mxu0 0.0
  %175 = vmatpush.msra.mxu0 0.0
  %176 = vmatpush.msra.mxu0 0.0
  %177 = vmatpush.msra.mxu0 0.0
  %178 = vmatpush.msra.mxu0 0.0
  %179 = vmatpush.msra.mxu0 0.0
  %180 = vmatpush.msra.mxu0 0.0
  %181 = vmatpush.msra.mxu0 0.0
  %182 = vmatpush.msra.mxu0 0.0
  %183 = vmatpush.msra.mxu0 0.0
  %184 = vmatpush.msra.mxu0 0.0
  %185 = vmatpush.msra.mxu0 0.0
  %186 = vmatpush.msra.mxu0 %v63
  %187 = vmatpush.msra.mxu0 %v59
  %188 = vmatpush.msra.mxu0 %v55
  %189 = vmatpush.msra.mxu0 %v51
  %190 = vmatmul.f32.gmra.mxu0 %v76
  %v191 = vpop.f32.mrf.mxu0
  %v192 = vadd.f32 %v69, %v191
  %193 = vmatmul.f32.gmra.mxu0 %v79
  %v194 = vpop.f32.mrf.mxu0
  %v195 = vadd.f32 %v69, %v194
  %196 = vmatmul.f32.gmra.mxu0 %v82
  %v197 = vpop.f32.mrf.mxu0
  %v198 = vadd.f32 %v69, %v197
  %199 = vmatmul.f32.gmra.mxu0 %v85
  %v200 = vpop.f32.mrf.mxu0
  %v201 = vadd.f32 %v69, %v200
  %202 = vdwg.mxu0
  %203 = vst [vmem:[#allocation2] sm:$0xff] %v105
  %204 = vst [vmem:[#allocation2 + $0x8] sm:$0xff] %v134
  %205 = vst [vmem:[#allocation2 + $0x10] sm:$0xff] %v163
  %206 = vst [vmem:[#allocation2 + $0x18] sm:$0xff] %v192
  %207 = vst [vmem:[#allocation2 + $0x20] sm:$0xff] %v108
  %208 = vst [vmem:[#allocation2 + $0x28] sm:$0xff] %v137
  %209 = vst [vmem:[#allocation2 + $0x30] sm:$0xff] %v166
  %210 = vst [vmem:[#allocation2 + $0x38] sm:$0xff] %v195
  %211 = vst [vmem:[#allocation2 + $0x40] sm:$0xff] %v111
  %212 = vst [vmem:[#allocation2 + $0x48] sm:$0xff] %v140
  %213 = vst [vmem:[#allocation2 + $0x50] sm:$0xff] %v169
  %214 = vst [vmem:[#allocation2 + $0x58] sm:$0xff] %v198
  %215 = vst [vmem:[#allocation2 + $0x60] sm:$0xff] %v114
  %216 = vst [vmem:[#allocation2 + $0x68] sm:$0xff] %v143
  %217 = vst [vmem:[#allocation2 + $0x70] sm:$0xff] %v172
  %218 = vst [vmem:[#allocation2 + $0x78] sm:$0xff] %v201
  %219 = vst [vmem:[#allocation3] sm:$0xff] 0.0
  %220 = vst [vmem:[#allocation3 + $0x8] sm:$0xff] 0.0
  %221 = vst [vmem:[#allocation3 + $0x10] sm:$0xff] 0.0
  %222 = vst [vmem:[#allocation3 + $0x18] sm:$0xff] 0.0
  %223 = vst [vmem:[#allocation3 + $0x20] sm:$0xff] 0.0
  %224 = vst [vmem:[#allocation3 + $0x28] sm:$0xff] 0.0
  %225 = vst [vmem:[#allocation3 + $0x30] sm:$0xff] 0.0
  %226 = vst [vmem:[#allocation3 + $0x38] sm:$0xff] 0.0
  %s227 = sld [smem:[#allocation6]]
  %s228 = scalar_lea.vmem %s5, %s227
  %v229 = vld [vmem:[%s228] sm:$0x1]
  %230 = vst [vmem:[#allocation3] sm:$0x1] %v229
  %s231 = sld [smem:[#allocation6 + $0x80]]
  %s232 = scalar_lea.vmem %s5, %s231
  %v233 = vld [vmem:[%s232] sm:$0x1]
  %234 = vst [vmem:[#allocation3 + $0x1] sm:$0x1] %v233
  %s235 = sld [smem:[#allocation6 + $0x1]]
  %s236 = scalar_lea.vmem %s5, %s235
  %v237 = vld [vmem:[%s236] sm:$0x1]
  %238 = vst [vmem:[#allocation3 + $0x8] sm:$0x1] %v237
  %s239 = sld [smem:[#allocation6 + $0x81]]
  %s240 = scalar_lea.vmem %s5, %s239
  %v241 = vld [vmem:[%s240] sm:$0x1]
  %242 = vst [vmem:[#allocation3 + $0x9] sm:$0x1] %v241
  %s243 = sld [smem:[#allocation6 + $0x2]]
  %s244 = scalar_lea.vmem %s5, %s243
  %v245 = vld [vmem:[%s244] sm:$0x1]
  %246 = vst [vmem:[#allocation3 + $0x10] sm:$0x1] %v245
  %s247 = sld [smem:[#allocation6 + $0x82]]
  %s248 = scalar_lea.vmem %s5, %s247
  %v249 = vld [vmem:[%s248] sm:$0x1]
  %250 = vst [vmem:[#allocation3 + $0x11] sm:$0x1] %v249
  %s251 = sld [smem:[#allocation6 + $0x3]]
  %s252 = scalar_lea.vmem %s5, %s251
  %v253 = vld [vmem:[%s252] sm:$0x1]
  %254 = vst [vmem:[#allocation3 + $0x18] sm:$0x1] %v253
  %s255 = sld [smem:[#allocation6 + $0x83]]
  %s256 = scalar_lea.vmem %s5, %s255
  %v257 = vld [vmem:[%s256] sm:$0x1]
  %258 = vst [vmem:[#allocation3 + $0x19] sm:$0x1] %v257
  %s259 = sld [smem:[#allocation6 + $0x4]]
  %s260 = scalar_lea.vmem %s5, %s259
  %v261 = vld [vmem:[%s260] sm:$0x1]
  %262 = vst [vmem:[#allocation3 + $0x20] sm:$0x1] %v261
  %s263 = sld [smem:[#allocation6 + $0x84]]
  %s264 = scalar_lea.vmem %s5, %s263
  %v265 = vld [vmem:[%s264] sm:$0x1]
  %266 = vst [vmem:[#allocation3 + $0x21] sm:$0x1] %v265
  %s267 = sld [smem:[#allocation6 + $0x5]]
  %s268 = scalar_lea.vmem %s5, %s267
  %v269 = vld [vmem:[%s268] sm:$0x1]
  %270 = vst [vmem:[#allocation3 + $0x28] sm:$0x1] %v269
  %s271 = sld [smem:[#allocation6 + $0x85]]
  %s272 = scalar_lea.vmem %s5, %s271
  %v273 = vld [vmem:[%s272] sm:$0x1]
  %274 = vst [vmem:[#allocation3 + $0x29] sm:$0x1] %v273
  %s275 = sld [smem:[#allocation6 + $0x6]]
  %s276 = scalar_lea.vmem %s5, %s275
  %v277 = vld [vmem:[%s276] sm:$0x1]
  %278 = vst [vmem:[#allocation3 + $0x30] sm:$0x1] %v277
  %s279 = sld [smem:[#allocation6 + $0x86]]
  %s280 = scalar_lea.vmem %s5, %s279
  %v281 = vld [vmem:[%s280] sm:$0x1]
  %282 = vst [vmem:[#allocation3 + $0x31] sm:$0x1] %v281
  %s283 = sld [smem:[#allocation6 + $0x7]]
  %s284 = scalar_lea.vmem %s5, %s283
  %v285 = vld [vmem:[%s284] sm:$0x1]
  %286 = vst [vmem:[#allocation3 + $0x38] sm:$0x1] %v285
  %s287 = sld [smem:[#allocation6 + $0x87]]
  %s288 = scalar_lea.vmem %s5, %s287
  %v289 = vld [vmem:[%s288] sm:$0x1]
  %290 = vst [vmem:[#allocation3 + $0x39] sm:$0x1] %v289
  %v291 = vld [vmem:[#allocation3] sm:$0xff]
  %v292 = vld [vmem:[#allocation3 + $0x8] sm:$0xff]
  %v293 = vld [vmem:[#allocation3 + $0x10] sm:$0xff]
  %v294 = vld [vmem:[#allocation3 + $0x18] sm:$0xff]
  %v295 = vld [vmem:[#allocation3 + $0x20] sm:$0xff]
  %v296 = vld [vmem:[#allocation3 + $0x28] sm:$0xff]
  %v297 = vld [vmem:[#allocation3 + $0x30] sm:$0xff]
  %v298 = vld [vmem:[#allocation3 + $0x38] sm:$0xff]
  %v299 = vld [vmem:[%s6] sm:$0xff]
  %v300 = vld [vmem:[%s6 + $0x8] sm:$0xff]
  %v301 = vld [vmem:[%s6 + $0x10] sm:$0xff]
  %v302 = vld [vmem:[%s6 + $0x18] sm:$0xff]
  %v303 = vld [vmem:[%s6 + $0x20] sm:$0xff]
  %v304 = vld [vmem:[%s6 + $0x28] sm:$0xff]
  %v305 = vld [vmem:[%s6 + $0x30] sm:$0xff]
  %v306 = vld [vmem:[%s6 + $0x38] sm:$0xff]
  %v307 = vld [vmem:[%s6 + $0x40] sm:$0xff]
  %v308 = vld [vmem:[%s6 + $0x48] sm:$0xff]
  %v309 = vld [vmem:[%s6 + $0x50] sm:$0xff]
  %v310 = vld [vmem:[%s6 + $0x58] sm:$0xff]
  %v311 = vld [vmem:[%s6 + $0x60] sm:$0xff]
  %v312 = vld [vmem:[%s6 + $0x68] sm:$0xff]
  %v313 = vld [vmem:[%s6 + $0x70] sm:$0xff]
  %v314 = vld [vmem:[%s6 + $0x78] sm:$0xff]
  %v315 = vld [vmem:[%s6 + $0x80] sm:$0xff]
  %v316 = vld [vmem:[%s6 + $0x88] sm:$0xff]
  %v317 = vld [vmem:[%s6 + $0x90] sm:$0xff]
  %v318 = vld [vmem:[%s6 + $0x98] sm:$0xff]
  %v319 = vld [vmem:[%s6 + $0xa0] sm:$0xff]
  %v320 = vld [vmem:[%s6 + $0xa8] sm:$0xff]
  %v321 = vld [vmem:[%s6 + $0xb0] sm:$0xff]
  %v322 = vld [vmem:[%s6 + $0xb8] sm:$0xff]
  %v323 = vld [vmem:[%s6 + $0xc0] sm:$0xff]
  %v324 = vld [vmem:[%s6 + $0xc8] sm:$0xff]
  %v325 = vld [vmem:[%s6 + $0xd0] sm:$0xff]
  %v326 = vld [vmem:[%s6 + $0xd8] sm:$0xff]
  %v327 = vld [vmem:[%s6 + $0xe0] sm:$0xff]
  %v328 = vld [vmem:[%s6 + $0xe8] sm:$0xff]
  %v329 = vld [vmem:[%s6 + $0xf0] sm:$0xff]
  %v330 = vld [vmem:[%s6 + $0xf8] sm:$0xff]
  %v331 = vld [vmem:[%s6 + $0x100] sm:$0xff]
  %v332 = vld [vmem:[%s6 + $0x108] sm:$0xff]
  %v333 = vld [vmem:[%s6 + $0x110] sm:$0xff]
  %v334 = vld [vmem:[%s6 + $0x118] sm:$0xff]
  %v335 = vld [vmem:[%s6 + $0x120] sm:$0xff]
  %v336 = vld [vmem:[%s6 + $0x128] sm:$0xff]
  %v337 = vld [vmem:[%s6 + $0x130] sm:$0xff]
  %v338 = vld [vmem:[%s6 + $0x138] sm:$0xff]
  %v339 = vld [vmem:[%s6 + $0x140] sm:$0xff]
  %v340 = vld [vmem:[%s6 + $0x148] sm:$0xff]
  %v341 = vld [vmem:[%s6 + $0x150] sm:$0xff]
  %v342 = vld [vmem:[%s6 + $0x158] sm:$0xff]
  %v343 = vld [vmem:[%s6 + $0x160] sm:$0xff]
  %v344 = vld [vmem:[%s6 + $0x168] sm:$0xff]
  %v345 = vld [vmem:[%s6 + $0x170] sm:$0xff]
  %v346 = vld [vmem:[%s6 + $0x178] sm:$0xff]
  %v347 = vld [vmem:[%s6 + $0x180] sm:$0xff]
  %v348 = vld [vmem:[%s6 + $0x188] sm:$0xff]
  %v349 = vld [vmem:[%s6 + $0x190] sm:$0xff]
  %v350 = vld [vmem:[%s6 + $0x198] sm:$0xff]
  %v351 = vld [vmem:[%s6 + $0x1a0] sm:$0xff]
  %v352 = vld [vmem:[%s6 + $0x1a8] sm:$0xff]
  %v353 = vld [vmem:[%s6 + $0x1b0] sm:$0xff]
  %v354 = vld [vmem:[%s6 + $0x1b8] sm:$0xff]
  %v355 = vld [vmem:[%s6 + $0x1c0] sm:$0xff]
  %v356 = vld [vmem:[%s6 + $0x1c8] sm:$0xff]
  %v357 = vld [vmem:[%s6 + $0x1d0] sm:$0xff]
  %v358 = vld [vmem:[%s6 + $0x1d8] sm:$0xff]
  %v359 = vld [vmem:[%s6 + $0x1e0] sm:$0xff]
  %v360 = vld [vmem:[%s6 + $0x1e8] sm:$0xff]
  %v361 = vld [vmem:[%s6 + $0x1f0] sm:$0xff]
  %v362 = vld [vmem:[%s6 + $0x1f8] sm:$0xff]
  %v363 = vld [vmem:[%s7] sm:$0xf]
  %v365 = vperm.slane %v363, 0
  %v366 = vperm.slane %v363, 1
  %v367 = vperm.slane %v363, 2
  %v368 = vperm.slane %v363, 3
  %373 = vmatpush.msra.mxu0 %v359
  %374 = vmatpush.msra.mxu0 %v355
  %375 = vmatpush.msra.mxu0 %v351
  %376 = vmatpush.msra.mxu0 %v347
  %377 = vmatpush.msra.mxu0 %v343
  %378 = vmatpush.msra.mxu0 %v339
  %379 = vmatpush.msra.mxu0 %v335
  %380 = vmatpush.msra.mxu0 %v331
  %381 = vmatpush.msra.mxu0 %v327
  %382 = vmatpush.msra.mxu0 %v323
  %383 = vmatpush.msra.mxu0 %v319
  %384 = vmatpush.msra.mxu0 %v315
  %385 = vmatpush.msra.mxu0 %v311
  %386 = vmatpush.msra.mxu0 %v307
  %387 = vmatpush.msra.mxu0 %v303
  %388 = vmatpush.msra.mxu0 %v299
  %389 = vmatmul.f32.gmra.mxu0 %v291
  %v390 = vpop.f32.mrf.mxu0
  %v391 = vadd.f32 %v365, %v390
  %392 = vmatmul.f32.gmra.mxu0 %v292
  %v393 = vpop.f32.mrf.mxu0
  %v394 = vadd.f32 %v365, %v393
  %395 = vmatmul.f32.gmra.mxu0 %v293
  %v396 = vpop.f32.mrf.mxu0
  %v397 = vadd.f32 %v365, %v396
  %398 = vmatmul.f32.gmra.mxu0 %v294
  %v399 = vpop.f32.mrf.mxu0
  %v400 = vadd.f32 %v365, %v399
  %401 = vmatmul.f32.gmra.mxu0 %v295
  %v402 = vpop.f32.mrf.mxu0
  %v403 = vadd.f32 %v365, %v402
  %404 = vmatmul.f32.gmra.mxu0 %v296
  %v405 = vpop.f32.mrf.mxu0
  %v406 = vadd.f32 %v365, %v405
  %407 = vmatmul.f32.gmra.mxu0 %v297
  %v408 = vpop.f32.mrf.mxu0
  %v409 = vadd.f32 %v365, %v408
  %410 = vmatmul.f32.gmra.mxu0 %v298
  %v411 = vpop.f32.mrf.mxu0
  %v412 = vadd.f32 %v365, %v411
  %413 = vdwg.mxu0
  %414 = vmatpush.msra.mxu0 %v360
  %415 = vmatpush.msra.mxu0 %v356
  %416 = vmatpush.msra.mxu0 %v352
  %417 = vmatpush.msra.mxu0 %v348
  %418 = vmatpush.msra.mxu0 %v344
  %419 = vmatpush.msra.mxu0 %v340
  %420 = vmatpush.msra.mxu0 %v336
  %421 = vmatpush.msra.mxu0 %v332
  %422 = vmatpush.msra.mxu0 %v328
  %423 = vmatpush.msra.mxu0 %v324
  %424 = vmatpush.msra.mxu0 %v320
  %425 = vmatpush.msra.mxu0 %v316
  %426 = vmatpush.msra.mxu0 %v312
  %427 = vmatpush.msra.mxu0 %v308
  %428 = vmatpush.msra.mxu0 %v304
  %429 = vmatpush.msra.mxu0 %v300
  %430 = vmatmul.f32.gmra.mxu0 %v291
  %v431 = vpop.f32.mrf.mxu0
  %v432 = vadd.f32 %v366, %v431
  %433 = vmatmul.f32.gmra.mxu0 %v292
  %v434 = vpop.f32.mrf.mxu0
  %v435 = vadd.f32 %v366, %v434
  %436 = vmatmul.f32.gmra.mxu0 %v293
  %v437 = vpop.f32.mrf.mxu0
  %v438 = vadd.f32 %v366, %v437
  %439 = vmatmul.f32.gmra.mxu0 %v294
  %v440 = vpop.f32.mrf.mxu0
  %v441 = vadd.f32 %v366, %v440
  %442 = vmatmul.f32.gmra.mxu0 %v295
  %v443 = vpop.f32.mrf.mxu0
  %v444 = vadd.f32 %v366, %v443
  %445 = vmatmul.f32.gmra.mxu0 %v296
  %v446 = vpop.f32.mrf.mxu0
  %v447 = vadd.f32 %v366, %v446
  %448 = vmatmul.f32.gmra.mxu0 %v297
  %v449 = vpop.f32.mrf.mxu0
  %v450 = vadd.f32 %v366, %v449
  %451 = vmatmul.f32.gmra.mxu0 %v298
  %v452 = vpop.f32.mrf.mxu0
  %v453 = vadd.f32 %v366, %v452
  %454 = vdwg.mxu0
  %455 = vmatpush.msra.mxu0 %v361
  %456 = vmatpush.msra.mxu0 %v357
  %457 = vmatpush.msra.mxu0 %v353
  %458 = vmatpush.msra.mxu0 %v349
  %459 = vmatpush.msra.mxu0 %v345
  %460 = vmatpush.msra.mxu0 %v341
  %461 = vmatpush.msra.mxu0 %v337
  %462 = vmatpush.msra.mxu0 %v333
  %463 = vmatpush.msra.mxu0 %v329
  %464 = vmatpush.msra.mxu0 %v325
  %465 = vmatpush.msra.mxu0 %v321
  %466 = vmatpush.msra.mxu0 %v317
  %467 = vmatpush.msra.mxu0 %v313
  %468 = vmatpush.msra.mxu0 %v309
  %469 = vmatpush.msra.mxu0 %v305
  %470 = vmatpush.msra.mxu0 %v301
  %471 = vmatmul.f32.gmra.mxu0 %v291
  %v472 = vpop.f32.mrf.mxu0
  %v473 = vadd.f32 %v367, %v472
  %474 = vmatmul.f32.gmra.mxu0 %v292
  %v475 = vpop.f32.mrf.mxu0
  %v476 = vadd.f32 %v367, %v475
  %477 = vmatmul.f32.gmra.mxu0 %v293
  %v478 = vpop.f32.mrf.mxu0
  %v479 = vadd.f32 %v367, %v478
  %480 = vmatmul.f32.gmra.mxu0 %v294
  %v481 = vpop.f32.mrf.mxu0
  %v482 = vadd.f32 %v367, %v481
  %483 = vmatmul.f32.gmra.mxu0 %v295
  %v484 = vpop.f32.mrf.mxu0
  %v485 = vadd.f32 %v367, %v484
  %486 = vmatmul.f32.gmra.mxu0 %v296
  %v487 = vpop.f32.mrf.mxu0
  %v488 = vadd.f32 %v367, %v487
  %489 = vmatmul.f32.gmra.mxu0 %v297
  %v490 = vpop.f32.mrf.mxu0
  %v491 = vadd.f32 %v367, %v490
  %492 = vmatmul.f32.gmra.mxu0 %v298
  %v493 = vpop.f32.mrf.mxu0
  %v494 = vadd.f32 %v367, %v493
  %495 = vdwg.mxu0
  %496 = vmatpush.msra.mxu0 %v362
  %497 = vmatpush.msra.mxu0 %v358
  %498 = vmatpush.msra.mxu0 %v354
  %499 = vmatpush.msra.mxu0 %v350
  %500 = vmatpush.msra.mxu0 %v346
  %501 = vmatpush.msra.mxu0 %v342
  %502 = vmatpush.msra.mxu0 %v338
  %503 = vmatpush.msra.mxu0 %v334
  %504 = vmatpush.msra.mxu0 %v330
  %505 = vmatpush.msra.mxu0 %v326
  %506 = vmatpush.msra.mxu0 %v322
  %507 = vmatpush.msra.mxu0 %v318
  %508 = vmatpush.msra.mxu0 %v314
  %509 = vmatpush.msra.mxu0 %v310
  %510 = vmatpush.msra.mxu0 %v306
  %511 = vmatpush.msra.mxu0 %v302
  %512 = vmatmul.f32.gmra.mxu0 %v291
  %v513 = vpop.f32.mrf.mxu0
  %v514 = vadd.f32 %v368, %v513
  %515 = vmatmul.f32.gmra.mxu0 %v292
  %v516 = vpop.f32.mrf.mxu0
  %v517 = vadd.f32 %v368, %v516
  %518 = vmatmul.f32.gmra.mxu0 %v293
  %v519 = vpop.f32.mrf.mxu0
  %v520 = vadd.f32 %v368, %v519
  %521 = vmatmul.f32.gmra.mxu0 %v294
  %v522 = vpop.f32.mrf.mxu0
  %v523 = vadd.f32 %v368, %v522
  %524 = vmatmul.f32.gmra.mxu0 %v295
  %v525 = vpop.f32.mrf.mxu0
  %v526 = vadd.f32 %v368, %v525
  %527 = vmatmul.f32.gmra.mxu0 %v296
  %v528 = vpop.f32.mrf.mxu0
  %v529 = vadd.f32 %v368, %v528
  %530 = vmatmul.f32.gmra.mxu0 %v297
  %v531 = vpop.f32.mrf.mxu0
  %v532 = vadd.f32 %v368, %v531
  %533 = vmatmul.f32.gmra.mxu0 %v298
  %v534 = vpop.f32.mrf.mxu0
  %v535 = vadd.f32 %v368, %v534
  %536 = vdwg.mxu0
  %537 = vst [vmem:[#allocation4] sm:$0xff] %v391
  %538 = vst [vmem:[#allocation4 + $0x8] sm:$0xff] %v432
  %539 = vst [vmem:[#allocation4 + $0x10] sm:$0xff] %v473
  %540 = vst [vmem:[#allocation4 + $0x18] sm:$0xff] %v514
  %541 = vst [vmem:[#allocation4 + $0x20] sm:$0xff] %v394
  %542 = vst [vmem:[#allocation4 + $0x28] sm:$0xff] %v435
  %543 = vst [vmem:[#allocation4 + $0x30] sm:$0xff] %v476
  %544 = vst [vmem:[#allocation4 + $0x38] sm:$0xff] %v517
  %545 = vst [vmem:[#allocation4 + $0x40] sm:$0xff] %v397
  %546 = vst [vmem:[#allocation4 + $0x48] sm:$0xff] %v438
  %547 = vst [vmem:[#allocation4 + $0x50] sm:$0xff] %v479
  %548 = vst [vmem:[#allocation4 + $0x58] sm:$0xff] %v520
  %549 = vst [vmem:[#allocation4 + $0x60] sm:$0xff] %v400
  %550 = vst [vmem:[#allocation4 + $0x68] sm:$0xff] %v441
  %551 = vst [vmem:[#allocation4 + $0x70] sm:$0xff] %v482
  %552 = vst [vmem:[#allocation4 + $0x78] sm:$0xff] %v523
  %553 = vst [vmem:[#allocation4 + $0x80] sm:$0xff] %v403
  %554 = vst [vmem:[#allocation4 + $0x88] sm:$0xff] %v444
  %555 = vst [vmem:[#allocation4 + $0x90] sm:$0xff] %v485
  %556 = vst [vmem:[#allocation4 + $0x98] sm:$0xff] %v526
  %557 = vst [vmem:[#allocation4 + $0xa0] sm:$0xff] %v406
  %558 = vst [vmem:[#allocation4 + $0xa8] sm:$0xff] %v447
  %559 = vst [vmem:[#allocation4 + $0xb0] sm:$0xff] %v488
  %560 = vst [vmem:[#allocation4 + $0xb8] sm:$0xff] %v529
  %561 = vst [vmem:[#allocation4 + $0xc0] sm:$0xff] %v409
  %562 = vst [vmem:[#allocation4 + $0xc8] sm:$0xff] %v450
  %563 = vst [vmem:[#allocation4 + $0xd0] sm:$0xff] %v491
  %564 = vst [vmem:[#allocation4 + $0xd8] sm:$0xff] %v532
  %565 = vst [vmem:[#allocation4 + $0xe0] sm:$0xff] %v412
  %566 = vst [vmem:[#allocation4 + $0xe8] sm:$0xff] %v453
  %567 = vst [vmem:[#allocation4 + $0xf0] sm:$0xff] %v494
  %568 = vst [vmem:[#allocation4 + $0xf8] sm:$0xff] %v535
  %v569 = vld [vmem:[#allocation2] sm:$0xff]
  %v570 = vld [vmem:[#allocation2 + $0x8] sm:$0xff]
  %v571 = vld [vmem:[#allocation2 + $0x10] sm:$0xff]
  %v572 = vld [vmem:[#allocation2 + $0x18] sm:$0xff]
  %v573 = vld [vmem:[%s4] sm:$0xff]
  %v574 = vld [vmem:[%s4 + $0x8] sm:$0xff]
  %v575 = vld [vmem:[%s4 + $0x10] sm:$0xff]
  %v576 = vld [vmem:[%s4 + $0x18] sm:$0xff]
  %v577 = vld [vmem:[%s4 + $0x20] sm:$0xff]
  %v578 = vld [vmem:[%s4 + $0x28] sm:$0xff]
  %v579 = vld [vmem:[%s4 + $0x30] sm:$0xff]
  %v580 = vld [vmem:[%s4 + $0x38] sm:$0xff]
  %v581 = vld [vmem:[%s4 + $0x40] sm:$0xff]
  %v582 = vld [vmem:[%s4 + $0x48] sm:$0xff]
  %v583 = vld [vmem:[%s4 + $0x50] sm:$0xff]
  %v584 = vld [vmem:[%s4 + $0x58] sm:$0xff]
  %v585 = vld [vmem:[%s4 + $0x60] sm:$0xff]
  %v586 = vld [vmem:[%s4 + $0x68] sm:$0xff]
  %v587 = vld [vmem:[%s4 + $0x70] sm:$0xff]
  %v588 = vld [vmem:[%s4 + $0x78] sm:$0xff]
  %v589 = vld [vmem:[%s4 + $0x80] sm:$0xff]
  %v590 = vld [vmem:[%s4 + $0x88] sm:$0xff]
  %v591 = vld [vmem:[%s4 + $0x90] sm:$0xff]
  %v592 = vld [vmem:[%s4 + $0x98] sm:$0xff]
  %v593 = vld [vmem:[%s4 + $0xa0] sm:$0xff]
  %v594 = vld [vmem:[%s4 + $0xa8] sm:$0xff]
  %v595 = vld [vmem:[%s4 + $0xb0] sm:$0xff]
  %v596 = vld [vmem:[%s4 + $0xb8] sm:$0xff]
  %v597 = vld [vmem:[%s4 + $0xc0] sm:$0xff]
  %v598 = vld [vmem:[%s4 + $0xc8] sm:$0xff]
  %v599 = vld [vmem:[%s4 + $0xd0] sm:$0xff]
  %v600 = vld [vmem:[%s4 + $0xd8] sm:$0xff]
  %v601 = vld [vmem:[%s4 + $0xe0] sm:$0xff]
  %v602 = vld [vmem:[%s4 + $0xe8] sm:$0xff]
  %v603 = vld [vmem:[%s4 + $0xf0] sm:$0xff]
  %v604 = vld [vmem:[%s4 + $0xf8] sm:$0xff]
  %v605 = vld [vmem:[%s4 + $0x100] sm:$0xff]
  %v606 = vld [vmem:[%s4 + $0x108] sm:$0xff]
  %v607 = vld [vmem:[%s4 + $0x110] sm:$0xff]
  %v608 = vld [vmem:[%s4 + $0x118] sm:$0xff]
  %v609 = vld [vmem:[%s4 + $0x120] sm:$0xff]
  %v610 = vld [vmem:[%s4 + $0x128] sm:$0xff]
  %v611 = vld [vmem:[%s4 + $0x130] sm:$0xff]
  %v612 = vld [vmem:[%s4 + $0x138] sm:$0xff]
  %v613 = vld [vmem:[%s4 + $0x140] sm:$0xff]
  %v614 = vld [vmem:[%s4 + $0x148] sm:$0xff]
  %v615 = vld [vmem:[%s4 + $0x150] sm:$0xff]
  %v616 = vld [vmem:[%s4 + $0x158] sm:$0xff]
  %v617 = vld [vmem:[%s4 + $0x160] sm:$0xff]
  %v618 = vld [vmem:[%s4 + $0x168] sm:$0xff]
  %v619 = vld [vmem:[%s4 + $0x170] sm:$0xff]
  %v620 = vld [vmem:[%s4 + $0x178] sm:$0xff]
  %v621 = vld [vmem:[%s4 + $0x180] sm:$0xff]
  %v622 = vld [vmem:[%s4 + $0x188] sm:$0xff]
  %v623 = vld [vmem:[%s4 + $0x190] sm:$0xff]
  %v624 = vld [vmem:[%s4 + $0x198] sm:$0xff]
  %v625 = vld [vmem:[%s4 + $0x1a0] sm:$0xff]
  %v626 = vld [vmem:[%s4 + $0x1a8] sm:$0xff]
  %v627 = vld [vmem:[%s4 + $0x1b0] sm:$0xff]
  %v628 = vld [vmem:[%s4 + $0x1b8] sm:$0xff]
  %v629 = vld [vmem:[%s4 + $0x1c0] sm:$0xff]
  %v630 = vld [vmem:[%s4 + $0x1c8] sm:$0xff]
  %v631 = vld [vmem:[%s4 + $0x1d0] sm:$0xff]
  %v632 = vld [vmem:[%s4 + $0x1d8] sm:$0xff]
  %v633 = vld [vmem:[%s4 + $0x1e0] sm:$0xff]
  %v634 = vld [vmem:[%s4 + $0x1e8] sm:$0xff]
  %v635 = vld [vmem:[%s4 + $0x1f0] sm:$0xff]
  %v636 = vld [vmem:[%s4 + $0x1f8] sm:$0xff]
  %637 = vmatpush.msra.mxu0 %v633
  %638 = vmatpush.msra.mxu0 %v629
  %639 = vmatpush.msra.mxu0 %v625
  %640 = vmatpush.msra.mxu0 %v621
  %641 = vmatpush.msra.mxu0 %v617
  %642 = vmatpush.msra.mxu0 %v613
  %643 = vmatpush.msra.mxu0 %v609
  %644 = vmatpush.msra.mxu0 %v605
  %645 = vmatpush.msra.mxu0 %v601
  %646 = vmatpush.msra.mxu0 %v597
  %647 = vmatpush.msra.mxu0 %v593
  %648 = vmatpush.msra.mxu0 %v589
  %649 = vmatpush.msra.mxu0 %v585
  %650 = vmatpush.msra.mxu0 %v581
  %651 = vmatpush.msra.mxu0 %v577
  %652 = vmatpush.msra.mxu0 %v573
  %653 = vmatmul.f32.gmra.mxu0 0.0
  %v654 = vpop.f32.mrf.mxu0
  %v655 = vadd.f32 0.0, %v654
  %656 = vdwg.mxu0
  %657 = vmatpush.msra.mxu0 %v634
  %658 = vmatpush.msra.mxu0 %v630
  %659 = vmatpush.msra.mxu0 %v626
  %660 = vmatpush.msra.mxu0 %v622
  %661 = vmatpush.msra.mxu0 %v618
  %662 = vmatpush.msra.mxu0 %v614
  %663 = vmatpush.msra.mxu0 %v610
  %664 = vmatpush.msra.mxu0 %v606
  %665 = vmatpush.msra.mxu0 %v602
  %666 = vmatpush.msra.mxu0 %v598
  %667 = vmatpush.msra.mxu0 %v594
  %668 = vmatpush.msra.mxu0 %v590
  %669 = vmatpush.msra.mxu0 %v586
  %670 = vmatpush.msra.mxu0 %v582
  %671 = vmatpush.msra.mxu0 %v578
  %672 = vmatpush.msra.mxu0 %v574
  %673 = vmatmul.f32.gmra.mxu0 0.0
  %v674 = vpop.f32.mrf.mxu0
  %v675 = vadd.f32 0.0, %v674
  %676 = vdwg.mxu0
  %677 = vmatpush.msra.mxu0 %v635
  %678 = vmatpush.msra.mxu0 %v631
  %679 = vmatpush.msra.mxu0 %v627
  %680 = vmatpush.msra.mxu0 %v623
  %681 = vmatpush.msra.mxu0 %v619
  %682 = vmatpush.msra.mxu0 %v615
  %683 = vmatpush.msra.mxu0 %v611
  %684 = vmatpush.msra.mxu0 %v607
  %685 = vmatpush.msra.mxu0 %v603
  %686 = vmatpush.msra.mxu0 %v599
  %687 = vmatpush.msra.mxu0 %v595
  %688 = vmatpush.msra.mxu0 %v591
  %689 = vmatpush.msra.mxu0 %v587
  %690 = vmatpush.msra.mxu0 %v583
  %691 = vmatpush.msra.mxu0 %v579
  %692 = vmatpush.msra.mxu0 %v575
  %693 = vmatmul.f32.gmra.mxu0 0.0
  %v694 = vpop.f32.mrf.mxu0
  %v695 = vadd.f32 0.0, %v694
  %696 = vdwg.mxu0
  %697 = vmatpush.msra.mxu0 %v636
  %698 = vmatpush.msra.mxu0 %v632
  %699 = vmatpush.msra.mxu0 %v628
  %700 = vmatpush.msra.mxu0 %v624
  %701 = vmatpush.msra.mxu0 %v620
  %702 = vmatpush.msra.mxu0 %v616
  %703 = vmatpush.msra.mxu0 %v612
  %704 = vmatpush.msra.mxu0 %v608
  %705 = vmatpush.msra.mxu0 %v604
  %706 = vmatpush.msra.mxu0 %v600
  %707 = vmatpush.msra.mxu0 %v596
  %708 = vmatpush.msra.mxu0 %v592
  %709 = vmatpush.msra.mxu0 %v588
  %710 = vmatpush.msra.mxu0 %v584
  %711 = vmatpush.msra.mxu0 %v580
  %712 = vmatpush.msra.mxu0 %v576
  %713 = vmatmul.f32.gmra.mxu0 0.0
  %v714 = vpop.f32.mrf.mxu0
  %v715 = vadd.f32 0.0, %v714
  %716 = vdwg.mxu0
  %v717 = vadd.f32 %v569, %v655
  %v718 = vadd.f32 %v570, %v675
  %v719 = vadd.f32 %v571, %v695
  %v720 = vadd.f32 %v572, %v715
  %v721 = vmul.f32 %v717, 0.5
  %v722 = vtanh.pop %v721
  %v723 = vmul.f32 %v722, 0.5
  %v724 = vadd.f32 %v723, 0.5
  %v725 = vmul.f32 %v718, 0.5
  %v726 = vtanh.pop %v725
  %v727 = vmul.f32 %v726, 0.5
  %v728 = vadd.f32 %v727, 0.5
  %v729 = vtanh.pop %v719
  %v730 = vmul.f32 %v720, 0.5
  %v731 = vtanh.pop %v730
  %v732 = vmul.f32 %v731, 0.5
  %v733 = vadd.f32 %v732, 0.5
  %v734 = vmul.f32 %v728, 0.0
  %v735 = vmul.f32 %v724, %v729
  %v736 = vadd.f32 %v734, %v735
  %v737 = vtanh.pop %v736
  %v738 = vmul.f32 %v733, %v737
  %v739 = vld [vmem:[#allocation2 + $0x20] sm:$0xff]
  %v740 = vld [vmem:[#allocation2 + $0x28] sm:$0xff]
  %v741 = vld [vmem:[#allocation2 + $0x30] sm:$0xff]
  %v742 = vld [vmem:[#allocation2 + $0x38] sm:$0xff]
  %743 = vmatpush.msra.mxu0 %v633
  %744 = vmatpush.msra.mxu0 %v629
  %745 = vmatpush.msra.mxu0 %v625
  %746 = vmatpush.msra.mxu0 %v621
  %747 = vmatpush.msra.mxu0 %v617
  %748 = vmatpush.msra.mxu0 %v613
  %749 = vmatpush.msra.mxu0 %v609
  %750 = vmatpush.msra.mxu0 %v605
  %751 = vmatpush.msra.mxu0 %v601
  %752 = vmatpush.msra.mxu0 %v597
  %753 = vmatpush.msra.mxu0 %v593
  %754 = vmatpush.msra.mxu0 %v589
  %755 = vmatpush.msra.mxu0 %v585
  %756 = vmatpush.msra.mxu0 %v581
  %757 = vmatpush.msra.mxu0 %v577
  %758 = vmatpush.msra.mxu0 %v573
  %759 = vmatmul.f32.gmra.mxu0 %v738
  %v760 = vpop.f32.mrf.mxu0
  %v761 = vadd.f32 0.0, %v760
  %762 = vdwg.mxu0
  %763 = vmatpush.msra.mxu0 %v634
  %764 = vmatpush.msra.mxu0 %v630
  %765 = vmatpush.msra.mxu0 %v626
  %766 = vmatpush.msra.mxu0 %v622
  %767 = vmatpush.msra.mxu0 %v618
  %768 = vmatpush.msra.mxu0 %v614
  %769 = vmatpush.msra.mxu0 %v610
  %770 = vmatpush.msra.mxu0 %v606
  %771 = vmatpush.msra.mxu0 %v602
  %772 = vmatpush.msra.mxu0 %v598
  %773 = vmatpush.msra.mxu0 %v594
  %774 = vmatpush.msra.mxu0 %v590
  %775 = vmatpush.msra.mxu0 %v586
  %776 = vmatpush.msra.mxu0 %v582
  %777 = vmatpush.msra.mxu0 %v578
  %778 = vmatpush.msra.mxu0 %v574
  %779 = vmatmul.f32.gmra.mxu0 %v738
  %v780 = vpop.f32.mrf.mxu0
  %v781 = vadd.f32 0.0, %v780
  %782 = vdwg.mxu0
  %783 = vmatpush.msra.mxu0 %v635
  %784 = vmatpush.msra.mxu0 %v631
  %785 = vmatpush.msra.mxu0 %v627
  %786 = vmatpush.msra.mxu0 %v623
  %787 = vmatpush.msra.mxu0 %v619
  %788 = vmatpush.msra.mxu0 %v615
  %789 = vmatpush.msra.mxu0 %v611
  %790 = vmatpush.msra.mxu0 %v607
  %791 = vmatpush.msra.mxu0 %v603
  %792 = vmatpush.msra.mxu0 %v599
  %793 = vmatpush.msra.mxu0 %v595
  %794 = vmatpush.msra.mxu0 %v591
  %795 = vmatpush.msra.mxu0 %v587
  %796 = vmatpush.msra.mxu0 %v583
  %797 = vmatpush.msra.mxu0 %v579
  %798 = vmatpush.msra.mxu0 %v575
  %799 = vmatmul.f32.gmra.mxu0 %v738
  %v800 = vpop.f32.mrf.mxu0
  %v801 = vadd.f32 0.0, %v800
  %802 = vdwg.mxu0
  %803 = vmatpush.msra.mxu0 %v636
  %804 = vmatpush.msra.mxu0 %v632
  %805 = vmatpush.msra.mxu0 %v628
  %806 = vmatpush.msra.mxu0 %v624
  %807 = vmatpush.msra.mxu0 %v620
  %808 = vmatpush.msra.mxu0 %v616
  %809 = vmatpush.msra.mxu0 %v612
  %810 = vmatpush.msra.mxu0 %v608
  %811 = vmatpush.msra.mxu0 %v604
  %812 = vmatpush.msra.mxu0 %v600
  %813 = vmatpush.msra.mxu0 %v596
  %814 = vmatpush.msra.mxu0 %v592
  %815 = vmatpush.msra.mxu0 %v588
  %816 = vmatpush.msra.mxu0 %v584
  %817 = vmatpush.msra.mxu0 %v580
  %818 = vmatpush.msra.mxu0 %v576
  %819 = vmatmul.f32.gmra.mxu0 %v738
  %v820 = vpop.f32.mrf.mxu0
  %v821 = vadd.f32 0.0, %v820
  %822 = vdwg.mxu0
  %v823 = vadd.f32 %v739, %v761
  %v824 = vadd.f32 %v740, %v781
  %v825 = vadd.f32 %v741, %v801
  %v826 = vadd.f32 %v742, %v821
  %v827 = vmul.f32 %v823, 0.5
  %v828 = vtanh.pop %v827
  %v829 = vmul.f32 %v828, 0.5
  %v830 = vadd.f32 %v829, 0.5
  %v831 = vmul.f32 %v824, 0.5
  %v832 = vtanh.pop %v831
  %v833 = vmul.f32 %v832, 0.5
  %v834 = vadd.f32 %v833, 0.5
  %v835 = vtanh.pop %v825
  %v836 = vmul.f32 %v826, 0.5
  %v837 = vtanh.pop %v836
  %v838 = vmul.f32 %v837, 0.5
  %v839 = vadd.f32 %v838, 0.5
  %v840 = vmul.f32 %v834, %v736
  %v841 = vmul.f32 %v830, %v835
  %v842 = vadd.f32 %v840, %v841
  %v843 = vtanh.pop %v842
  %v844 = vmul.f32 %v839, %v843
  %v845 = vld [vmem:[#allocation2 + $0x40] sm:$0xff]
  %v846 = vld [vmem:[#allocation2 + $0x48] sm:$0xff]
  %v847 = vld [vmem:[#allocation2 + $0x50] sm:$0xff]
  %v848 = vld [vmem:[#allocation2 + $0x58] sm:$0xff]
  %849 = vmatpush.msra.mxu0 %v633
  %850 = vmatpush.msra.mxu0 %v629
  %851 = vmatpush.msra.mxu0 %v625
  %852 = vmatpush.msra.mxu0 %v621
  %853 = vmatpush.msra.mxu0 %v617
  %854 = vmatpush.msra.mxu0 %v613
  %855 = vmatpush.msra.mxu0 %v609
  %856 = vmatpush.msra.mxu0 %v605
  %857 = vmatpush.msra.mxu0 %v601
  %858 = vmatpush.msra.mxu0 %v597
  %859 = vmatpush.msra.mxu0 %v593
  %860 = vmatpush.msra.mxu0 %v589
  %861 = vmatpush.msra.mxu0 %v585
  %862 = vmatpush.msra.mxu0 %v581
  %863 = vmatpush.msra.mxu0 %v577
  %864 = vmatpush.msra.mxu0 %v573
  %865 = vmatmul.f32.gmra.mxu0 %v844
  %v866 = vpop.f32.mrf.mxu0
  %v867 = vadd.f32 0.0, %v866
  %868 = vdwg.mxu0
  %869 = vmatpush.msra.mxu0 %v634
  %870 = vmatpush.msra.mxu0 %v630
  %871 = vmatpush.msra.mxu0 %v626
  %872 = vmatpush.msra.mxu0 %v622
  %873 = vmatpush.msra.mxu0 %v618
  %874 = vmatpush.msra.mxu0 %v614
  %875 = vmatpush.msra.mxu0 %v610
  %876 = vmatpush.msra.mxu0 %v606
  %877 = vmatpush.msra.mxu0 %v602
  %878 = vmatpush.msra.mxu0 %v598
  %879 = vmatpush.msra.mxu0 %v594
  %880 = vmatpush.msra.mxu0 %v590
  %881 = vmatpush.msra.mxu0 %v586
  %882 = vmatpush.msra.mxu0 %v582
  %883 = vmatpush.msra.mxu0 %v578
  %884 = vmatpush.msra.mxu0 %v574
  %885 = vmatmul.f32.gmra.mxu0 %v844
  %v886 = vpop.f32.mrf.mxu0
  %v887 = vadd.f32 0.0, %v886
  %888 = vdwg.mxu0
  %889 = vmatpush.msra.mxu0 %v635
  %890 = vmatpush.msra.mxu0 %v631
  %891 = vmatpush.msra.mxu0 %v627
  %892 = vmatpush.msra.mxu0 %v623
  %893 = vmatpush.msra.mxu0 %v619
  %894 = vmatpush.msra.mxu0 %v615
  %895 = vmatpush.msra.mxu0 %v611
  %896 = vmatpush.msra.mxu0 %v607
  %897 = vmatpush.msra.mxu0 %v603
  %898 = vmatpush.msra.mxu0 %v599
  %899 = vmatpush.msra.mxu0 %v595
  %900 = vmatpush.msra.mxu0 %v591
  %901 = vmatpush.msra.mxu0 %v587
  %902 = vmatpush.msra.mxu0 %v583
  %903 = vmatpush.msra.mxu0 %v579
  %904 = vmatpush.msra.mxu0 %v575
  %905 = vmatmul.f32.gmra.mxu0 %v844
  %v906 = vpop.f32.mrf.mxu0
  %v907 = vadd.f32 0.0, %v906
  %908 = vdwg.mxu0
  %909 = vmatpush.msra.mxu0 %v636
  %910 = vmatpush.msra.mxu0 %v632
  %911 = vmatpush.msra.mxu0 %v628
  %912 = vmatpush.msra.mxu0 %v624
  %913 = vmatpush.msra.mxu0 %v620
  %914 = vmatpush.msra.mxu0 %v616
  %915 = vmatpush.msra.mxu0 %v612
  %916 = vmatpush.msra.mxu0 %v608
  %917 = vmatpush.msra.mxu0 %v604
  %918 = vmatpush.msra.mxu0 %v600
  %919 = vmatpush.msra.mxu0 %v596
  %920 = vmatpush.msra.mxu0 %v592
  %921 = vmatpush.msra.mxu0 %v588
  %922 = vmatpush.msra.mxu0 %v584
  %923 = vmatpush.msra.mxu0 %v580
  %924 = vmatpush.msra.mxu0 %v576
  %925 = vmatmul.f32.gmra.mxu0 %v844
  %v926 = vpop.f32.mrf.mxu0
  %v927 = vadd.f32 0.0, %v926
  %928 = vdwg.mxu0
  %v929 = vadd.f32 %v845, %v867
  %v930 = vadd.f32 %v846, %v887
  %v931 = vadd.f32 %v847, %v907
  %v932 = vadd.f32 %v848, %v927
  %v933 = vmul.f32 %v929, 0.5
  %v934 = vtanh.pop %v933
  %v935 = vmul.f32 %v934, 0.5
  %v936 = vadd.f32 %v935, 0.5
  %v937 = vmul.f32 %v930, 0.5
  %v938 = vtanh.pop %v937
  %v939 = vmul.f32 %v938, 0.5
  %v940 = vadd.f32 %v939, 0.5
  %v941 = vtanh.pop %v931
  %v942 = vmul.f32 %v932, 0.5
  %v943 = vtanh.pop %v942
  %v944 = vmul.f32 %v943, 0.5
  %v945 = vadd.f32 %v944, 0.5
  %v946 = vmul.f32 %v940, %v842
  %v947 = vmul.f32 %v936, %v941
  %v948 = vadd.f32 %v946, %v947
  %v949 = vtanh.pop %v948
  %v950 = vmul.f32 %v945, %v949
  %v951 = vld [vmem:[#allocation2 + $0x60] sm:$0xff]
  %v952 = vld [vmem:[#allocation2 + $0x68] sm:$0xff]
  %v953 = vld [vmem:[#allocation2 + $0x70] sm:$0xff]
  %v954 = vld [vmem:[#allocation2 + $0x78] sm:$0xff]
  %955 = vmatpush.msra.mxu0 %v633
  %956 = vmatpush.msra.mxu0 %v629
  %957 = vmatpush.msra.mxu0 %v625
  %958 = vmatpush.msra.mxu0 %v621
  %959 = vmatpush.msra.mxu0 %v617
  %960 = vmatpush.msra.mxu0 %v613
  %961 = vmatpush.msra.mxu0 %v609
  %962 = vmatpush.msra.mxu0 %v605
  %963 = vmatpush.msra.mxu0 %v601
  %964 = vmatpush.msra.mxu0 %v597
  %965 = vmatpush.msra.mxu0 %v593
  %966 = vmatpush.msra.mxu0 %v589
  %967 = vmatpush.msra.mxu0 %v585
  %968 = vmatpush.msra.mxu0 %v581
  %969 = vmatpush.msra.mxu0 %v577
  %970 = vmatpush.msra.mxu0 %v573
  %971 = vmatmul.f32.gmra.mxu0 %v950
  %v972 = vpop.f32.mrf.mxu0
  %v973 = vadd.f32 0.0, %v972
  %974 = vdwg.mxu0
  %975 = vmatpush.msra.mxu0 %v634
  %976 = vmatpush.msra.mxu0 %v630
  %977 = vmatpush.msra.mxu0 %v626
  %978 = vmatpush.msra.mxu0 %v622
  %979 = vmatpush.msra.mxu0 %v618
  %980 = vmatpush.msra.mxu0 %v614
  %981 = vmatpush.msra.mxu0 %v610
  %982 = vmatpush.msra.mxu0 %v606
  %983 = vmatpush.msra.mxu0 %v602
  %984 = vmatpush.msra.mxu0 %v598
  %985 = vmatpush.msra.mxu0 %v594
  %986 = vmatpush.msra.mxu0 %v590
  %987 = vmatpush.msra.mxu0 %v586
  %988 = vmatpush.msra.mxu0 %v582
  %989 = vmatpush.msra.mxu0 %v578
  %990 = vmatpush.msra.mxu0 %v574
  %991 = vmatmul.f32.gmra.mxu0 %v950
  %v992 = vpop.f32.mrf.mxu0
  %v993 = vadd.f32 0.0, %v992
  %994 = vdwg.mxu0
  %995 = vmatpush.msra.mxu0 %v635
  %996 = vmatpush.msra.mxu0 %v631
  %997 = vmatpush.msra.mxu0 %v627
  %998 = vmatpush.msra.mxu0 %v623
  %999 = vmatpush.msra.mxu0 %v619
  %1000 = vmatpush.msra.mxu0 %v615
  %1001 = vmatpush.msra.mxu0 %v611
  %1002 = vmatpush.msra.mxu0 %v607
  %1003 = vmatpush.msra.mxu0 %v603
  %1004 = vmatpush.msra.mxu0 %v599
  %1005 = vmatpush.msra.mxu0 %v595
  %1006 = vmatpush.msra.mxu0 %v591
  %1007 = vmatpush.msra.mxu0 %v587
  %1008 = vmatpush.msra.mxu0 %v583
  %1009 = vmatpush.msra.mxu0 %v579
  %1010 = vmatpush.msra.mxu0 %v575
  %1011 = vmatmul.f32.gmra.mxu0 %v950
  %v1012 = vpop.f32.mrf.mxu0
  %v1013 = vadd.f32 0.0, %v1012
  %1014 = vdwg.mxu0
  %1015 = vmatpush.msra.mxu0 %v636
  %1016 = vmatpush.msra.mxu0 %v632
  %1017 = vmatpush.msra.mxu0 %v628
  %1018 = vmatpush.msra.mxu0 %v624
  %1019 = vmatpush.msra.mxu0 %v620
  %1020 = vmatpush.msra.mxu0 %v616
  %1021 = vmatpush.msra.mxu0 %v612
  %1022 = vmatpush.msra.mxu0 %v608
  %1023 = vmatpush.msra.mxu0 %v604
  %1024 = vmatpush.msra.mxu0 %v600
  %1025 = vmatpush.msra.mxu0 %v596
  %1026 = vmatpush.msra.mxu0 %v592
  %1027 = vmatpush.msra.mxu0 %v588
  %1028 = vmatpush.msra.mxu0 %v584
  %1029 = vmatpush.msra.mxu0 %v580
  %1030 = vmatpush.msra.mxu0 %v576
  %1031 = vmatmul.f32.gmra.mxu0 %v950
  %v1032 = vpop.f32.mrf.mxu0
  %v1033 = vadd.f32 0.0, %v1032
  %1034 = vdwg.mxu0
  %v1035 = vadd.f32 %v951, %v973
  %v1036 = vadd.f32 %v952, %v993
  %v1037 = vadd.f32 %v953, %v1013
  %v1038 = vadd.f32 %v954, %v1033
  %v1039 = vmul.f32 %v1035, 0.5
  %v1040 = vtanh.pop %v1039
  %v1041 = vmul.f32 %v1040, 0.5
  %v1042 = vadd.f32 %v1041, 0.5
  %v1043 = vmul.f32 %v1036, 0.5
  %v1044 = vtanh.pop %v1043
  %v1045 = vmul.f32 %v1044, 0.5
  %v1046 = vadd.f32 %v1045, 0.5
  %v1047 = vtanh.pop %v1037
  %v1048 = vmul.f32 %v1038, 0.5
  %v1049 = vtanh.pop %v1048
  %v1050 = vmul.f32 %v1049, 0.5
  %v1051 = vadd.f32 %v1050, 0.5
  %v1052 = vmul.f32 %v1046, %v948
  %v1053 = vmul.f32 %v1042, %v1047
  %v1054 = vadd.f32 %v1052, %v1053
  %v1055 = vtanh.pop %v1054
  %v1056 = vmul.f32 %v1051, %v1055
  %v1057 = vld [vmem:[#allocation4] sm:$0xff]
  %v1058 = vld [vmem:[#allocation4 + $0x8] sm:$0xff]
  %v1059 = vld [vmem:[#allocation4 + $0x10] sm:$0xff]
  %v1060 = vld [vmem:[#allocation4 + $0x18] sm:$0xff]
  %v1061 = vld [vmem:[%s8] sm:$0xff]
  %v1062 = vld [vmem:[%s8 + $0x8] sm:$0xff]
  %v1063 = vld [vmem:[%s8 + $0x10] sm:$0xff]
  %v1064 = vld [vmem:[%s8 + $0x18] sm:$0xff]
  %v1065 = vld [vmem:[%s8 + $0x20] sm:$0xff]
  %v1066 = vld [vmem:[%s8 + $0x28] sm:$0xff]
  %v1067 = vld [vmem:[%s8 + $0x30] sm:$0xff]
  %v1068 = vld [vmem:[%s8 + $0x38] sm:$0xff]
  %v1069 = vld [vmem:[%s8 + $0x40] sm:$0xff]
  %v1070 = vld [vmem:[%s8 + $0x48] sm:$0xff]
  %v1071 = vld [vmem:[%s8 + $0x50] sm:$0xff]
  %v1072 = vld [vmem:[%s8 + $0x58] sm:$0xff]
  %v1073 = vld [vmem:[%s8 + $0x60] sm:$0xff]
  %v1074 = vld [vmem:[%s8 + $0x68] sm:$0xff]
  %v1075 = vld [vmem:[%s8 + $0x70] sm:$0xff]
  %v1076 = vld [vmem:[%s8 + $0x78] sm:$0xff]
  %v1077 = vld [vmem:[%s8 + $0x80] sm:$0xff]
  %v1078 = vld [vmem:[%s8 + $0x88] sm:$0xff]
  %v1079 = vld [vmem:[%s8 + $0x90] sm:$0xff]
  %v1080 = vld [vmem:[%s8 + $0x98] sm:$0xff]
  %v1081 = vld [vmem:[%s8 + $0xa0] sm:$0xff]
  %v1082 = vld [vmem:[%s8 + $0xa8] sm:$0xff]
  %v1083 = vld [vmem:[%s8 + $0xb0] sm:$0xff]
  %v1084 = vld [vmem:[%s8 + $0xb8] sm:$0xff]
  %v1085 = vld [vmem:[%s8 + $0xc0] sm:$0xff]
  %v1086 = vld [vmem:[%s8 + $0xc8] sm:$0xff]
  %v1087 = vld [vmem:[%s8 + $0xd0] sm:$0xff]
  %v1088 = vld [vmem:[%s8 + $0xd8] sm:$0xff]
  %v1089 = vld [vmem:[%s8 + $0xe0] sm:$0xff]
  %v1090 = vld [vmem:[%s8 + $0xe8] sm:$0xff]
  %v1091 = vld [vmem:[%s8 + $0xf0] sm:$0xff]
  %v1092 = vld [vmem:[%s8 + $0xf8] sm:$0xff]
  %v1093 = vld [vmem:[%s8 + $0x100] sm:$0xff]
  %v1094 = vld [vmem:[%s8 + $0x108] sm:$0xff]
  %v1095 = vld [vmem:[%s8 + $0x110] sm:$0xff]
  %v1096 = vld [vmem:[%s8 + $0x118] sm:$0xff]
  %v1097 = vld [vmem:[%s8 + $0x120] sm:$0xff]
  %v1098 = vld [vmem:[%s8 + $0x128] sm:$0xff]
  %v1099 = vld [vmem:[%s8 + $0x130] sm:$0xff]
  %v1100 = vld [vmem:[%s8 + $0x138] sm:$0xff]
  %v1101 = vld [vmem:[%s8 + $0x140] sm:$0xff]
  %v1102 = vld [vmem:[%s8 + $0x148] sm:$0xff]
  %v1103 = vld [vmem:[%s8 + $0x150] sm:$0xff]
  %v1104 = vld [vmem:[%s8 + $0x158] sm:$0xff]
  %v1105 = vld [vmem:[%s8 + $0x160] sm:$0xff]
  %v1106 = vld [vmem:[%s8 + $0x168] sm:$0xff]
  %v1107 = vld [vmem:[%s8 + $0x170] sm:$0xff]
  %v1108 = vld [vmem:[%s8 + $0x178] sm:$0xff]
  %v1109 = vld [vmem:[%s8 + $0x180] sm:$0xff]
  %v1110 = vld [vmem:[%s8 + $0x188] sm:$0xff]
  %v1111 = vld [vmem:[%s8 + $0x190] sm:$0xff]
  %v1112 = vld [vmem:[%s8 + $0x198] sm:$0xff]
  %v1113 = vld [vmem:[%s8 + $0x1a0] sm:$0xff]
  %v1114 = vld [vmem:[%s8 + $0x1a8] sm:$0xff]
  %v1115 = vld [vmem:[%s8 + $0x1b0] sm:$0xff]
  %v1116 = vld [vmem:[%s8 + $0x1b8] sm:$0xff]
  %v1117 = vld [vmem:[%s8 + $0x1c0] sm:$0xff]
  %v1118 = vld [vmem:[%s8 + $0x1c8] sm:$0xff]
  %v1119 = vld [vmem:[%s8 + $0x1d0] sm:$0xff]
  %v1120 = vld [vmem:[%s8 + $0x1d8] sm:$0xff]
  %v1121 = vld [vmem:[%s8 + $0x1e0] sm:$0xff]
  %v1122 = vld [vmem:[%s8 + $0x1e8] sm:$0xff]
  %v1123 = vld [vmem:[%s8 + $0x1f0] sm:$0xff]
  %v1124 = vld [vmem:[%s8 + $0x1f8] sm:$0xff]
  %1125 = vmatpush.msra.mxu0 %v1121
  %1126 = vmatpush.msra.mxu0 %v1117
  %1127 = vmatpush.msra.mxu0 %v1113
  %1128 = vmatpush.msra.mxu0 %v1109
  %1129 = vmatpush.msra.mxu0 %v1105
  %1130 = vmatpush.msra.mxu0 %v1101
  %1131 = vmatpush.msra.mxu0 %v1097
  %1132 = vmatpush.msra.mxu0 %v1093
  %1133 = vmatpush.msra.mxu0 %v1089
  %1134 = vmatpush.msra.mxu0 %v1085
  %1135 = vmatpush.msra.mxu0 %v1081
  %1136 = vmatpush.msra.mxu0 %v1077
  %1137 = vmatpush.msra.mxu0 %v1073
  %1138 = vmatpush.msra.mxu0 %v1069
  %1139 = vmatpush.msra.mxu0 %v1065
  %1140 = vmatpush.msra.mxu0 %v1061
  %1141 = vmatmul.f32.gmra.mxu0 %v1056
  %v1142 = vpop.f32.mrf.mxu0
  %v1143 = vadd.f32 0.0, %v1142
  %1144 = vdwg.mxu0
  %1145 = vmatpush.msra.mxu0 %v1122
  %1146 = vmatpush.msra.mxu0 %v1118
  %1147 = vmatpush.msra.mxu0 %v1114
  %1148 = vmatpush.msra.mxu0 %v1110
  %1149 = vmatpush.msra.mxu0 %v1106
  %1150 = vmatpush.msra.mxu0 %v1102
  %1151 = vmatpush.msra.mxu0 %v1098
  %1152 = vmatpush.msra.mxu0 %v1094
  %1153 = vmatpush.msra.mxu0 %v1090
  %1154 = vmatpush.msra.mxu0 %v1086
  %1155 = vmatpush.msra.mxu0 %v1082
  %1156 = vmatpush.msra.mxu0 %v1078
  %1157 = vmatpush.msra.mxu0 %v1074
  %1158 = vmatpush.msra.mxu0 %v1070
  %1159 = vmatpush.msra.mxu0 %v1066
  %1160 = vmatpush.msra.mxu0 %v1062
  %1161 = vmatmul.f32.gmra.mxu0 %v1056
  %v1162 = vpop.f32.mrf.mxu0
  %v1163 = vadd.f32 0.0, %v1162
  %1164 = vdwg.mxu0
  %1165 = vmatpush.msra.mxu0 %v1123
  %1166 = vmatpush.msra.mxu0 %v1119
  %1167 = vmatpush.msra.mxu0 %v1115
  %1168 = vmatpush.msra.mxu0 %v1111
  %1169 = vmatpush.msra.mxu0 %v1107
  %1170 = vmatpush.msra.mxu0 %v1103
  %1171 = vmatpush.msra.mxu0 %v1099
  %1172 = vmatpush.msra.mxu0 %v1095
  %1173 = vmatpush.msra.mxu0 %v1091
  %1174 = vmatpush.msra.mxu0 %v1087
  %1175 = vmatpush.msra.mxu0 %v1083
  %1176 = vmatpush.msra.mxu0 %v1079
  %1177 = vmatpush.msra.mxu0 %v1075
  %1178 = vmatpush.msra.mxu0 %v1071
  %1179 = vmatpush.msra.mxu0 %v1067
  %1180 = vmatpush.msra.mxu0 %v1063
  %1181 = vmatmul.f32.gmra.mxu0 %v1056
  %v1182 = vpop.f32.mrf.mxu0
  %v1183 = vadd.f32 0.0, %v1182
  %1184 = vdwg.mxu0
  %1185 = vmatpush.msra.mxu0 %v1124
  %1186 = vmatpush.msra.mxu0 %v1120
  %1187 = vmatpush.msra.mxu0 %v1116
  %1188 = vmatpush.msra.mxu0 %v1112
  %1189 = vmatpush.msra.mxu0 %v1108
  %1190 = vmatpush.msra.mxu0 %v1104
  %1191 = vmatpush.msra.mxu0 %v1100
  %1192 = vmatpush.msra.mxu0 %v1096
  %1193 = vmatpush.msra.mxu0 %v1092
  %1194 = vmatpush.msra.mxu0 %v1088
  %1195 = vmatpush.msra.mxu0 %v1084
  %1196 = vmatpush.msra.mxu0 %v1080
  %1197 = vmatpush.msra.mxu0 %v1076
  %1198 = vmatpush.msra.mxu0 %v1072
  %1199 = vmatpush.msra.mxu0 %v1068
  %1200 = vmatpush.msra.mxu0 %v1064
  %1201 = vmatmul.f32.gmra.mxu0 %v1056
  %v1202 = vpop.f32.mrf.mxu0
  %v1203 = vadd.f32 0.0, %v1202
  %1204 = vdwg.mxu0
  %v1205 = vadd.f32 %v1057, %v1143
  %v1206 = vadd.f32 %v1058, %v1163
  %v1207 = vadd.f32 %v1059, %v1183
  %v1208 = vadd.f32 %v1060, %v1203
  %v1209 = vmul.f32 %v1205, 0.5
  %v1210 = vtanh.pop %v1209
  %v1211 = vmul.f32 %v1210, 0.5
  %v1212 = vadd.f32 %v1211, 0.5
  %v1213 = vmul.f32 %v1206, 0.5
  %v1214 = vtanh.pop %v1213
  %v1215 = vmul.f32 %v1214, 0.5
  %v1216 = vadd.f32 %v1215, 0.5
  %v1217 = vtanh.pop %v1207
  %v1218 = vmul.f32 %v1208, 0.5
  %v1219 = vtanh.pop %v1218
  %v1220 = vmul.f32 %v1219, 0.5
  %v1221 = vadd.f32 %v1220, 0.5
  %v1222 = vmul.f32 %v1216, %v1054
  %v1223 = vmul.f32 %v1212, %v1217
  %v1224 = vadd.f32 %v1222, %v1223
  %v1225 = vtanh.pop %v1224
  %v1226 = vmul.f32 %v1221, %v1225
  %v1227 = vld [vmem:[%s9] sm:$0xff]
  %v1228 = vld [vmem:[%s9 + $0x8] sm:$0xff]
  %v1229 = vld [vmem:[%s9 + $0x10] sm:$0xff]
  %v1230 = vld [vmem:[%s9 + $0x18] sm:$0xff]
  %v1231 = vld [vmem:[%s9 + $0x20] sm:$0xff]
  %v1232 = vld [vmem:[%s9 + $0x28] sm:$0xff]
  %v1233 = vld [vmem:[%s9 + $0x30] sm:$0xff]
  %v1234 = vld [vmem:[%s9 + $0x38] sm:$0xff]
  %v1235 = vld [vmem:[%s9 + $0x40] sm:$0xff]
  %v1236 = vld [vmem:[%s9 + $0x48] sm:$0xff]
  %v1237 = vld [vmem:[%s9 + $0x50] sm:$0xff]
  %v1238 = vld [vmem:[%s9 + $0x58] sm:$0xff]
  %v1239 = vld [vmem:[%s9 + $0x60] sm:$0xff]
  %v1240 = vld [vmem:[%s9 + $0x68] sm:$0xff]
  %v1241 = vld [vmem:[%s9 + $0x70] sm:$0xff]
  %v1242 = vld [vmem:[%s9 + $0x78] sm:$0xff]
  %v1243 = vld [vmem:[%s10] sm:$0x1]
  %v1245 = vperm.slane %v1243, 0
  %1247 = vmatpush.msra.mxu0 %v1242
  %1248 = vmatpush.msra.mxu0 %v1241
  %1249 = vmatpush.msra.mxu0 %v1240
  %1250 = vmatpush.msra.mxu0 %v1239
  %1251 = vmatpush.msra.mxu0 %v1238
  %1252 = vmatpush.msra.mxu0 %v1237
  %1253 = vmatpush.msra.mxu0 %v1236
  %1254 = vmatpush.msra.mxu0 %v1235
  %1255 = vmatpush.msra.mxu0 %v1234
  %1256 = vmatpush.msra.mxu0 %v1233
  %1257 = vmatpush.msra.mxu0 %v1232
  %1258 = vmatpush.msra.mxu0 %v1231
  %1259 = vmatpush.msra.mxu0 %v1230
  %1260 = vmatpush.msra.mxu0 %v1229
  %1261 = vmatpush.msra.mxu0 %v1228
  %1262 = vmatpush.msra.mxu0 %v1227
  %1263 = vmatmul.f32.gmra.mxu0 %v1226
  %v1264 = vpop.f32.mrf.mxu0
  %v1265 = vadd.f32 %v1245, %v1264
  %1266 = vdwg.mxu0
  %1267 = vst [vmem:[%s11] sm:$0xff] %v1265
  %v1268 = vld [vmem:[#allocation4 + $0x20] sm:$0xff]
  %v1269 = vld [vmem:[#allocation4 + $0x28] sm:$0xff]
  %v1270 = vld [vmem:[#allocation4 + $0x30] sm:$0xff]
  %v1271 = vld [vmem:[#allocation4 + $0x38] sm:$0xff]
  %v1272 = vld [vmem:[%s8] sm:$0xff]
  %v1273 = vld [vmem:[%s8 + $0x8] sm:$0xff]
  %v1274 = vld [vmem:[%s8 + $0x10] sm:$0xff]
  %v1275 = vld [vmem:[%s8 + $0x18] sm:$0xff]
  %v1276 = vld [vmem:[%s8 + $0x20] sm:$0xff]
  %v1277 = vld [vmem:[%s8 + $0x28] sm:$0xff]
  %v1278 = vld [vmem:[%s8 + $0x30] sm:$0xff]
  %v1279 = vld [vmem:[%s8 + $0x38] sm:$0xff]
  %v1280 = vld [vmem:[%s8 + $0x40] sm:$0xff]
  %v1281 = vld [vmem:[%s8 + $0x48] sm:$0xff]
  %v1282 = vld [vmem:[%s8 + $0x50] sm:$0xff]
  %v1283 = vld [vmem:[%s8 + $0x58] sm:$0xff]
  %v1284 = vld [vmem:[%s8 + $0x60] sm:$0xff]
  %v1285 = vld [vmem:[%s8 + $0x68] sm:$0xff]
  %v1286 = vld [vmem:[%s8 + $0x70] sm:$0xff]
  %v1287 = vld [vmem:[%s8 + $0x78] sm:$0xff]
  %v1288 = vld [vmem:[%s8 + $0x80] sm:$0xff]
  %v1289 = vld [vmem:[%s8 + $0x88] sm:$0xff]
  %v1290 = vld [vmem:[%s8 + $0x90] sm:$0xff]
  %v1291 = vld [vmem:[%s8 + $0x98] sm:$0xff]
  %v1292 = vld [vmem:[%s8 + $0xa0] sm:$0xff]
  %v1293 = vld [vmem:[%s8 + $0xa8] sm:$0xff]
  %v1294 = vld [vmem:[%s8 + $0xb0] sm:$0xff]
  %v1295 = vld [vmem:[%s8 + $0xb8] sm:$0xff]
  %v1296 = vld [vmem:[%s8 + $0xc0] sm:$0xff]
  %v1297 = vld [vmem:[%s8 + $0xc8] sm:$0xff]
  %v1298 = vld [vmem:[%s8 + $0xd0] sm:$0xff]
  %v1299 = vld [vmem:[%s8 + $0xd8] sm:$0xff]
  %v1300 = vld [vmem:[%s8 + $0xe0] sm:$0xff]
  %v1301 = vld [vmem:[%s8 + $0xe8] sm:$0xff]
  %v1302 = vld [vmem:[%s8 + $0xf0] sm:$0xff]
  %v1303 = vld [vmem:[%s8 + $0xf8] sm:$0xff]
  %v1304 = vld [vmem:[%s8 + $0x100] sm:$0xff]
  %v1305 = vld [vmem:[%s8 + $0x108] sm:$0xff]
  %v1306 = vld [vmem:[%s8 + $0x110] sm:$0xff]
  %v1307 = vld [vmem:[%s8 + $0x118] sm:$0xff]
  %v1308 = vld [vmem:[%s8 + $0x120] sm:$0xff]
  %v1309 = vld [vmem:[%s8 + $0x128] sm:$0xff]
  %v1310 = vld [vmem:[%s8 + $0x130] sm:$0xff]
  %v1311 = vld [vmem:[%s8 + $0x138] sm:$0xff]
  %v1312 = vld [vmem:[%s8 + $0x140] sm:$0xff]
  %v1313 = vld [vmem:[%s8 + $0x148] sm:$0xff]
  %v1314 = vld [vmem:[%s8 + $0x150] sm:$0xff]
  %v1315 = vld [vmem:[%s8 + $0x158] sm:$0xff]
  %v1316 = vld [vmem:[%s8 + $0x160] sm:$0xff]
  %v1317 = vld [vmem:[%s8 + $0x168] sm:$0xff]
  %v1318 = vld [vmem:[%s8 + $0x170] sm:$0xff]
  %v1319 = vld [vmem:[%s8 + $0x178] sm:$0xff]
  %v1320 = vld [vmem:[%s8 + $0x180] sm:$0xff]
  %v1321 = vld [vmem:[%s8 + $0x188] sm:$0xff]
  %v1322 = vld [vmem:[%s8 + $0x190] sm:$0xff]
  %v1323 = vld [vmem:[%s8 + $0x198] sm:$0xff]
  %v1324 = vld [vmem:[%s8 + $0x1a0] sm:$0xff]
  %v1325 = vld [vmem:[%s8 + $0x1a8] sm:$0xff]
  %v1326 = vld [vmem:[%s8 + $0x1b0] sm:$0xff]
  %v1327 = vld [vmem:[%s8 + $0x1b8] sm:$0xff]
  %v1328 = vld [vmem:[%s8 + $0x1c0] sm:$0xff]
  %v1329 = vld [vmem:[%s8 + $0x1c8] sm:$0xff]
  %v1330 = vld [vmem:[%s8 + $0x1d0] sm:$0xff]
  %v1331 = vld [vmem:[%s8 + $0x1d8] sm:$0xff]
  %v1332 = vld [vmem:[%s8 + $0x1e0] sm:$0xff]
  %v1333 = vld [vmem:[%s8 + $0x1e8] sm:$0xff]
  %v1334 = vld [vmem:[%s8 + $0x1f0] sm:$0xff]
  %v1335 = vld [vmem:[%s8 + $0x1f8] sm:$0xff]
  %1336 = vmatpush.msra.mxu0 %v1332
  %1337 = vmatpush.msra.mxu0 %v1328
  %1338 = vmatpush.msra.mxu0 %v1324
  %1339 = vmatpush.msra.mxu0 %v1320
  %1340 = vmatpush.msra.mxu0 %v1316
  %1341 = vmatpush.msra.mxu0 %v1312
  %1342 = vmatpush.msra.mxu0 %v1308
  %1343 = vmatpush.msra.mxu0 %v1304
  %1344 = vmatpush.msra.mxu0 %v1300
  %1345 = vmatpush.msra.mxu0 %v1296
  %1346 = vmatpush.msra.mxu0 %v1292
  %1347 = vmatpush.msra.mxu0 %v1288
  %1348 = vmatpush.msra.mxu0 %v1284
  %1349 = vmatpush.msra.mxu0 %v1280
  %1350 = vmatpush.msra.mxu0 %v1276
  %1351 = vmatpush.msra.mxu0 %v1272
  %1352 = vmatmul.f32.gmra.mxu0 %v1226
  %v1353 = vpop.f32.mrf.mxu0
  %v1354 = vadd.f32 0.0, %v1353
  %1355 = vdwg.mxu0
  %1356 = vmatpush.msra.mxu0 %v1333
  %1357 = vmatpush.msra.mxu0 %v1329
  %1358 = vmatpush.msra.mxu0 %v1325
  %1359 = vmatpush.msra.mxu0 %v1321
  %1360 = vmatpush.msra.mxu0 %v1317
  %1361 = vmatpush.msra.mxu0 %v1313
  %1362 = vmatpush.msra.mxu0 %v1309
  %1363 = vmatpush.msra.mxu0 %v1305
  %1364 = vmatpush.msra.mxu0 %v1301
  %1365 = vmatpush.msra.mxu0 %v1297
  %1366 = vmatpush.msra.mxu0 %v1293
  %1367 = vmatpush.msra.mxu0 %v1289
  %1368 = vmatpush.msra.mxu0 %v1285
  %1369 = vmatpush.msra.mxu0 %v1281
  %1370 = vmatpush.msra.mxu0 %v1277
  %1371 = vmatpush.msra.mxu0 %v1273
  %1372 = vmatmul.f32.gmra.mxu0 %v1226
  %v1373 = vpop.f32.mrf.mxu0
  %v1374 = vadd.f32 0.0, %v1373
  %1375 = vdwg.mxu0
  %1376 = vmatpush.msra.mxu0 %v1334
  %1377 = vmatpush.msra.mxu0 %v1330
  %1378 = vmatpush.msra.mxu0 %v1326
  %1379 = vmatpush.msra.mxu0 %v1322
  %1380 = vmatpush.msra.mxu0 %v1318
  %1381 = vmatpush.msra.mxu0 %v1314
  %1382 = vmatpush.msra.mxu0 %v1310
  %1383 = vmatpush.msra.mxu0 %v1306
  %1384 = vmatpush.msra.mxu0 %v1302
  %1385 = vmatpush.msra.mxu0 %v1298
  %1386 = vmatpush.msra.mxu0 %v1294
  %1387 = vmatpush.msra.mxu0 %v1290
  %1388 = vmatpush.msra.mxu0 %v1286
  %1389 = vmatpush.msra.mxu0 %v1282
  %1390 = vmatpush.msra.mxu0 %v1278
  %1391 = vmatpush.msra.mxu0 %v1274
  %1392 = vmatmul.f32.gmra.mxu0 %v1226
  %v1393 = vpop.f32.mrf.mxu0
  %v1394 = vadd.f32 0.0, %v1393
  %1395 = vdwg.mxu0
  %1396 = vmatpush.msra.mxu0 %v1335
  %1397 = vmatpush.msra.mxu0 %v1331
  %1398 = vmatpush.msra.mxu0 %v1327
  %1399 = vmatpush.msra.mxu0 %v1323
  %1400 = vmatpush.msra.mxu0 %v1319
  %1401 = vmatpush.msra.mxu0 %v1315
  %1402 = vmatpush.msra.mxu0 %v1311
  %1403 = vmatpush.msra.mxu0 %v1307
  %1404 = vmatpush.msra.mxu0 %v1303
  %1405 = vmatpush.msra.mxu0 %v1299
  %1406 = vmatpush.msra.mxu0 %v1295
  %1407 = vmatpush.msra.mxu0 %v1291
  %1408 = vmatpush.msra.mxu0 %v1287
  %1409 = vmatpush.msra.mxu0 %v1283
  %1410 = vmatpush.msra.mxu0 %v1279
  %1411 = vmatpush.msra.mxu0 %v1275
  %1412 = vmatmul.f32.gmra.mxu0 %v1226
  %v1413 = vpop.f32.mrf.mxu0
  %v1414 = vadd.f32 0.0, %v1413
  %1415 = vdwg.mxu0
  %v1416 = vadd.f32 %v1268, %v1354
  %v1417 = vadd.f32 %v1269, %v1374
  %v1418 = vadd.f32 %v1270, %v1394
  %v1419 = vadd.f32 %v1271, %v1414
  %v1420 = vmul.f32 %v1416, 0.5
  %v1421 = vtanh.pop %v1420
  %v1422 = vmul.f32 %v1421, 0.5
  %v1423 = vadd.f32 %v1422, 0.5
  %v1424 = vmul.f32 %v1417, 0.5
  %v1425 = vtanh.pop %v1424
  %v1426 = vmul.f32 %v1425, 0.5
  %v1427 = vadd.f32 %v1426, 0.5
  %v1428 = vtanh.pop %v1418
  %v1429 = vmul.f32 %v1419, 0.5
  %v1430 = vtanh.pop %v1429
  %v1431 = vmul.f32 %v1430, 0.5
  %v1432 = vadd.f32 %v1431, 0.5
  %v1433 = vmul.f32 %v1427, %v1224
  %v1434 = vmul.f32 %v1423, %v1428
  %v1435 = vadd.f32 %v1433, %v1434
  %v1436 = vtanh.pop %v1435
  %v1437 = vmul.f32 %v1432, %v1436
  %v1438 = vld [vmem:[%s9] sm:$0xff]
  %v1439 = vld [vmem:[%s9 + $0x8] sm:$0xff]
  %v1440 = vld [vmem:[%s9 + $0x10] sm:$0xff]
  %v1441 = vld [vmem:[%s9 + $0x18] sm:$0xff]
  %v1442 = vld [vmem:[%s9 + $0x20] sm:$0xff]
  %v1443 = vld [vmem:[%s9 + $0x28] sm:$0xff]
  %v1444 = vld [vmem:[%s9 + $0x30] sm:$0xff]
  %v1445 = vld [vmem:[%s9 + $0x38] sm:$0xff]
  %v1446 = vld [vmem:[%s9 + $0x40] sm:$0xff]
  %v1447 = vld [vmem:[%s9 + $0x48] sm:$0xff]
  %v1448 = vld [vmem:[%s9 + $0x50] sm:$0xff]
  %v1449 = vld [vmem:[%s9 + $0x58] sm:$0xff]
  %v1450 = vld [vmem:[%s9 + $0x60] sm:$0xff]
  %v1451 = vld [vmem:[%s9 + $0x68] sm:$0xff]
  %v1452 = vld [vmem:[%s9 + $0x70] sm:$0xff]
  %v1453 = vld [vmem:[%s9 + $0x78] sm:$0xff]
  %v1454 = vld [vmem:[%s10] sm:$0x1]
  %v1456 = vperm.slane %v1454, 0
  %1458 = vmatpush.msra.mxu0 %v1453
  %1459 = vmatpush.msra.mxu0 %v1452
  %1460 = vmatpush.msra.mxu0 %v1451
  %1461 = vmatpush.msra.mxu0 %v1450
  %1462 = vmatpush.msra.mxu0 %v1449
  %1463 = vmatpush.msra.mxu0 %v1448
  %1464 = vmatpush.msra.mxu0 %v1447
  %1465 = vmatpush.msra.mxu0 %v1446
  %1466 = vmatpush.msra.mxu0 %v1445
  %1467 = vmatpush.msra.mxu0 %v1444
  %1468 = vmatpush.msra.mxu0 %v1443
  %1469 = vmatpush.msra.mxu0 %v1442
  %1470 = vmatpush.msra.mxu0 %v1441
  %1471 = vmatpush.msra.mxu0 %v1440
  %1472 = vmatpush.msra.mxu0 %v1439
  %1473 = vmatpush.msra.mxu0 %v1438
  %1474 = vmatmul.f32.gmra.mxu0 %v1437
  %v1475 = vpop.f32.mrf.mxu0
  %v1476 = vadd.f32 %v1456, %v1475
  %1477 = vdwg.mxu0
  %1478 = vst [vmem:[%s11 + $0x8] sm:$0xff] %v1476
  %v1479 = vld [vmem:[#allocation4 + $0x40] sm:$0xff]
  %v1480 = vld [vmem:[#allocation4 + $0x48] sm:$0xff]
  %v1481 = vld [vmem:[#allocation4 + $0x50] sm:$0xff]
  %v1482 = vld [vmem:[#allocation4 + $0x58] sm:$0xff]
  %v1483 = vld [vmem:[%s8] sm:$0xff]
  %v1484 = vld [vmem:[%s8 + $0x8] sm:$0xff]
  %v1485 = vld [vmem:[%s8 + $0x10] sm:$0xff]
  %v1486 = vld [vmem:[%s8 + $0x18] sm:$0xff]
  %v1487 = vld [vmem:[%s8 + $0x20] sm:$0xff]
  %v1488 = vld [vmem:[%s8 + $0x28] sm:$0xff]
  %v1489 = vld [vmem:[%s8 + $0x30] sm:$0xff]
  %v1490 = vld [vmem:[%s8 + $0x38] sm:$0xff]
  %v1491 = vld [vmem:[%s8 + $0x40] sm:$0xff]
  %v1492 = vld [vmem:[%s8 + $0x48] sm:$0xff]
  %v1493 = vld [vmem:[%s8 + $0x50] sm:$0xff]
  %v1494 = vld [vmem:[%s8 + $0x58] sm:$0xff]
  %v1495 = vld [vmem:[%s8 + $0x60] sm:$0xff]
  %v1496 = vld [vmem:[%s8 + $0x68] sm:$0xff]
  %v1497 = vld [vmem:[%s8 + $0x70] sm:$0xff]
  %v1498 = vld [vmem:[%s8 + $0x78] sm:$0xff]
  %v1499 = vld [vmem:[%s8 + $0x80] sm:$0xff]
  %v1500 = vld [vmem:[%s8 + $0x88] sm:$0xff]
  %v1501 = vld [vmem:[%s8 + $0x90] sm:$0xff]
  %v1502 = vld [vmem:[%s8 + $0x98] sm:$0xff]
  %v1503 = vld [vmem:[%s8 + $0xa0] sm:$0xff]
  %v1504 = vld [vmem:[%s8 + $0xa8] sm:$0xff]
  %v1505 = vld [vmem:[%s8 + $0xb0] sm:$0xff]
  %v1506 = vld [vmem:[%s8 + $0xb8] sm:$0xff]
  %v1507 = vld [vmem:[%s8 + $0xc0] sm:$0xff]
  %v1508 = vld [vmem:[%s8 + $0xc8] sm:$0xff]
  %v1509 = vld [vmem:[%s8 + $0xd0] sm:$0xff]
  %v1510 = vld [vmem:[%s8 + $0xd8] sm:$0xff]
  %v1511 = vld [vmem:[%s8 + $0xe0] sm:$0xff]
  %v1512 = vld [vmem:[%s8 + $0xe8] sm:$0xff]
  %v1513 = vld [vmem:[%s8 + $0xf0] sm:$0xff]
  %v1514 = vld [vmem:[%s8 + $0xf8] sm:$0xff]
  %v1515 = vld [vmem:[%s8 + $0x100] sm:$0xff]
  %v1516 = vld [vmem:[%s8 + $0x108] sm:$0xff]
  %v1517 = vld [vmem:[%s8 + $0x110] sm:$0xff]
  %v1518 = vld [vmem:[%s8 + $0x118] sm:$0xff]
  %v1519 = vld [vmem:[%s8 + $0x120] sm:$0xff]
  %v1520 = vld [vmem:[%s8 + $0x128] sm:$0xff]
  %v1521 = vld [vmem:[%s8 + $0x130] sm:$0xff]
  %v1522 = vld [vmem:[%s8 + $0x138] sm:$0xff]
  %v1523 = vld [vmem:[%s8 + $0x140] sm:$0xff]
  %v1524 = vld [vmem:[%s8 + $0x148] sm:$0xff]
  %v1525 = vld [vmem:[%s8 + $0x150] sm:$0xff]
  %v1526 = vld [vmem:[%s8 + $0x158] sm:$0xff]
  %v1527 = vld [vmem:[%s8 + $0x160] sm:$0xff]
  %v1528 = vld [vmem:[%s8 + $0x168] sm:$0xff]
  %v1529 = vld [vmem:[%s8 + $0x170] sm:$0xff]
  %v1530 = vld [vmem:[%s8 + $0x178] sm:$0xff]
  %v1531 = vld [vmem:[%s8 + $0x180] sm:$0xff]
  %v1532 = vld [vmem:[%s8 + $0x188] sm:$0xff]
  %v1533 = vld [vmem:[%s8 + $0x190] sm:$0xff]
  %v1534 = vld [vmem:[%s8 + $0x198] sm:$0xff]
  %v1535 = vld [vmem:[%s8 + $0x1a0] sm:$0xff]
  %v1536 = vld [vmem:[%s8 + $0x1a8] sm:$0xff]
  %v1537 = vld [vmem:[%s8 + $0x1b0] sm:$0xff]
  %v1538 = vld [vmem:[%s8 + $0x1b8] sm:$0xff]
  %v1539 = vld [vmem:[%s8 + $0x1c0] sm:$0xff]
  %v1540 = vld [vmem:[%s8 + $0x1c8] sm:$0xff]
  %v1541 = vld [vmem:[%s8 + $0x1d0] sm:$0xff]
  %v1542 = vld [vmem:[%s8 + $0x1d8] sm:$0xff]
  %v1543 = vld [vmem:[%s8 + $0x1e0] sm:$0xff]
  %v1544 = vld [vmem:[%s8 + $0x1e8] sm:$0xff]
  %v1545 = vld [vmem:[%s8 + $0x1f0] sm:$0xff]
  %v1546 = vld [vmem:[%s8 + $0x1f8] sm:$0xff]
  %1547 = vmatpush.msra.mxu0 %v1543
  %1548 = vmatpush.msra.mxu0 %v1539
  %1549 = vmatpush.msra.mxu0 %v1535
  %1550 = vmatpush.msra.mxu0 %v1531
  %1551 = vmatpush.msra.mxu0 %v1527
  %1552 = vmatpush.msra.mxu0 %v1523
  %1553 = vmatpush.msra.mxu0 %v1519
  %1554 = vmatpush.msra.mxu0 %v1515
  %1555 = vmatpush.msra.mxu0 %v1511
  %1556 = vmatpush.msra.mxu0 %v1507
  %1557 = vmatpush.msra.mxu0 %v1503
  %1558 = vmatpush.msra.mxu0 %v1499
  %1559 = vmatpush.msra.mxu0 %v1495
  %1560 = vmatpush.msra.mxu0 %v1491
  %1561 = vmatpush.msra.mxu0 %v1487
  %1562 = vmatpush.msra.mxu0 %v1483
  %1563 = vmatmul.f32.gmra.mxu0 %v1437
  %v1564 = vpop.f32.mrf.mxu0
  %v1565 = vadd.f32 0.0, %v1564
  %1566 = vdwg.mxu0
  %1567 = vmatpush.msra.mxu0 %v1544
  %1568 = vmatpush.msra.mxu0 %v1540
  %1569 = vmatpush.msra.mxu0 %v1536
  %1570 = vmatpush.msra.mxu0 %v1532
  %1571 = vmatpush.msra.mxu0 %v1528
  %1572 = vmatpush.msra.mxu0 %v1524
  %1573 = vmatpush.msra.mxu0 %v1520
  %1574 = vmatpush.msra.mxu0 %v1516
  %1575 = vmatpush.msra.mxu0 %v1512
  %1576 = vmatpush.msra.mxu0 %v1508
  %1577 = vmatpush.msra.mxu0 %v1504
  %1578 = vmatpush.msra.mxu0 %v1500
  %1579 = vmatpush.msra.mxu0 %v1496
  %1580 = vmatpush.msra.mxu0 %v1492
  %1581 = vmatpush.msra.mxu0 %v1488
  %1582 = vmatpush.msra.mxu0 %v1484
  %1583 = vmatmul.f32.gmra.mxu0 %v1437
  %v1584 = vpop.f32.mrf.mxu0
  %v1585 = vadd.f32 0.0, %v1584
  %1586 = vdwg.mxu0
  %1587 = vmatpush.msra.mxu0 %v1545
  %1588 = vmatpush.msra.mxu0 %v1541
  %1589 = vmatpush.msra.mxu0 %v1537
  %1590 = vmatpush.msra.mxu0 %v1533
  %1591 = vmatpush.msra.mxu0 %v1529
  %1592 = vmatpush.msra.mxu0 %v1525
  %1593 = vmatpush.msra.mxu0 %v1521
  %1594 = vmatpush.msra.mxu0 %v1517
  %1595 = vmatpush.msra.mxu0 %v1513
  %1596 = vmatpush.msra.mxu0 %v1509
  %1597 = vmatpush.msra.mxu0 %v1505
  %1598 = vmatpush.msra.mxu0 %v1501
  %1599 = vmatpush.msra.mxu0 %v1497
  %1600 = vmatpush.msra.mxu0 %v1493
  %1601 = vmatpush.msra.mxu0 %v1489
  %1602 = vmatpush.msra.mxu0 %v1485
  %1603 = vmatmul.f32.gmra.mxu0 %v1437
  %v1604 = vpop.f32.mrf.mxu0
  %v1605 = vadd.f32 0.0, %v1604
  %1606 = vdwg.mxu0
  %1607 = vmatpush.msra.mxu0 %v1546
  %1608 = vmatpush.msra.mxu0 %v1542
  %1609 = vmatpush.msra.mxu0 %v1538
  %1610 = vmatpush.msra.mxu0 %v1534
  %1611 = vmatpush.msra.mxu0 %v1530
  %1612 = vmatpush.msra.mxu0 %v1526
  %1613 = vmatpush.msra.mxu0 %v1522
  %1614 = vmatpush.msra.mxu0 %v1518
  %1615 = vmatpush.msra.mxu0 %v1514
  %1616 = vmatpush.msra.mxu0 %v1510
  %1617 = vmatpush.msra.mxu0 %v1506
  %1618 = vmatpush.msra.mxu0 %v1502
  %1619 = vmatpush.msra.mxu0 %v1498
  %1620 = vmatpush.msra.mxu0 %v1494
  %1621 = vmatpush.msra.mxu0 %v1490
  %1622 = vmatpush.msra.mxu0 %v1486
  %1623 = vmatmul.f32.gmra.mxu0 %v1437
  %v1624 = vpop.f32.mrf.mxu0
  %v1625 = vadd.f32 0.0, %v1624
  %1626 = vdwg.mxu0
  %v1627 = vadd.f32 %v1479, %v1565
  %v1628 = vadd.f32 %v1480, %v1585
  %v1629 = vadd.f32 %v1481, %v1605
  %v1630 = vadd.f32 %v1482, %v1625
  %v1631 = vmul.f32 %v1627, 0.5
  %v1632 = vtanh.pop %v1631
  %v1633 = vmul.f32 %v1632, 0.5
  %v1634 = vadd.f32 %v1633, 0.5
  %v1635 = vmul.f32 %v1628, 0.5
  %v1636 = vtanh.pop %v1635
  %v1637 = vmul.f32 %v1636, 0.5
  %v1638 = vadd.f32 %v1637, 0.5
  %v1639 = vtanh.pop %v1629
  %v1640 = vmul.f32 %v1630, 0.5
  %v1641 = vtanh.pop %v1640
  %v1642 = vmul.f32 %v1641, 0.5
  %v1643 = vadd.f32 %v1642, 0.5
  %v1644 = vmul.f32 %v1638, %v1435
  %v1645 = vmul.f32 %v1634, %v1639
  %v1646 = vadd.f32 %v1644, %v1645
  %v1647 = vtanh.pop %v1646
  %v1648 = vmul.f32 %v1643, %v1647
  %v1649 = vld [vmem:[%s9] sm:$0xff]
  %v1650 = vld [vmem:[%s9 + $0x8] sm:$0xff]
  %v1651 = vld [vmem:[%s9 + $0x10] sm:$0xff]
  %v1652 = vld [vmem:[%s9 + $0x18] sm:$0xff]
  %v1653 = vld [vmem:[%s9 + $0x20] sm:$0xff]
  %v1654 = vld [vmem:[%s9 + $0x28] sm:$0xff]
  %v1655 = vld [vmem:[%s9 + $0x30] sm:$0xff]
  %v1656 = vld [vmem:[%s9 + $0x38] sm:$0xff]
  %v1657 = vld [vmem:[%s9 + $0x40] sm:$0xff]
  %v1658 = vld [vmem:[%s9 + $0x48] sm:$0xff]
  %v1659 = vld [vmem:[%s9 + $0x50] sm:$0xff]
  %v1660 = vld [vmem:[%s9 + $0x58] sm:$0xff]
  %v1661 = vld [vmem:[%s9 + $0x60] sm:$0xff]
  %v1662 = vld [vmem:[%s9 + $0x68] sm:$0xff]
  %v1663 = vld [vmem:[%s9 + $0x70] sm:$0xff]
  %v1664 = vld [vmem:[%s9 + $0x78] sm:$0xff]
  %v1665 = vld [vmem:[%s10] sm:$0x1]
  %v1667 = vperm.slane %v1665, 0
  %1669 = vmatpush.msra.mxu0 %v1664
  %1670 = vmatpush.msra.mxu0 %v1663
  %1671 = vmatpush.msra.mxu0 %v1662
  %1672 = vmatpush.msra.mxu0 %v1661
  %1673 = vmatpush.msra.mxu0 %v1660
  %1674 = vmatpush.msra.mxu0 %v1659
  %1675 = vmatpush.msra.mxu0 %v1658
  %1676 = vmatpush.msra.mxu0 %v1657
  %1677 = vmatpush.msra.mxu0 %v1656
  %1678 = vmatpush.msra.mxu0 %v1655
  %1679 = vmatpush.msra.mxu0 %v1654
  %1680 = vmatpush.msra.mxu0 %v1653
  %1681 = vmatpush.msra.mxu0 %v1652
  %1682 = vmatpush.msra.mxu0 %v1651
  %1683 = vmatpush.msra.mxu0 %v1650
  %1684 = vmatpush.msra.mxu0 %v1649
  %1685 = vmatmul.f32.gmra.mxu0 %v1648
  %v1686 = vpop.f32.mrf.mxu0
  %v1687 = vadd.f32 %v1667, %v1686
  %1688 = vdwg.mxu0
  %1689 = vst [vmem:[%s11 + $0x10] sm:$0xff] %v1687
  %v1690 = vld [vmem:[#allocation4 + $0x60] sm:$0xff]
  %v1691 = vld [vmem:[#allocation4 + $0x68] sm:$0xff]
  %v1692 = vld [vmem:[#allocation4 + $0x70] sm:$0xff]
  %v1693 = vld [vmem:[#allocation4 + $0x78] sm:$0xff]
  %v1694 = vld [vmem:[%s8] sm:$0xff]
  %v1695 = vld [vmem:[%s8 + $0x8] sm:$0xff]
  %v1696 = vld [vmem:[%s8 + $0x10] sm:$0xff]
  %v1697 = vld [vmem:[%s8 + $0x18] sm:$0xff]
  %v1698 = vld [vmem:[%s8 + $0x20] sm:$0xff]
  %v1699 = vld [vmem:[%s8 + $0x28] sm:$0xff]
  %v1700 = vld [vmem:[%s8 + $0x30] sm:$0xff]
  %v1701 = vld [vmem:[%s8 + $0x38] sm:$0xff]
  %v1702 = vld [vmem:[%s8 + $0x40] sm:$0xff]
  %v1703 = vld [vmem:[%s8 + $0x48] sm:$0xff]
  %v1704 = vld [vmem:[%s8 + $0x50] sm:$0xff]
  %v1705 = vld [vmem:[%s8 + $0x58] sm:$0xff]
  %v1706 = vld [vmem:[%s8 + $0x60] sm:$0xff]
  %v1707 = vld [vmem:[%s8 + $0x68] sm:$0xff]
  %v1708 = vld [vmem:[%s8 + $0x70] sm:$0xff]
  %v1709 = vld [vmem:[%s8 + $0x78] sm:$0xff]
  %v1710 = vld [vmem:[%s8 + $0x80] sm:$0xff]
  %v1711 = vld [vmem:[%s8 + $0x88] sm:$0xff]
  %v1712 = vld [vmem:[%s8 + $0x90] sm:$0xff]
  %v1713 = vld [vmem:[%s8 + $0x98] sm:$0xff]
  %v1714 = vld [vmem:[%s8 + $0xa0] sm:$0xff]
  %v1715 = vld [vmem:[%s8 + $0xa8] sm:$0xff]
  %v1716 = vld [vmem:[%s8 + $0xb0] sm:$0xff]
  %v1717 = vld [vmem:[%s8 + $0xb8] sm:$0xff]
  %v1718 = vld [vmem:[%s8 + $0xc0] sm:$0xff]
  %v1719 = vld [vmem:[%s8 + $0xc8] sm:$0xff]
  %v1720 = vld [vmem:[%s8 + $0xd0] sm:$0xff]
  %v1721 = vld [vmem:[%s8 + $0xd8] sm:$0xff]
  %v1722 = vld [vmem:[%s8 + $0xe0] sm:$0xff]
  %v1723 = vld [vmem:[%s8 + $0xe8] sm:$0xff]
  %v1724 = vld [vmem:[%s8 + $0xf0] sm:$0xff]
  %v1725 = vld [vmem:[%s8 + $0xf8] sm:$0xff]
  %v1726 = vld [vmem:[%s8 + $0x100] sm:$0xff]
  %v1727 = vld [vmem:[%s8 + $0x108] sm:$0xff]
  %v1728 = vld [vmem:[%s8 + $0x110] sm:$0xff]
  %v1729 = vld [vmem:[%s8 + $0x118] sm:$0xff]
  %v1730 = vld [vmem:[%s8 + $0x120] sm:$0xff]
  %v1731 = vld [vmem:[%s8 + $0x128] sm:$0xff]
  %v1732 = vld [vmem:[%s8 + $0x130] sm:$0xff]
  %v1733 = vld [vmem:[%s8 + $0x138] sm:$0xff]
  %v1734 = vld [vmem:[%s8 + $0x140] sm:$0xff]
  %v1735 = vld [vmem:[%s8 + $0x148] sm:$0xff]
  %v1736 = vld [vmem:[%s8 + $0x150] sm:$0xff]
  %v1737 = vld [vmem:[%s8 + $0x158] sm:$0xff]
  %v1738 = vld [vmem:[%s8 + $0x160] sm:$0xff]
  %v1739 = vld [vmem:[%s8 + $0x168] sm:$0xff]
  %v1740 = vld [vmem:[%s8 + $0x170] sm:$0xff]
  %v1741 = vld [vmem:[%s8 + $0x178] sm:$0xff]
  %v1742 = vld [vmem:[%s8 + $0x180] sm:$0xff]
  %v1743 = vld [vmem:[%s8 + $0x188] sm:$0xff]
  %v1744 = vld [vmem:[%s8 + $0x190] sm:$0xff]
  %v1745 = vld [vmem:[%s8 + $0x198] sm:$0xff]
  %v1746 = vld [vmem:[%s8 + $0x1a0] sm:$0xff]
  %v1747 = vld [vmem:[%s8 + $0x1a8] sm:$0xff]
  %v1748 = vld [vmem:[%s8 + $0x1b0] sm:$0xff]
  %v1749 = vld [vmem:[%s8 + $0x1b8] sm:$0xff]
  %v1750 = vld [vmem:[%s8 + $0x1c0] sm:$0xff]
  %v1751 = vld [vmem:[%s8 + $0x1c8] sm:$0xff]
  %v1752 = vld [vmem:[%s8 + $0x1d0] sm:$0xff]
  %v1753 = vld [vmem:[%s8 + $0x1d8] sm:$0xff]
  %v1754 = vld [vmem:[%s8 + $0x1e0] sm:$0xff]
  %v1755 = vld [vmem:[%s8 + $0x1e8] sm:$0xff]
  %v1756 = vld [vmem:[%s8 + $0x1f0] sm:$0xff]
  %v1757 = vld [vmem:[%s8 + $0x1f8] sm:$0xff]
  %1758 = vmatpush.msra.mxu0 %v1754
  %1759 = vmatpush.msra.mxu0 %v1750
  %1760 = vmatpush.msra.mxu0 %v1746
  %1761 = vmatpush.msra.mxu0 %v1742
  %1762 = vmatpush.msra.mxu0 %v1738
  %1763 = vmatpush.msra.mxu0 %v1734
  %1764 = vmatpush.msra.mxu0 %v1730
  %1765 = vmatpush.msra.mxu0 %v1726
  %1766 = vmatpush.msra.mxu0 %v1722
  %1767 = vmatpush.msra.mxu0 %v1718
  %1768 = vmatpush.msra.mxu0 %v1714
  %1769 = vmatpush.msra.mxu0 %v1710
  %1770 = vmatpush.msra.mxu0 %v1706
  %1771 = vmatpush.msra.mxu0 %v1702
  %1772 = vmatpush.msra.mxu0 %v1698
  %1773 = vmatpush.msra.mxu0 %v1694
  %1774 = vmatmul.f32.gmra.mxu0 %v1648
  %v1775 = vpop.f32.mrf.mxu0
  %v1776 = vadd.f32 0.0, %v1775
  %1777 = vdwg.mxu0
  %1778 = vmatpush.msra.mxu0 %v1755
  %1779 = vmatpush.msra.mxu0 %v1751
  %1780 = vmatpush.msra.mxu0 %v1747
  %1781 = vmatpush.msra.mxu0 %v1743
  %1782 = vmatpush.msra.mxu0 %v1739
  %1783 = vmatpush.msra.mxu0 %v1735
  %1784 = vmatpush.msra.mxu0 %v1731
  %1785 = vmatpush.msra.mxu0 %v1727
  %1786 = vmatpush.msra.mxu0 %v1723
  %1787 = vmatpush.msra.mxu0 %v1719
  %1788 = vmatpush.msra.mxu0 %v1715
  %1789 = vmatpush.msra.mxu0 %v1711
  %1790 = vmatpush.msra.mxu0 %v1707
  %1791 = vmatpush.msra.mxu0 %v1703
  %1792 = vmatpush.msra.mxu0 %v1699
  %1793 = vmatpush.msra.mxu0 %v1695
  %1794 = vmatmul.f32.gmra.mxu0 %v1648
  %v1795 = vpop.f32.mrf.mxu0
  %v1796 = vadd.f32 0.0, %v1795
  %1797 = vdwg.mxu0
  %1798 = vmatpush.msra.mxu0 %v1756
  %1799 = vmatpush.msra.mxu0 %v1752
  %1800 = vmatpush.msra.mxu0 %v1748
  %1801 = vmatpush.msra.mxu0 %v1744
  %1802 = vmatpush.msra.mxu0 %v1740
  %1803 = vmatpush.msra.mxu0 %v1736
  %1804 = vmatpush.msra.mxu0 %v1732
  %1805 = vmatpush.msra.mxu0 %v1728
  %1806 = vmatpush.msra.mxu0 %v1724
  %1807 = vmatpush.msra.mxu0 %v1720
  %1808 = vmatpush.msra.mxu0 %v1716
  %1809 = vmatpush.msra.mxu0 %v1712
  %1810 = vmatpush.msra.mxu0 %v1708
  %1811 = vmatpush.msra.mxu0 %v1704
  %1812 = vmatpush.msra.mxu0 %v1700
  %1813 = vmatpush.msra.mxu0 %v1696
  %1814 = vmatmul.f32.gmra.mxu0 %v1648
  %v1815 = vpop.f32.mrf.mxu0
  %v1816 = vadd.f32 0.0, %v1815
  %1817 = vdwg.mxu0
  %1818 = vmatpush.msra.mxu0 %v1757
  %1819 = vmatpush.msra.mxu0 %v1753
  %1820 = vmatpush.msra.mxu0 %v1749
  %1821 = vmatpush.msra.mxu0 %v1745
  %1822 = vmatpush.msra.mxu0 %v1741
  %1823 = vmatpush.msra.mxu0 %v1737
  %1824 = vmatpush.msra.mxu0 %v1733
  %1825 = vmatpush.msra.mxu0 %v1729
  %1826 = vmatpush.msra.mxu0 %v1725
  %1827 = vmatpush.msra.mxu0 %v1721
  %1828 = vmatpush.msra.mxu0 %v1717
  %1829 = vmatpush.msra.mxu0 %v1713
  %1830 = vmatpush.msra.mxu0 %v1709
  %1831 = vmatpush.msra.mxu0 %v1705
  %1832 = vmatpush.msra.mxu0 %v1701
  %1833 = vmatpush.msra.mxu0 %v1697
  %1834 = vmatmul.f32.gmra.mxu0 %v1648
  %v1835 = vpop.f32.mrf.mxu0
  %v1836 = vadd.f32 0.0, %v1835
  %1837 = vdwg.mxu0
  %v1838 = vadd.f32 %v1690, %v1776
  %v1839 = vadd.f32 %v1691, %v1796
  %v1840 = vadd.f32 %v1692, %v1816
  %v1841 = vadd.f32 %v1693, %v1836
  %v1842 = vmul.f32 %v1838, 0.5
  %v1843 = vtanh.pop %v1842
  %v1844 = vmul.f32 %v1843, 0.5
  %v1845 = vadd.f32 %v1844, 0.5
  %v1846 = vmul.f32 %v1839, 0.5
  %v1847 = vtanh.pop %v1846
  %v1848 = vmul.f32 %v1847, 0.5
  %v1849 = vadd.f32 %v1848, 0.5
  %v1850 = vtanh.pop %v1840
  %v1851 = vmul.f32 %v1841, 0.5
  %v1852 = vtanh.pop %v1851
  %v1853 = vmul.f32 %v1852, 0.5
  %v1854 = vadd.f32 %v1853, 0.5
  %v1855 = vmul.f32 %v1849, %v1646
  %v1856 = vmul.f32 %v1845, %v1850
  %v1857 = vadd.f32 %v1855, %v1856
  %v1858 = vtanh.pop %v1857
  %v1859 = vmul.f32 %v1854, %v1858
  %v1860 = vld [vmem:[%s9] sm:$0xff]
  %v1861 = vld [vmem:[%s9 + $0x8] sm:$0xff]
  %v1862 = vld [vmem:[%s9 + $0x10] sm:$0xff]
  %v1863 = vld [vmem:[%s9 + $0x18] sm:$0xff]
  %v1864 = vld [vmem:[%s9 + $0x20] sm:$0xff]
  %v1865 = vld [vmem:[%s9 + $0x28] sm:$0xff]
  %v1866 = vld [vmem:[%s9 + $0x30] sm:$0xff]
  %v1867 = vld [vmem:[%s9 + $0x38] sm:$0xff]
  %v1868 = vld [vmem:[%s9 + $0x40] sm:$0xff]
  %v1869 = vld [vmem:[%s9 + $0x48] sm:$0xff]
  %v1870 = vld [vmem:[%s9 + $0x50] sm:$0xff]
  %v1871 = vld [vmem:[%s9 + $0x58] sm:$0xff]
  %v1872 = vld [vmem:[%s9 + $0x60] sm:$0xff]
  %v1873 = vld [vmem:[%s9 + $0x68] sm:$0xff]
  %v1874 = vld [vmem:[%s9 + $0x70] sm:$0xff]
  %v1875 = vld [vmem:[%s9 + $0x78] sm:$0xff]
  %v1876 = vld [vmem:[%s10] sm:$0x1]
  %v1878 = vperm.slane %v1876, 0
  %1880 = vmatpush.msra.mxu0 %v1875
  %1881 = vmatpush.msra.mxu0 %v1874
  %1882 = vmatpush.msra.mxu0 %v1873
  %1883 = vmatpush.msra.mxu0 %v1872
  %1884 = vmatpush.msra.mxu0 %v1871
  %1885 = vmatpush.msra.mxu0 %v1870
  %1886 = vmatpush.msra.mxu0 %v1869
  %1887 = vmatpush.msra.mxu0 %v1868
  %1888 = vmatpush.msra.mxu0 %v1867
  %1889 = vmatpush.msra.mxu0 %v1866
  %1890 = vmatpush.msra.mxu0 %v1865
  %1891 = vmatpush.msra.mxu0 %v1864
  %1892 = vmatpush.msra.mxu0 %v1863
  %1893 = vmatpush.msra.mxu0 %v1862
  %1894 = vmatpush.msra.mxu0 %v1861
  %1895 = vmatpush.msra.mxu0 %v1860
  %1896 = vmatmul.f32.gmra.mxu0 %v1859
  %v1897 = vpop.f32.mrf.mxu0
  %v1898 = vadd.f32 %v1878, %v1897
  %1899 = vdwg.mxu0
  %1900 = vst [vmem:[%s11 + $0x18] sm:$0xff] %v1898
  %v1901 = vld [vmem:[#allocation4 + $0x80] sm:$0xff]
  %v1902 = vld [vmem:[#allocation4 + $0x88] sm:$0xff]
  %v1903 = vld [vmem:[#allocation4 + $0x90] sm:$0xff]
  %v1904 = vld [vmem:[#allocation4 + $0x98] sm:$0xff]
  %v1905 = vld [vmem:[%s8] sm:$0xff]
  %v1906 = vld [vmem:[%s8 + $0x8] sm:$0xff]
  %v1907 = vld [vmem:[%s8 + $0x10] sm:$0xff]
  %v1908 = vld [vmem:[%s8 + $0x18] sm:$0xff]
  %v1909 = vld [vmem:[%s8 + $0x20] sm:$0xff]
  %v1910 = vld [vmem:[%s8 + $0x28] sm:$0xff]
  %v1911 = vld [vmem:[%s8 + $0x30] sm:$0xff]
  %v1912 = vld [vmem:[%s8 + $0x38] sm:$0xff]
  %v1913 = vld [vmem:[%s8 + $0x40] sm:$0xff]
  %v1914 = vld [vmem:[%s8 + $0x48] sm:$0xff]
  %v1915 = vld [vmem:[%s8 + $0x50] sm:$0xff]
  %v1916 = vld [vmem:[%s8 + $0x58] sm:$0xff]
  %v1917 = vld [vmem:[%s8 + $0x60] sm:$0xff]
  %v1918 = vld [vmem:[%s8 + $0x68] sm:$0xff]
  %v1919 = vld [vmem:[%s8 + $0x70] sm:$0xff]
  %v1920 = vld [vmem:[%s8 + $0x78] sm:$0xff]
  %v1921 = vld [vmem:[%s8 + $0x80] sm:$0xff]
  %v1922 = vld [vmem:[%s8 + $0x88] sm:$0xff]
  %v1923 = vld [vmem:[%s8 + $0x90] sm:$0xff]
  %v1924 = vld [vmem:[%s8 + $0x98] sm:$0xff]
  %v1925 = vld [vmem:[%s8 + $0xa0] sm:$0xff]
  %v1926 = vld [vmem:[%s8 + $0xa8] sm:$0xff]
  %v1927 = vld [vmem:[%s8 + $0xb0] sm:$0xff]
  %v1928 = vld [vmem:[%s8 + $0xb8] sm:$0xff]
  %v1929 = vld [vmem:[%s8 + $0xc0] sm:$0xff]
  %v1930 = vld [vmem:[%s8 + $0xc8] sm:$0xff]
  %v1931 = vld [vmem:[%s8 + $0xd0] sm:$0xff]
  %v1932 = vld [vmem:[%s8 + $0xd8] sm:$0xff]
  %v1933 = vld [vmem:[%s8 + $0xe0] sm:$0xff]
  %v1934 = vld [vmem:[%s8 + $0xe8] sm:$0xff]
  %v1935 = vld [vmem:[%s8 + $0xf0] sm:$0xff]
  %v1936 = vld [vmem:[%s8 + $0xf8] sm:$0xff]
  %v1937 = vld [vmem:[%s8 + $0x100] sm:$0xff]
  %v1938 = vld [vmem:[%s8 + $0x108] sm:$0xff]
  %v1939 = vld [vmem:[%s8 + $0x110] sm:$0xff]
  %v1940 = vld [vmem:[%s8 + $0x118] sm:$0xff]
  %v1941 = vld [vmem:[%s8 + $0x120] sm:$0xff]
  %v1942 = vld [vmem:[%s8 + $0x128] sm:$0xff]
  %v1943 = vld [vmem:[%s8 + $0x130] sm:$0xff]
  %v1944 = vld [vmem:[%s8 + $0x138] sm:$0xff]
  %v1945 = vld [vmem:[%s8 + $0x140] sm:$0xff]
  %v1946 = vld [vmem:[%s8 + $0x148] sm:$0xff]
  %v1947 = vld [vmem:[%s8 + $0x150] sm:$0xff]
  %v1948 = vld [vmem:[%s8 + $0x158] sm:$0xff]
  %v1949 = vld [vmem:[%s8 + $0x160] sm:$0xff]
  %v1950 = vld [vmem:[%s8 + $0x168] sm:$0xff]
  %v1951 = vld [vmem:[%s8 + $0x170] sm:$0xff]
  %v1952 = vld [vmem:[%s8 + $0x178] sm:$0xff]
  %v1953 = vld [vmem:[%s8 + $0x180] sm:$0xff]
  %v1954 = vld [vmem:[%s8 + $0x188] sm:$0xff]
  %v1955 = vld [vmem:[%s8 + $0x190] sm:$0xff]
  %v1956 = vld [vmem:[%s8 + $0x198] sm:$0xff]
  %v1957 = vld [vmem:[%s8 + $0x1a0] sm:$0xff]
  %v1958 = vld [vmem:[%s8 + $0x1a8] sm:$0xff]
  %v1959 = vld [vmem:[%s8 + $0x1b0] sm:$0xff]
  %v1960 = vld [vmem:[%s8 + $0x1b8] sm:$0xff]
  %v1961 = vld [vmem:[%s8 + $0x1c0] sm:$0xff]
  %v1962 = vld [vmem:[%s8 + $0x1c8] sm:$0xff]
  %v1963 = vld [vmem:[%s8 + $0x1d0] sm:$0xff]
  %v1964 = vld [vmem:[%s8 + $0x1d8] sm:$0xff]
  %v1965 = vld [vmem:[%s8 + $0x1e0] sm:$0xff]
  %v1966 = vld [vmem:[%s8 + $0x1e8] sm:$0xff]
  %v1967 = vld [vmem:[%s8 + $0x1f0] sm:$0xff]
  %v1968 = vld [vmem:[%s8 + $0x1f8] sm:$0xff]
  %1969 = vmatpush.msra.mxu0 %v1965
  %1970 = vmatpush.msra.mxu0 %v1961
  %1971 = vmatpush.msra.mxu0 %v1957
  %1972 = vmatpush.msra.mxu0 %v1953
  %1973 = vmatpush.msra.mxu0 %v1949
  %1974 = vmatpush.msra.mxu0 %v1945
  %1975 = vmatpush.msra.mxu0 %v1941
  %1976 = vmatpush.msra.mxu0 %v1937
  %1977 = vmatpush.msra.mxu0 %v1933
  %1978 = vmatpush.msra.mxu0 %v1929
  %1979 = vmatpush.msra.mxu0 %v1925
  %1980 = vmatpush.msra.mxu0 %v1921
  %1981 = vmatpush.msra.mxu0 %v1917
  %1982 = vmatpush.msra.mxu0 %v1913
  %1983 = vmatpush.msra.mxu0 %v1909
  %1984 = vmatpush.msra.mxu0 %v1905
  %1985 = vmatmul.f32.gmra.mxu0 %v1859
  %v1986 = vpop.f32.mrf.mxu0
  %v1987 = vadd.f32 0.0, %v1986
  %1988 = vdwg.mxu0
  %1989 = vmatpush.msra.mxu0 %v1966
  %1990 = vmatpush.msra.mxu0 %v1962
  %1991 = vmatpush.msra.mxu0 %v1958
  %1992 = vmatpush.msra.mxu0 %v1954
  %1993 = vmatpush.msra.mxu0 %v1950
  %1994 = vmatpush.msra.mxu0 %v1946
  %1995 = vmatpush.msra.mxu0 %v1942
  %1996 = vmatpush.msra.mxu0 %v1938
  %1997 = vmatpush.msra.mxu0 %v1934
  %1998 = vmatpush.msra.mxu0 %v1930
  %1999 = vmatpush.msra.mxu0 %v1926
  %2000 = vmatpush.msra.mxu0 %v1922
  %2001 = vmatpush.msra.mxu0 %v1918
  %2002 = vmatpush.msra.mxu0 %v1914
  %2003 = vmatpush.msra.mxu0 %v1910
  %2004 = vmatpush.msra.mxu0 %v1906
  %2005 = vmatmul.f32.gmra.mxu0 %v1859
  %v2006 = vpop.f32.mrf.mxu0
  %v2007 = vadd.f32 0.0, %v2006
  %2008 = vdwg.mxu0
  %2009 = vmatpush.msra.mxu0 %v1967
  %2010 = vmatpush.msra.mxu0 %v1963
  %2011 = vmatpush.msra.mxu0 %v1959
  %2012 = vmatpush.msra.mxu0 %v1955
  %2013 = vmatpush.msra.mxu0 %v1951
  %2014 = vmatpush.msra.mxu0 %v1947
  %2015 = vmatpush.msra.mxu0 %v1943
  %2016 = vmatpush.msra.mxu0 %v1939
  %2017 = vmatpush.msra.mxu0 %v1935
  %2018 = vmatpush.msra.mxu0 %v1931
  %2019 = vmatpush.msra.mxu0 %v1927
  %2020 = vmatpush.msra.mxu0 %v1923
  %2021 = vmatpush.msra.mxu0 %v1919
  %2022 = vmatpush.msra.mxu0 %v1915
  %2023 = vmatpush.msra.mxu0 %v1911
  %2024 = vmatpush.msra.mxu0 %v1907
  %2025 = vmatmul.f32.gmra.mxu0 %v1859
  %v2026 = vpop.f32.mrf.mxu0
  %v2027 = vadd.f32 0.0, %v2026
  %2028 = vdwg.mxu0
  %2029 = vmatpush.msra.mxu0 %v1968
  %2030 = vmatpush.msra.mxu0 %v1964
  %2031 = vmatpush.msra.mxu0 %v1960
  %2032 = vmatpush.msra.mxu0 %v1956
  %2033 = vmatpush.msra.mxu0 %v1952
  %2034 = vmatpush.msra.mxu0 %v1948
  %2035 = vmatpush.msra.mxu0 %v1944
  %2036 = vmatpush.msra.mxu0 %v1940
  %2037 = vmatpush.msra.mxu0 %v1936
  %2038 = vmatpush.msra.mxu0 %v1932
  %2039 = vmatpush.msra.mxu0 %v1928
  %2040 = vmatpush.msra.mxu0 %v1924
  %2041 = vmatpush.msra.mxu0 %v1920
  %2042 = vmatpush.msra.mxu0 %v1916
  %2043 = vmatpush.msra.mxu0 %v1912
  %2044 = vmatpush.msra.mxu0 %v1908
  %2045 = vmatmul.f32.gmra.mxu0 %v1859
  %v2046 = vpop.f32.mrf.mxu0
  %v2047 = vadd.f32 0.0, %v2046
  %2048 = vdwg.mxu0
  %v2049 = vadd.f32 %v1901, %v1987
  %v2050 = vadd.f32 %v1902, %v2007
  %v2051 = vadd.f32 %v1903, %v2027
  %v2052 = vadd.f32 %v1904, %v2047
  %v2053 = vmul.f32 %v2049, 0.5
  %v2054 = vtanh.pop %v2053
  %v2055 = vmul.f32 %v2054, 0.5
  %v2056 = vadd.f32 %v2055, 0.5
  %v2057 = vmul.f32 %v2050, 0.5
  %v2058 = vtanh.pop %v2057
  %v2059 = vmul.f32 %v2058, 0.5
  %v2060 = vadd.f32 %v2059, 0.5
  %v2061 = vtanh.pop %v2051
  %v2062 = vmul.f32 %v2052, 0.5
  %v2063 = vtanh.pop %v2062
  %v2064 = vmul.f32 %v2063, 0.5
  %v2065 = vadd.f32 %v2064, 0.5
  %v2066 = vmul.f32 %v2060, %v1857
  %v2067 = vmul.f32 %v2056, %v2061
  %v2068 = vadd.f32 %v2066, %v2067
  %v2069 = vtanh.pop %v2068
  %v2070 = vmul.f32 %v2065, %v2069
  %v2071 = vld [vmem:[%s9] sm:$0xff]
  %v2072 = vld [vmem:[%s9 + $0x8] sm:$0xff]
  %v2073 = vld [vmem:[%s9 + $0x10] sm:$0xff]
  %v2074 = vld [vmem:[%s9 + $0x18] sm:$0xff]
  %v2075 = vld [vmem:[%s9 + $0x20] sm:$0xff]
  %v2076 = vld [vmem:[%s9 + $0x28] sm:$0xff]
  %v2077 = vld [vmem:[%s9 + $0x30] sm:$0xff]
  %v2078 = vld [vmem:[%s9 + $0x38] sm:$0xff]
  %v2079 = vld [vmem:[%s9 + $0x40] sm:$0xff]
  %v2080 = vld [vmem:[%s9 + $0x48] sm:$0xff]
  %v2081 = vld [vmem:[%s9 + $0x50] sm:$0xff]
  %v2082 = vld [vmem:[%s9 + $0x58] sm:$0xff]
  %v2083 = vld [vmem:[%s9 + $0x60] sm:$0xff]
  %v2084 = vld [vmem:[%s9 + $0x68] sm:$0xff]
  %v2085 = vld [vmem:[%s9 + $0x70] sm:$0xff]
  %v2086 = vld [vmem:[%s9 + $0x78] sm:$0xff]
  %v2087 = vld [vmem:[%s10] sm:$0x1]
  %v2089 = vperm.slane %v2087, 0
  %2091 = vmatpush.msra.mxu0 %v2086
  %2092 = vmatpush.msra.mxu0 %v2085
  %2093 = vmatpush.msra.mxu0 %v2084
  %2094 = vmatpush.msra.mxu0 %v2083
  %2095 = vmatpush.msra.mxu0 %v2082
  %2096 = vmatpush.msra.mxu0 %v2081
  %2097 = vmatpush.msra.mxu0 %v2080
  %2098 = vmatpush.msra.mxu0 %v2079
  %2099 = vmatpush.msra.mxu0 %v2078
  %2100 = vmatpush.msra.mxu0 %v2077
  %2101 = vmatpush.msra.mxu0 %v2076
  %2102 = vmatpush.msra.mxu0 %v2075
  %2103 = vmatpush.msra.mxu0 %v2074
  %2104 = vmatpush.msra.mxu0 %v2073
  %2105 = vmatpush.msra.mxu0 %v2072
  %2106 = vmatpush.msra.mxu0 %v2071
  %2107 = vmatmul.f32.gmra.mxu0 %v2070
  %v2108 = vpop.f32.mrf.mxu0
  %v2109 = vadd.f32 %v2089, %v2108
  %2110 = vdwg.mxu0
  %2111 = vst [vmem:[%s11 + $0x20] sm:$0xff] %v2109
  %v2112 = vld [vmem:[#allocation4 + $0xa0] sm:$0xff]
  %v2113 = vld [vmem:[#allocation4 + $0xa8] sm:$0xff]
  %v2114 = vld [vmem:[#allocation4 + $0xb0] sm:$0xff]
  %v2115 = vld [vmem:[#allocation4 + $0xb8] sm:$0xff]
  %v2116 = vld [vmem:[%s8] sm:$0xff]
  %v2117 = vld [vmem:[%s8 + $0x8] sm:$0xff]
  %v2118 = vld [vmem:[%s8 + $0x10] sm:$0xff]
  %v2119 = vld [vmem:[%s8 + $0x18] sm:$0xff]
  %v2120 = vld [vmem:[%s8 + $0x20] sm:$0xff]
  %v2121 = vld [vmem:[%s8 + $0x28] sm:$0xff]
  %v2122 = vld [vmem:[%s8 + $0x30] sm:$0xff]
  %v2123 = vld [vmem:[%s8 + $0x38] sm:$0xff]
  %v2124 = vld [vmem:[%s8 + $0x40] sm:$0xff]
  %v2125 = vld [vmem:[%s8 + $0x48] sm:$0xff]
  %v2126 = vld [vmem:[%s8 + $0x50] sm:$0xff]
  %v2127 = vld [vmem:[%s8 + $0x58] sm:$0xff]
  %v2128 = vld [vmem:[%s8 + $0x60] sm:$0xff]
  %v2129 = vld [vmem:[%s8 + $0x68] sm:$0xff]
  %v2130 = vld [vmem:[%s8 + $0x70] sm:$0xff]
  %v2131 = vld [vmem:[%s8 + $0x78] sm:$0xff]
  %v2132 = vld [vmem:[%s8 + $0x80] sm:$0xff]
  %v2133 = vld [vmem:[%s8 + $0x88] sm:$0xff]
  %v2134 = vld [vmem:[%s8 + $0x90] sm:$0xff]
  %v2135 = vld [vmem:[%s8 + $0x98] sm:$0xff]
  %v2136 = vld [vmem:[%s8 + $0xa0] sm:$0xff]
  %v2137 = vld [vmem:[%s8 + $0xa8] sm:$0xff]
  %v2138 = vld [vmem:[%s8 + $0xb0] sm:$0xff]
  %v2139 = vld [vmem:[%s8 + $0xb8] sm:$0xff]
  %v2140 = vld [vmem:[%s8 + $0xc0] sm:$0xff]
  %v2141 = vld [vmem:[%s8 + $0xc8] sm:$0xff]
  %v2142 = vld [vmem:[%s8 + $0xd0] sm:$0xff]
  %v2143 = vld [vmem:[%s8 + $0xd8] sm:$0xff]
  %v2144 = vld [vmem:[%s8 + $0xe0] sm:$0xff]
  %v2145 = vld [vmem:[%s8 + $0xe8] sm:$0xff]
  %v2146 = vld [vmem:[%s8 + $0xf0] sm:$0xff]
  %v2147 = vld [vmem:[%s8 + $0xf8] sm:$0xff]
  %v2148 = vld [vmem:[%s8 + $0x100] sm:$0xff]
  %v2149 = vld [vmem:[%s8 + $0x108] sm:$0xff]
  %v2150 = vld [vmem:[%s8 + $0x110] sm:$0xff]
  %v2151 = vld [vmem:[%s8 + $0x118] sm:$0xff]
  %v2152 = vld [vmem:[%s8 + $0x120] sm:$0xff]
  %v2153 = vld [vmem:[%s8 + $0x128] sm:$0xff]
  %v2154 = vld [vmem:[%s8 + $0x130] sm:$0xff]
  %v2155 = vld [vmem:[%s8 + $0x138] sm:$0xff]
  %v2156 = vld [vmem:[%s8 + $0x140] sm:$0xff]
  %v2157 = vld [vmem:[%s8 + $0x148] sm:$0xff]
  %v2158 = vld [vmem:[%s8 + $0x150] sm:$0xff]
  %v2159 = vld [vmem:[%s8 + $0x158] sm:$0xff]
  %v2160 = vld [vmem:[%s8 + $0x160] sm:$0xff]
  %v2161 = vld [vmem:[%s8 + $0x168] sm:$0xff]
  %v2162 = vld [vmem:[%s8 + $0x170] sm:$0xff]
  %v2163 = vld [vmem:[%s8 + $0x178] sm:$0xff]
  %v2164 = vld [vmem:[%s8 + $0x180] sm:$0xff]
  %v2165 = vld [vmem:[%s8 + $0x188] sm:$0xff]
  %v2166 = vld [vmem:[%s8 + $0x190] sm:$0xff]
  %v2167 = vld [vmem:[%s8 + $0x198] sm:$0xff]
  %v2168 = vld [vmem:[%s8 + $0x1a0] sm:$0xff]
  %v2169 = vld [vmem:[%s8 + $0x1a8] sm:$0xff]
  %v2170 = vld [vmem:[%s8 + $0x1b0] sm:$0xff]
  %v2171 = vld [vmem:[%s8 + $0x1b8] sm:$0xff]
  %v2172 = vld [vmem:[%s8 + $0x1c0] sm:$0xff]
  %v2173 = vld [vmem:[%s8 + $0x1c8] sm:$0xff]
  %v2174 = vld [vmem:[%s8 + $0x1d0] sm:$0xff]
  %v2175 = vld [vmem:[%s8 + $0x1d8] sm:$0xff]
  %v2176 = vld [vmem:[%s8 + $0x1e0] sm:$0xff]
  %v2177 = vld [vmem:[%s8 + $0x1e8] sm:$0xff]
  %v2178 = vld [vmem:[%s8 + $0x1f0] sm:$0xff]
  %v2179 = vld [vmem:[%s8 + $0x1f8] sm:$0xff]
  %2180 = vmatpush.msra.mxu0 %v2176
  %2181 = vmatpush.msra.mxu0 %v2172
  %2182 = vmatpush.msra.mxu0 %v2168
  %2183 = vmatpush.msra.mxu0 %v2164
  %2184 = vmatpush.msra.mxu0 %v2160
  %2185 = vmatpush.msra.mxu0 %v2156
  %2186 = vmatpush.msra.mxu0 %v2152
  %2187 = vmatpush.msra.mxu0 %v2148
  %2188 = vmatpush.msra.mxu0 %v2144
  %2189 = vmatpush.msra.mxu0 %v2140
  %2190 = vmatpush.msra.mxu0 %v2136
  %2191 = vmatpush.msra.mxu0 %v2132
  %2192 = vmatpush.msra.mxu0 %v2128
  %2193 = vmatpush.msra.mxu0 %v2124
  %2194 = vmatpush.msra.mxu0 %v2120
  %2195 = vmatpush.msra.mxu0 %v2116
  %2196 = vmatmul.f32.gmra.mxu0 %v2070
  %v2197 = vpop.f32.mrf.mxu0
  %v2198 = vadd.f32 0.0, %v2197
  %2199 = vdwg.mxu0
  %2200 = vmatpush.msra.mxu0 %v2177
  %2201 = vmatpush.msra.mxu0 %v2173
  %2202 = vmatpush.msra.mxu0 %v2169
  %2203 = vmatpush.msra.mxu0 %v2165
  %2204 = vmatpush.msra.mxu0 %v2161
  %2205 = vmatpush.msra.mxu0 %v2157
  %2206 = vmatpush.msra.mxu0 %v2153
  %2207 = vmatpush.msra.mxu0 %v2149
  %2208 = vmatpush.msra.mxu0 %v2145
  %2209 = vmatpush.msra.mxu0 %v2141
  %2210 = vmatpush.msra.mxu0 %v2137
  %2211 = vmatpush.msra.mxu0 %v2133
  %2212 = vmatpush.msra.mxu0 %v2129
  %2213 = vmatpush.msra.mxu0 %v2125
  %2214 = vmatpush.msra.mxu0 %v2121
  %2215 = vmatpush.msra.mxu0 %v2117
  %2216 = vmatmul.f32.gmra.mxu0 %v2070
  %v2217 = vpop.f32.mrf.mxu0
  %v2218 = vadd.f32 0.0, %v2217
  %2219 = vdwg.mxu0
  %2220 = vmatpush.msra.mxu0 %v2178
  %2221 = vmatpush.msra.mxu0 %v2174
  %2222 = vmatpush.msra.mxu0 %v2170
  %2223 = vmatpush.msra.mxu0 %v2166
  %2224 = vmatpush.msra.mxu0 %v2162
  %2225 = vmatpush.msra.mxu0 %v2158
  %2226 = vmatpush.msra.mxu0 %v2154
  %2227 = vmatpush.msra.mxu0 %v2150
  %2228 = vmatpush.msra.mxu0 %v2146
  %2229 = vmatpush.msra.mxu0 %v2142
  %2230 = vmatpush.msra.mxu0 %v2138
  %2231 = vmatpush.msra.mxu0 %v2134
  %2232 = vmatpush.msra.mxu0 %v2130
  %2233 = vmatpush.msra.mxu0 %v2126
  %2234 = vmatpush.msra.mxu0 %v2122
  %2235 = vmatpush.msra.mxu0 %v2118
  %2236 = vmatmul.f32.gmra.mxu0 %v2070
  %v2237 = vpop.f32.mrf.mxu0
  %v2238 = vadd.f32 0.0, %v2237
  %2239 = vdwg.mxu0
  %2240 = vmatpush.msra.mxu0 %v2179
  %2241 = vmatpush.msra.mxu0 %v2175
  %2242 = vmatpush.msra.mxu0 %v2171
  %2243 = vmatpush.msra.mxu0 %v2167
  %2244 = vmatpush.msra.mxu0 %v2163
  %2245 = vmatpush.msra.mxu0 %v2159
  %2246 = vmatpush.msra.mxu0 %v2155
  %2247 = vmatpush.msra.mxu0 %v2151
  %2248 = vmatpush.msra.mxu0 %v2147
  %2249 = vmatpush.msra.mxu0 %v2143
  %2250 = vmatpush.msra.mxu0 %v2139
  %2251 = vmatpush.msra.mxu0 %v2135
  %2252 = vmatpush.msra.mxu0 %v2131
  %2253 = vmatpush.msra.mxu0 %v2127
  %2254 = vmatpush.msra.mxu0 %v2123
  %2255 = vmatpush.msra.mxu0 %v2119
  %2256 = vmatmul.f32.gmra.mxu0 %v2070
  %v2257 = vpop.f32.mrf.mxu0
  %v2258 = vadd.f32 0.0, %v2257
  %2259 = vdwg.mxu0
  %v2260 = vadd.f32 %v2112, %v2198
  %v2261 = vadd.f32 %v2113, %v2218
  %v2262 = vadd.f32 %v2114, %v2238
  %v2263 = vadd.f32 %v2115, %v2258
  %v2264 = vmul.f32 %v2260, 0.5
  %v2265 = vtanh.pop %v2264
  %v2266 = vmul.f32 %v2265, 0.5
  %v2267 = vadd.f32 %v2266, 0.5
  %v2268 = vmul.f32 %v2261, 0.5
  %v2269 = vtanh.pop %v2268
  %v2270 = vmul.f32 %v2269, 0.5
  %v2271 = vadd.f32 %v2270, 0.5
  %v2272 = vtanh.pop %v2262
  %v2273 = vmul.f32 %v2263, 0.5
  %v2274 = vtanh.pop %v2273
  %v2275 = vmul.f32 %v2274, 0.5
  %v2276 = vadd.f32 %v2275, 0.5
  %v2277 = vmul.f32 %v2271, %v2068
  %v2278 = vmul.f32 %v2267, %v2272
  %v2279 = vadd.f32 %v2277, %v2278
  %v2280 = vtanh.pop %v2279
  %v2281 = vmul.f32 %v2276, %v2280
  %v2282 = vld [vmem:[%s9] sm:$0xff]
  %v2283 = vld [vmem:[%s9 + $0x8] sm:$0xff]
  %v2284 = vld [vmem:[%s9 + $0x10] sm:$0xff]
  %v2285 = vld [vmem:[%s9 + $0x18] sm:$0xff]
  %v2286 = vld [vmem:[%s9 + $0x20] sm:$0xff]
  %v2287 = vld [vmem:[%s9 + $0x28] sm:$0xff]
  %v2288 = vld [vmem:[%s9 + $0x30] sm:$0xff]
  %v2289 = vld [vmem:[%s9 + $0x38] sm:$0xff]
  %v2290 = vld [vmem:[%s9 + $0x40] sm:$0xff]
  %v2291 = vld [vmem:[%s9 + $0x48] sm:$0xff]
  %v2292 = vld [vmem:[%s9 + $0x50] sm:$0xff]
  %v2293 = vld [vmem:[%s9 + $0x58] sm:$0xff]
  %v2294 = vld [vmem:[%s9 + $0x60] sm:$0xff]
  %v2295 = vld [vmem:[%s9 + $0x68] sm:$0xff]
  %v2296 = vld [vmem:[%s9 + $0x70] sm:$0xff]
  %v2297 = vld [vmem:[%s9 + $0x78] sm:$0xff]
  %v2298 = vld [vmem:[%s10] sm:$0x1]
  %v2300 = vperm.slane %v2298, 0
  %2302 = vmatpush.msra.mxu0 %v2297
  %2303 = vmatpush.msra.mxu0 %v2296
  %2304 = vmatpush.msra.mxu0 %v2295
  %2305 = vmatpush.msra.mxu0 %v2294
  %2306 = vmatpush.msra.mxu0 %v2293
  %2307 = vmatpush.msra.mxu0 %v2292
  %2308 = vmatpush.msra.mxu0 %v2291
  %2309 = vmatpush.msra.mxu0 %v2290
  %2310 = vmatpush.msra.mxu0 %v2289
  %2311 = vmatpush.msra.mxu0 %v2288
  %2312 = vmatpush.msra.mxu0 %v2287
  %2313 = vmatpush.msra.mxu0 %v2286
  %2314 = vmatpush.msra.mxu0 %v2285
  %2315 = vmatpush.msra.mxu0 %v2284
  %2316 = vmatpush.msra.mxu0 %v2283
  %2317 = vmatpush.msra.mxu0 %v2282
  %2318 = vmatmul.f32.gmra.mxu0 %v2281
  %v2319 = vpop.f32.mrf.mxu0
  %v2320 = vadd.f32 %v2300, %v2319
  %2321 = vdwg.mxu0
  %2322 = vst [vmem:[%s11 + $0x28] sm:$0xff] %v2320
  %v2323 = vld [vmem:[#allocation4 + $0xc0] sm:$0xff]
  %v2324 = vld [vmem:[#allocation4 + $0xc8] sm:$0xff]
  %v2325 = vld [vmem:[#allocation4 + $0xd0] sm:$0xff]
  %v2326 = vld [vmem:[#allocation4 + $0xd8] sm:$0xff]
  %v2327 = vld [vmem:[%s8] sm:$0xff]
  %v2328 = vld [vmem:[%s8 + $0x8] sm:$0xff]
  %v2329 = vld [vmem:[%s8 + $0x10] sm:$0xff]
  %v2330 = vld [vmem:[%s8 + $0x18] sm:$0xff]
  %v2331 = vld [vmem:[%s8 + $0x20] sm:$0xff]
  %v2332 = vld [vmem:[%s8 + $0x28] sm:$0xff]
  %v2333 = vld [vmem:[%s8 + $0x30] sm:$0xff]
  %v2334 = vld [vmem:[%s8 + $0x38] sm:$0xff]
  %v2335 = vld [vmem:[%s8 + $0x40] sm:$0xff]
  %v2336 = vld [vmem:[%s8 + $0x48] sm:$0xff]
  %v2337 = vld [vmem:[%s8 + $0x50] sm:$0xff]
  %v2338 = vld [vmem:[%s8 + $0x58] sm:$0xff]
  %v2339 = vld [vmem:[%s8 + $0x60] sm:$0xff]
  %v2340 = vld [vmem:[%s8 + $0x68] sm:$0xff]
  %v2341 = vld [vmem:[%s8 + $0x70] sm:$0xff]
  %v2342 = vld [vmem:[%s8 + $0x78] sm:$0xff]
  %v2343 = vld [vmem:[%s8 + $0x80] sm:$0xff]
  %v2344 = vld [vmem:[%s8 + $0x88] sm:$0xff]
  %v2345 = vld [vmem:[%s8 + $0x90] sm:$0xff]
  %v2346 = vld [vmem:[%s8 + $0x98] sm:$0xff]
  %v2347 = vld [vmem:[%s8 + $0xa0] sm:$0xff]
  %v2348 = vld [vmem:[%s8 + $0xa8] sm:$0xff]
  %v2349 = vld [vmem:[%s8 + $0xb0] sm:$0xff]
  %v2350 = vld [vmem:[%s8 + $0xb8] sm:$0xff]
  %v2351 = vld [vmem:[%s8 + $0xc0] sm:$0xff]
  %v2352 = vld [vmem:[%s8 + $0xc8] sm:$0xff]
  %v2353 = vld [vmem:[%s8 + $0xd0] sm:$0xff]
  %v2354 = vld [vmem:[%s8 + $0xd8] sm:$0xff]
  %v2355 = vld [vmem:[%s8 + $0xe0] sm:$0xff]
  %v2356 = vld [vmem:[%s8 + $0xe8] sm:$0xff]
  %v2357 = vld [vmem:[%s8 + $0xf0] sm:$0xff]
  %v2358 = vld [vmem:[%s8 + $0xf8] sm:$0xff]
  %v2359 = vld [vmem:[%s8 + $0x100] sm:$0xff]
  %v2360 = vld [vmem:[%s8 + $0x108] sm:$0xff]
  %v2361 = vld [vmem:[%s8 + $0x110] sm:$0xff]
  %v2362 = vld [vmem:[%s8 + $0x118] sm:$0xff]
  %v2363 = vld [vmem:[%s8 + $0x120] sm:$0xff]
  %v2364 = vld [vmem:[%s8 + $0x128] sm:$0xff]
  %v2365 = vld [vmem:[%s8 + $0x130] sm:$0xff]
  %v2366 = vld [vmem:[%s8 + $0x138] sm:$0xff]
  %v2367 = vld [vmem:[%s8 + $0x140] sm:$0xff]
  %v2368 = vld [vmem:[%s8 + $0x148] sm:$0xff]
  %v2369 = vld [vmem:[%s8 + $0x150] sm:$0xff]
  %v2370 = vld [vmem:[%s8 + $0x158] sm:$0xff]
  %v2371 = vld [vmem:[%s8 + $0x160] sm:$0xff]
  %v2372 = vld [vmem:[%s8 + $0x168] sm:$0xff]
  %v2373 = vld [vmem:[%s8 + $0x170] sm:$0xff]
  %v2374 = vld [vmem:[%s8 + $0x178] sm:$0xff]
  %v2375 = vld [vmem:[%s8 + $0x180] sm:$0xff]
  %v2376 = vld [vmem:[%s8 + $0x188] sm:$0xff]
  %v2377 = vld [vmem:[%s8 + $0x190] sm:$0xff]
  %v2378 = vld [vmem:[%s8 + $0x198] sm:$0xff]
  %v2379 = vld [vmem:[%s8 + $0x1a0] sm:$0xff]
  %v2380 = vld [vmem:[%s8 + $0x1a8] sm:$0xff]
  %v2381 = vld [vmem:[%s8 + $0x1b0] sm:$0xff]
  %v2382 = vld [vmem:[%s8 + $0x1b8] sm:$0xff]
  %v2383 = vld [vmem:[%s8 + $0x1c0] sm:$0xff]
  %v2384 = vld [vmem:[%s8 + $0x1c8] sm:$0xff]
  %v2385 = vld [vmem:[%s8 + $0x1d0] sm:$0xff]
  %v2386 = vld [vmem:[%s8 + $0x1d8] sm:$0xff]
  %v2387 = vld [vmem:[%s8 + $0x1e0] sm:$0xff]
  %v2388 = vld [vmem:[%s8 + $0x1e8] sm:$0xff]
  %v2389 = vld [vmem:[%s8 + $0x1f0] sm:$0xff]
  %v2390 = vld [vmem:[%s8 + $0x1f8] sm:$0xff]
  %2391 = vmatpush.msra.mxu0 %v2387
  %2392 = vmatpush.msra.mxu0 %v2383
  %2393 = vmatpush.msra.mxu0 %v2379
  %2394 = vmatpush.msra.mxu0 %v2375
  %2395 = vmatpush.msra.mxu0 %v2371
  %2396 = vmatpush.msra.mxu0 %v2367
  %2397 = vmatpush.msra.mxu0 %v2363
  %2398 = vmatpush.msra.mxu0 %v2359
  %2399 = vmatpush.msra.mxu0 %v2355
  %2400 = vmatpush.msra.mxu0 %v2351
  %2401 = vmatpush.msra.mxu0 %v2347
  %2402 = vmatpush.msra.mxu0 %v2343
  %2403 = vmatpush.msra.mxu0 %v2339
  %2404 = vmatpush.msra.mxu0 %v2335
  %2405 = vmatpush.msra.mxu0 %v2331
  %2406 = vmatpush.msra.mxu0 %v2327
  %2407 = vmatmul.f32.gmra.mxu0 %v2281
  %v2408 = vpop.f32.mrf.mxu0
  %v2409 = vadd.f32 0.0, %v2408
  %2410 = vdwg.mxu0
  %2411 = vmatpush.msra.mxu0 %v2388
  %2412 = vmatpush.msra.mxu0 %v2384
  %2413 = vmatpush.msra.mxu0 %v2380
  %2414 = vmatpush.msra.mxu0 %v2376
  %2415 = vmatpush.msra.mxu0 %v2372
  %2416 = vmatpush.msra.mxu0 %v2368
  %2417 = vmatpush.msra.mxu0 %v2364
  %2418 = vmatpush.msra.mxu0 %v2360
  %2419 = vmatpush.msra.mxu0 %v2356
  %2420 = vmatpush.msra.mxu0 %v2352
  %2421 = vmatpush.msra.mxu0 %v2348
  %2422 = vmatpush.msra.mxu0 %v2344
  %2423 = vmatpush.msra.mxu0 %v2340
  %2424 = vmatpush.msra.mxu0 %v2336
  %2425 = vmatpush.msra.mxu0 %v2332
  %2426 = vmatpush.msra.mxu0 %v2328
  %2427 = vmatmul.f32.gmra.mxu0 %v2281
  %v2428 = vpop.f32.mrf.mxu0
  %v2429 = vadd.f32 0.0, %v2428
  %2430 = vdwg.mxu0
  %2431 = vmatpush.msra.mxu0 %v2389
  %2432 = vmatpush.msra.mxu0 %v2385
  %2433 = vmatpush.msra.mxu0 %v2381
  %2434 = vmatpush.msra.mxu0 %v2377
  %2435 = vmatpush.msra.mxu0 %v2373
  %2436 = vmatpush.msra.mxu0 %v2369
  %2437 = vmatpush.msra.mxu0 %v2365
  %2438 = vmatpush.msra.mxu0 %v2361
  %2439 = vmatpush.msra.mxu0 %v2357
  %2440 = vmatpush.msra.mxu0 %v2353
  %2441 = vmatpush.msra.mxu0 %v2349
  %2442 = vmatpush.msra.mxu0 %v2345
  %2443 = vmatpush.msra.mxu0 %v2341
  %2444 = vmatpush.msra.mxu0 %v2337
  %2445 = vmatpush.msra.mxu0 %v2333
  %2446 = vmatpush.msra.mxu0 %v2329
  %2447 = vmatmul.f32.gmra.mxu0 %v2281
  %v2448 = vpop.f32.mrf.mxu0
  %v2449 = vadd.f32 0.0, %v2448
  %2450 = vdwg.mxu0
  %2451 = vmatpush.msra.mxu0 %v2390
  %2452 = vmatpush.msra.mxu0 %v2386
  %2453 = vmatpush.msra.mxu0 %v2382
  %2454 = vmatpush.msra.mxu0 %v2378
  %2455 = vmatpush.msra.mxu0 %v2374
  %2456 = vmatpush.msra.mxu0 %v2370
  %2457 = vmatpush.msra.mxu0 %v2366
  %2458 = vmatpush.msra.mxu0 %v2362
  %2459 = vmatpush.msra.mxu0 %v2358
  %2460 = vmatpush.msra.mxu0 %v2354
  %2461 = vmatpush.msra.mxu0 %v2350
  %2462 = vmatpush.msra.mxu0 %v2346
  %2463 = vmatpush.msra.mxu0 %v2342
  %2464 = vmatpush.msra.mxu0 %v2338
  %2465 = vmatpush.msra.mxu0 %v2334
  %2466 = vmatpush.msra.mxu0 %v2330
  %2467 = vmatmul.f32.gmra.mxu0 %v2281
  %v2468 = vpop.f32.mrf.mxu0
  %v2469 = vadd.f32 0.0, %v2468
  %2470 = vdwg.mxu0
  %v2471 = vadd.f32 %v2323, %v2409
  %v2472 = vadd.f32 %v2324, %v2429
  %v2473 = vadd.f32 %v2325, %v2449
  %v2474 = vadd.f32 %v2326, %v2469
  %v2475 = vmul.f32 %v2471, 0.5
  %v2476 = vtanh.pop %v2475
  %v2477 = vmul.f32 %v2476, 0.5
  %v2478 = vadd.f32 %v2477, 0.5
  %v2479 = vmul.f32 %v2472, 0.5
  %v2480 = vtanh.pop %v2479
  %v2481 = vmul.f32 %v2480, 0.5
  %v2482 = vadd.f32 %v2481, 0.5
  %v2483 = vtanh.pop %v2473
  %v2484 = vmul.f32 %v2474, 0.5
  %v2485 = vtanh.pop %v2484
  %v2486 = vmul.f32 %v2485, 0.5
  %v2487 = vadd.f32 %v2486, 0.5
  %v2488 = vmul.f32 %v2482, %v2279
  %v2489 = vmul.f32 %v2478, %v2483
  %v2490 = vadd.f32 %v2488, %v2489
  %v2491 = vtanh.pop %v2490
  %v2492 = vmul.f32 %v2487, %v2491
  %v2493 = vld [vmem:[%s9] sm:$0xff]
  %v2494 = vld [vmem:[%s9 + $0x8] sm:$0xff]
  %v2495 = vld [vmem:[%s9 + $0x10] sm:$0xff]
  %v2496 = vld [vmem:[%s9 + $0x18] sm:$0xff]
  %v2497 = vld [vmem:[%s9 + $0x20] sm:$0xff]
  %v2498 = vld [vmem:[%s9 + $0x28] sm:$0xff]
  %v2499 = vld [vmem:[%s9 + $0x30] sm:$0xff]
  %v2500 = vld [vmem:[%s9 + $0x38] sm:$0xff]
  %v2501 = vld [vmem:[%s9 + $0x40] sm:$0xff]
  %v2502 = vld [vmem:[%s9 + $0x48] sm:$0xff]
  %v2503 = vld [vmem:[%s9 + $0x50] sm:$0xff]
  %v2504 = vld [vmem:[%s9 + $0x58] sm:$0xff]
  %v2505 = vld [vmem:[%s9 + $0x60] sm:$0xff]
  %v2506 = vld [vmem:[%s9 + $0x68] sm:$0xff]
  %v2507 = vld [vmem:[%s9 + $0x70] sm:$0xff]
  %v2508 = vld [vmem:[%s9 + $0x78] sm:$0xff]
  %v2509 = vld [vmem:[%s10] sm:$0x1]
  %v2511 = vperm.slane %v2509, 0
  %2513 = vmatpush.msra.mxu0 %v2508
  %2514 = vmatpush.msra.mxu0 %v2507
  %2515 = vmatpush.msra.mxu0 %v2506
  %2516 = vmatpush.msra.mxu0 %v2505
  %2517 = vmatpush.msra.mxu0 %v2504
  %2518 = vmatpush.msra.mxu0 %v2503
  %2519 = vmatpush.msra.mxu0 %v2502
  %2520 = vmatpush.msra.mxu0 %v2501
  %2521 = vmatpush.msra.mxu0 %v2500
  %2522 = vmatpush.msra.mxu0 %v2499
  %2523 = vmatpush.msra.mxu0 %v2498
  %2524 = vmatpush.msra.mxu0 %v2497
  %2525 = vmatpush.msra.mxu0 %v2496
  %2526 = vmatpush.msra.mxu0 %v2495
  %2527 = vmatpush.msra.mxu0 %v2494
  %2528 = vmatpush.msra.mxu0 %v2493
  %2529 = vmatmul.f32.gmra.mxu0 %v2492
  %v2530 = vpop.f32.mrf.mxu0
  %v2531 = vadd.f32 %v2511, %v2530
  %2532 = vdwg.mxu0
  %2533 = vst [vmem:[%s11 + $0x30] sm:$0xff] %v2531
  %v2534 = vld [vmem:[#allocation4 + $0xe0] sm:$0xff]
  %v2535 = vld [vmem:[#allocation4 + $0xe8] sm:$0xff]
  %v2536 = vld [vmem:[#allocation4 + $0xf0] sm:$0xff]
  %v2537 = vld [vmem:[#allocation4 + $0xf8] sm:$0xff]
  %v2538 = vld [vmem:[%s8] sm:$0xff]
  %v2539 = vld [vmem:[%s8 + $0x8] sm:$0xff]
  %v2540 = vld [vmem:[%s8 + $0x10] sm:$0xff]
  %v2541 = vld [vmem:[%s8 + $0x18] sm:$0xff]
  %v2542 = vld [vmem:[%s8 + $0x20] sm:$0xff]
  %v2543 = vld [vmem:[%s8 + $0x28] sm:$0xff]
  %v2544 = vld [vmem:[%s8 + $0x30] sm:$0xff]
  %v2545 = vld [vmem:[%s8 + $0x38] sm:$0xff]
  %v2546 = vld [vmem:[%s8 + $0x40] sm:$0xff]
  %v2547 = vld [vmem:[%s8 + $0x48] sm:$0xff]
  %v2548 = vld [vmem:[%s8 + $0x50] sm:$0xff]
  %v2549 = vld [vmem:[%s8 + $0x58] sm:$0xff]
  %v2550 = vld [vmem:[%s8 + $0x60] sm:$0xff]
  %v2551 = vld [vmem:[%s8 + $0x68] sm:$0xff]
  %v2552 = vld [vmem:[%s8 + $0x70] sm:$0xff]
  %v2553 = vld [vmem:[%s8 + $0x78] sm:$0xff]
  %v2554 = vld [vmem:[%s8 + $0x80] sm:$0xff]
  %v2555 = vld [vmem:[%s8 + $0x88] sm:$0xff]
  %v2556 = vld [vmem:[%s8 + $0x90] sm:$0xff]
  %v2557 = vld [vmem:[%s8 + $0x98] sm:$0xff]
  %v2558 = vld [vmem:[%s8 + $0xa0] sm:$0xff]
  %v2559 = vld [vmem:[%s8 + $0xa8] sm:$0xff]
  %v2560 = vld [vmem:[%s8 + $0xb0] sm:$0xff]
  %v2561 = vld [vmem:[%s8 + $0xb8] sm:$0xff]
  %v2562 = vld [vmem:[%s8 + $0xc0] sm:$0xff]
  %v2563 = vld [vmem:[%s8 + $0xc8] sm:$0xff]
  %v2564 = vld [vmem:[%s8 + $0xd0] sm:$0xff]
  %v2565 = vld [vmem:[%s8 + $0xd8] sm:$0xff]
  %v2566 = vld [vmem:[%s8 + $0xe0] sm:$0xff]
  %v2567 = vld [vmem:[%s8 + $0xe8] sm:$0xff]
  %v2568 = vld [vmem:[%s8 + $0xf0] sm:$0xff]
  %v2569 = vld [vmem:[%s8 + $0xf8] sm:$0xff]
  %v2570 = vld [vmem:[%s8 + $0x100] sm:$0xff]
  %v2571 = vld [vmem:[%s8 + $0x108] sm:$0xff]
  %v2572 = vld [vmem:[%s8 + $0x110] sm:$0xff]
  %v2573 = vld [vmem:[%s8 + $0x118] sm:$0xff]
  %v2574 = vld [vmem:[%s8 + $0x120] sm:$0xff]
  %v2575 = vld [vmem:[%s8 + $0x128] sm:$0xff]
  %v2576 = vld [vmem:[%s8 + $0x130] sm:$0xff]
  %v2577 = vld [vmem:[%s8 + $0x138] sm:$0xff]
  %v2578 = vld [vmem:[%s8 + $0x140] sm:$0xff]
  %v2579 = vld [vmem:[%s8 + $0x148] sm:$0xff]
  %v2580 = vld [vmem:[%s8 + $0x150] sm:$0xff]
  %v2581 = vld [vmem:[%s8 + $0x158] sm:$0xff]
  %v2582 = vld [vmem:[%s8 + $0x160] sm:$0xff]
  %v2583 = vld [vmem:[%s8 + $0x168] sm:$0xff]
  %v2584 = vld [vmem:[%s8 + $0x170] sm:$0xff]
  %v2585 = vld [vmem:[%s8 + $0x178] sm:$0xff]
  %v2586 = vld [vmem:[%s8 + $0x180] sm:$0xff]
  %v2587 = vld [vmem:[%s8 + $0x188] sm:$0xff]
  %v2588 = vld [vmem:[%s8 + $0x190] sm:$0xff]
  %v2589 = vld [vmem:[%s8 + $0x198] sm:$0xff]
  %v2590 = vld [vmem:[%s8 + $0x1a0] sm:$0xff]
  %v2591 = vld [vmem:[%s8 + $0x1a8] sm:$0xff]
  %v2592 = vld [vmem:[%s8 + $0x1b0] sm:$0xff]
  %v2593 = vld [vmem:[%s8 + $0x1b8] sm:$0xff]
  %v2594 = vld [vmem:[%s8 + $0x1c0] sm:$0xff]
  %v2595 = vld [vmem:[%s8 + $0x1c8] sm:$0xff]
  %v2596 = vld [vmem:[%s8 + $0x1d0] sm:$0xff]
  %v2597 = vld [vmem:[%s8 + $0x1d8] sm:$0xff]
  %v2598 = vld [vmem:[%s8 + $0x1e0] sm:$0xff]
  %v2599 = vld [vmem:[%s8 + $0x1e8] sm:$0xff]
  %v2600 = vld [vmem:[%s8 + $0x1f0] sm:$0xff]
  %v2601 = vld [vmem:[%s8 + $0x1f8] sm:$0xff]
  %2602 = vmatpush.msra.mxu0 %v2598
  %2603 = vmatpush.msra.mxu0 %v2594
  %2604 = vmatpush.msra.mxu0 %v2590
  %2605 = vmatpush.msra.mxu0 %v2586
  %2606 = vmatpush.msra.mxu0 %v2582
  %2607 = vmatpush.msra.mxu0 %v2578
  %2608 = vmatpush.msra.mxu0 %v2574
  %2609 = vmatpush.msra.mxu0 %v2570
  %2610 = vmatpush.msra.mxu0 %v2566
  %2611 = vmatpush.msra.mxu0 %v2562
  %2612 = vmatpush.msra.mxu0 %v2558
  %2613 = vmatpush.msra.mxu0 %v2554
  %2614 = vmatpush.msra.mxu0 %v2550
  %2615 = vmatpush.msra.mxu0 %v2546
  %2616 = vmatpush.msra.mxu0 %v2542
  %2617 = vmatpush.msra.mxu0 %v2538
  %2618 = vmatmul.f32.gmra.mxu0 %v2492
  %v2619 = vpop.f32.mrf.mxu0
  %v2620 = vadd.f32 0.0, %v2619
  %2621 = vdwg.mxu0
  %2622 = vmatpush.msra.mxu0 %v2599
  %2623 = vmatpush.msra.mxu0 %v2595
  %2624 = vmatpush.msra.mxu0 %v2591
  %2625 = vmatpush.msra.mxu0 %v2587
  %2626 = vmatpush.msra.mxu0 %v2583
  %2627 = vmatpush.msra.mxu0 %v2579
  %2628 = vmatpush.msra.mxu0 %v2575
  %2629 = vmatpush.msra.mxu0 %v2571
  %2630 = vmatpush.msra.mxu0 %v2567
  %2631 = vmatpush.msra.mxu0 %v2563
  %2632 = vmatpush.msra.mxu0 %v2559
  %2633 = vmatpush.msra.mxu0 %v2555
  %2634 = vmatpush.msra.mxu0 %v2551
  %2635 = vmatpush.msra.mxu0 %v2547
  %2636 = vmatpush.msra.mxu0 %v2543
  %2637 = vmatpush.msra.mxu0 %v2539
  %2638 = vmatmul.f32.gmra.mxu0 %v2492
  %v2639 = vpop.f32.mrf.mxu0
  %v2640 = vadd.f32 0.0, %v2639
  %2641 = vdwg.mxu0
  %2642 = vmatpush.msra.mxu0 %v2600
  %2643 = vmatpush.msra.mxu0 %v2596
  %2644 = vmatpush.msra.mxu0 %v2592
  %2645 = vmatpush.msra.mxu0 %v2588
  %2646 = vmatpush.msra.mxu0 %v2584
  %2647 = vmatpush.msra.mxu0 %v2580
  %2648 = vmatpush.msra.mxu0 %v2576
  %2649 = vmatpush.msra.mxu0 %v2572
  %2650 = vmatpush.msra.mxu0 %v2568
  %2651 = vmatpush.msra.mxu0 %v2564
  %2652 = vmatpush.msra.mxu0 %v2560
  %2653 = vmatpush.msra.mxu0 %v2556
  %2654 = vmatpush.msra.mxu0 %v2552
  %2655 = vmatpush.msra.mxu0 %v2548
  %2656 = vmatpush.msra.mxu0 %v2544
  %2657 = vmatpush.msra.mxu0 %v2540
  %2658 = vmatmul.f32.gmra.mxu0 %v2492
  %v2659 = vpop.f32.mrf.mxu0
  %v2660 = vadd.f32 0.0, %v2659
  %2661 = vdwg.mxu0
  %2662 = vmatpush.msra.mxu0 %v2601
  %2663 = vmatpush.msra.mxu0 %v2597
  %2664 = vmatpush.msra.mxu0 %v2593
  %2665 = vmatpush.msra.mxu0 %v2589
  %2666 = vmatpush.msra.mxu0 %v2585
  %2667 = vmatpush.msra.mxu0 %v2581
  %2668 = vmatpush.msra.mxu0 %v2577
  %2669 = vmatpush.msra.mxu0 %v2573
  %2670 = vmatpush.msra.mxu0 %v2569
  %2671 = vmatpush.msra.mxu0 %v2565
  %2672 = vmatpush.msra.mxu0 %v2561
  %2673 = vmatpush.msra.mxu0 %v2557
  %2674 = vmatpush.msra.mxu0 %v2553
  %2675 = vmatpush.msra.mxu0 %v2549
  %2676 = vmatpush.msra.mxu0 %v2545
  %2677 = vmatpush.msra.mxu0 %v2541
  %2678 = vmatmul.f32.gmra.mxu0 %v2492
  %v2679 = vpop.f32.mrf.mxu0
  %v2680 = vadd.f32 0.0, %v2679
  %2681 = vdwg.mxu0
  %v2682 = vadd.f32 %v2534, %v2620
  %v2683 = vadd.f32 %v2535, %v2640
  %v2684 = vadd.f32 %v2536, %v2660
  %v2685 = vadd.f32 %v2537, %v2680
  %v2686 = vmul.f32 %v2682, 0.5
  %v2687 = vtanh.pop %v2686
  %v2688 = vmul.f32 %v2687, 0.5
  %v2689 = vadd.f32 %v2688, 0.5
  %v2690 = vmul.f32 %v2683, 0.5
  %v2691 = vtanh.pop %v2690
  %v2692 = vmul.f32 %v2691, 0.5
  %v2693 = vadd.f32 %v2692, 0.5
  %v2694 = vtanh.pop %v2684
  %v2695 = vmul.f32 %v2685, 0.5
  %v2696 = vtanh.pop %v2695
  %v2697 = vmul.f32 %v2696, 0.5
  %v2698 = vadd.f32 %v2697, 0.5
  %v2699 = vmul.f32 %v2693, %v2490
  %v2700 = vmul.f32 %v2689, %v2694
  %v2701 = vadd.f32 %v2699, %v2700
  %v2702 = vtanh.pop %v2701
  %v2703 = vmul.f32 %v2698, %v2702
  %v2704 = vld [vmem:[%s9] sm:$0xff]
  %v2705 = vld [vmem:[%s9 + $0x8] sm:$0xff]
  %v2706 = vld [vmem:[%s9 + $0x10] sm:$0xff]
  %v2707 = vld [vmem:[%s9 + $0x18] sm:$0xff]
  %v2708 = vld [vmem:[%s9 + $0x20] sm:$0xff]
  %v2709 = vld [vmem:[%s9 + $0x28] sm:$0xff]
  %v2710 = vld [vmem:[%s9 + $0x30] sm:$0xff]
  %v2711 = vld [vmem:[%s9 + $0x38] sm:$0xff]
  %v2712 = vld [vmem:[%s9 + $0x40] sm:$0xff]
  %v2713 = vld [vmem:[%s9 + $0x48] sm:$0xff]
  %v2714 = vld [vmem:[%s9 + $0x50] sm:$0xff]
  %v2715 = vld [vmem:[%s9 + $0x58] sm:$0xff]
  %v2716 = vld [vmem:[%s9 + $0x60] sm:$0xff]
  %v2717 = vld [vmem:[%s9 + $0x68] sm:$0xff]
  %v2718 = vld [vmem:[%s9 + $0x70] sm:$0xff]
  %v2719 = vld [vmem:[%s9 + $0x78] sm:$0xff]
  %v2720 = vld [vmem:[%s10] sm:$0x1]
  %v2722 = vperm.slane %v2720, 0
  %2724 = vmatpush.msra.mxu0 %v2719
  %2725 = vmatpush.msra.mxu0 %v2718
  %2726 = vmatpush.msra.mxu0 %v2717
  %2727 = vmatpush.msra.mxu0 %v2716
  %2728 = vmatpush.msra.mxu0 %v2715
  %2729 = vmatpush.msra.mxu0 %v2714
  %2730 = vmatpush.msra.mxu0 %v2713
  %2731 = vmatpush.msra.mxu0 %v2712
  %2732 = vmatpush.msra.mxu0 %v2711
  %2733 = vmatpush.msra.mxu0 %v2710
  %2734 = vmatpush.msra.mxu0 %v2709
  %2735 = vmatpush.msra.mxu0 %v2708
  %2736 = vmatpush.msra.mxu0 %v2707
  %2737 = vmatpush.msra.mxu0 %v2706
  %2738 = vmatpush.msra.mxu0 %v2705
  %2739 = vmatpush.msra.mxu0 %v2704
  %2740 = vmatmul.f32.gmra.mxu0 %v2703
  %v2741 = vpop.f32.mrf.mxu0
  %v2742 = vadd.f32 %v2722, %v2741
  %2743 = vdwg.mxu0
  %2744 = vst [vmem:[%s11 + $0x38] sm:$0xff] %v2742
  // Predicated region
  $region42: #{lstm_model_forward.5} parent=0 // pred_check
    _
  $region43: #{lstm_model_forward.5} parent=0 // pred_check_branch
    %2746 = sbr.rel (0) target = $region45
  $region44: #{lstm_model_forward.5} parent=0 // pred_region
    _
  $region45: #{lstm_model_forward.5} parent=0 // pred_fallthru
    _
  // Predicated region
  $region46: #{lstm_model_forward.5} parent=0 // pred_check
    _
  $region47: #{lstm_model_forward.5} parent=0 // pred_check_branch
    %2748 = sbr.rel (0) target = $region49
  $region48: #{lstm_model_forward.5} parent=0 // pred_region
    _
  $region49: #{lstm_model_forward.5} parent=0 // pred_fallthru
    _

</llo_original>
